<compile_context>
chip_gen: v7x
topology: tpu7x:2x2x1
jax: 0.10.0
libtpu: 0.0.40
codegen_flags: <defaults>
</compile_context>

<pallas_src>
import math
import jax
import jax.numpy as jnp
from jax import lax
from jax.experimental import pallas as pl
from jax.experimental.pallas import tpu as pltpu  # noqa: F401  (TPU backend)

# ----------------------------- model constants ------------------------------

BATCH = 2
SEQ = 8
HIDDEN = 32
PROGRAM_LENGTH = 8
OP_LEN = PROGRAM_LENGTH // 4                 # operator_length = 2
OPERATOR_LIST = ["add", "subtract", "multiply", "divide", "exp", "greater"]
OP_SIZE = len(OPERATOR_LIST)
CONST_LIST = ["const_1", "const_100", "#0", "#1"]
CONST_SIZE = len(CONST_LIST)
VOCAB = 50
N_OPTIONS = CONST_SIZE + SEQ                 # pointer options per step
DEC_PACK = 2 * HIDDEN + OP_SIZE + 2 * N_OPTIONS   # [op_encoded | latent | op_logits | op1 | op2]


def _softmax_last(x):
    m = jnp.max(x, axis=-1, keepdims=True)
    e = jnp.exp(x - m)
    return e / jnp.sum(e, axis=-1, keepdims=True)


# --------------------------- the single fused kernel ------------------------


def _forward_kernel(
        # data
        ids_ref, opids_ref, dmask_ref,
        # synthetic BERT encoder + embeddings
        emb_ref, bwT_ref, bb_ref, pe_ref, constq_ref, opvocab_ref,
        # OperatorRNN
        ipw_ref, ipb_ref, whhT_ref, wsumT_ref, gb_ref, gb0_ref, owT_ref, ob_ref,
        # PointerNetwork
        pwihT_ref, pb_ref, decT_ref, decb_ref, encT_ref, encb_ref, refw_ref, refb_ref,
        # outputs
        attn_ref, dec_ref):
    f32 = jnp.float32
    B, S, H, C, N = BATCH, SEQ, HIDDEN, CONST_SIZE, N_OPTIONS

    # ---- synthetic BERT encode: question + facts stacked into one (2BS, H) slab ----
    ids = ids_ref[...]                                                        # (2*B*S, 1) int32
    onehot = (lax.broadcasted_iota(jnp.int32, (2 * B * S, VOCAB), 1) == ids).astype(f32)
    emb = jnp.dot(onehot, emb_ref[...], preferred_element_type=f32)           # embedding gather
    enc = jnp.tanh(jnp.dot(emb, bwT_ref[...], preferred_element_type=f32) + bb_ref[...])
    q_enc = jnp.stack([enc[b * S:(b + 1) * S] for b in range(B)], axis=0)         # (B,S,H)
    f_enc = jnp.stack([enc[(B + b) * S:(B + b + 1) * S] for b in range(B)], axis=0)

    pe = pe_ref[...]                                                          # (S, H)
    q_pos = q_enc + pe[None, :, :]
    f_pos = f_enc + pe[None, :, :]
    c_pos = jnp.broadcast_to(constq_ref[...][None, :, :], (B, C, H))          # const_embed + pe

    # ---- cosine distance matrix (unmasked feeds min(); masked one is an output) ----
    eps = 1e-8
    qn = q_enc / jnp.maximum(jnp.sqrt(jnp.sum(q_enc * q_enc, -1, keepdims=True)), eps)
    fn = f_enc / jnp.maximum(jnp.sqrt(jnp.sum(f_enc * f_enc, -1, keepdims=True)), eps)
    sim = jnp.einsum('bqd,bkd->bqk', qn, fn, preferred_element_type=f32)      # (B,S,S)
    dist = (2.0 - sim) * 0.5                                                  # (1 - sim + 1)/2
    dist_masked = dist * dmask_ref[...][None, :, :]
    min_dist = jnp.min(dist, axis=-1, keepdims=True)                          # (B,S,1)

    # ---- the three attentions (whole batch, softmax over keys) ----
    s_qf = jnp.einsum('bqd,bkd->bqk', q_pos, f_pos, preferred_element_type=f32)
    w_qf = _softmax_last(s_qf)
    qf_lat = jnp.einsum('bqk,bkd->bqd', w_qf, f_pos, preferred_element_type=f32)

    s_fq = jnp.einsum('bqd,bkd->bqk', f_pos, q_pos, preferred_element_type=f32)
    w_fq = _softmax_last(s_fq)
    fq_lat = jnp.einsum('bqk,bkd->bqd', w_fq, q_pos, preferred_element_type=f32)

    s_cq = jnp.einsum('bqd,bkd->bqk', c_pos, q_pos, preferred_element_type=f32)
    w_cq = _softmax_last(s_cq)
    cq_lat = jnp.einsum('bqk,bkd->bqd', w_cq, q_pos, preferred_element_type=f32)

    # one lane-packed store: [distances_masked | operator attn weights | operand attn weights]
    attn_ref[...] = jnp.concatenate([dist_masked, w_qf, w_fq], axis=-1)       # (B,S,3S)

    # ---- operator_encoded: vocab gather as a one-hot matmul (step-major rows) ----
    opids = opids_ref[...]                                                    # (OP_LEN*B, 1)
    op_onehot = (lax.broadcasted_iota(jnp.int32, (OP_LEN * B, OP_SIZE), 1) == opids).astype(f32)
    op_enc_all = jnp.dot(op_onehot, opvocab_ref[...], preferred_element_type=f32)

    # ---- OperatorRNN (x == h identity; start token folded into the step-0 bias) ----
    qf_x = qf_lat[:, 1:, :] * min_dist[:, 1:, :]                              # (B, S-1, H)
    h = jnp.sum(qf_x * ipw_ref[...], axis=1) + ipb_ref[...]                   # in_proj -> (B,H)
    c = jnp.zeros((B, H), f32)
    whhT, wsumT = whhT_ref[...], wsumT_ref[...]
    gb, gb0 = gb_ref[...], gb0_ref[...]
    latents = []
    for step in range(OP_LEN):
        gates = (jnp.dot(h, whhT if step == 0 else wsumT, preferred_element_type=f32)
                 + (gb0 if step == 0 else gb))                                # (B,4H) order i,f,g,o
        i = jax.nn.sigmoid(gates[:, 0 * H:1 * H])
        fg = jax.nn.sigmoid(gates[:, 1 * H:2 * H])
        g = jnp.tanh(gates[:, 2 * H:3 * H])
        o = jax.nn.sigmoid(gates[:, 3 * H:4 * H])
        c = fg * c + i * g
        h = o * jnp.tanh(c)
        latents.append(h)     # dropout = identity; attention(x, h, h) over one key -> x = h

    # ---- PointerNetwork: both operator steps + both operand steps fully fused ----
    encT, encb = encT_ref[...], encb_ref[...]
    # loop-invariant encoder projections (batch unrolled into plain 2-D MXU dots)
    enc_c = jnp.stack([jnp.dot(cq_lat[b], encT, preferred_element_type=f32) + encb
                       for b in range(B)], axis=0)                            # (B,C,H)
    enc_f = jnp.stack([jnp.dot(fq_lat[b], encT, preferred_element_type=f32) + encb
                       for b in range(B)], axis=0)                            # (B,S,H)

    wihT, pbias = pwihT_ref[...], pb_ref[...]
    decT, decb = decT_ref[...], decb_ref[...]
    refw = refw_ref[...][None, :, :]                                          # (1,1,H)
    refb = refb_ref[0, 0]
    owT, ob = owT_ref[...], ob_ref[...]

    const_row = lax.broadcasted_iota(jnp.int32, (1, C, 1), 1)                 # const option rows
    lane_idx = lax.broadcasted_iota(jnp.int32, (B, N), 1)                     # option lane ids

    for step in range(OP_LEN):
        idx = CONST_LIST.index('#' + str(step))
        keep_c = const_row < idx                                              # zero rows idx..C-1
        cur_c = jnp.where(keep_c, cq_lat, 0.0)
        enc_c_step = jnp.where(keep_c, enc_c, encb[None, :, :])               # Linear(0) = bias

        h_op = latents[step]                                                  # (B,H)
        x = h_op
        logps = []
        for _ in range(2):                                                    # num_operands
            # LSTMCell with zero (h, c): skip W_hh and the f*c term
            gates = jnp.dot(x, wihT, preferred_element_type=f32) + pbias
            i = jax.nn.sigmoid(gates[:, 0 * H:1 * H])
            g = jnp.tanh(gates[:, 2 * H:3 * H])
            o = jax.nn.sigmoid(gates[:, 3 * H:4 * H])
            hx = o * jnp.tanh(i * g)                                          # dropout = identity
            dq = (jnp.dot(hx, decT, preferred_element_type=f32) + decb)[:, None, :]
            sc_c = jnp.sum(jnp.tanh(enc_c_step + dq) * refw, axis=-1)         # (B,C)
            sc_f = jnp.sum(jnp.tanh(enc_f + dq) * refw, axis=-1)              # (B,S)
            scores = jnp.concatenate([sc_c, sc_f], axis=-1) + refb            # (B,N)
            m = jnp.max(scores, axis=-1, keepdims=True)
            lse = m + jnp.log(jnp.sum(jnp.exp(scores - m), axis=-1, keepdims=True))
            logp = scores - lse                                               # log_softmax(dim=1)
            logps.append(logp)
            # first-occurrence argmax + gather of the next decoder input, in-kernel
            peak = jnp.min(jnp.where(logp == jnp.max(logp, axis=-1, keepdims=True),
                                     lane_idx, N), axis=-1, keepdims=True)    # (B,1)
            onehot_tok = (lane_idx == peak).astype(f32)                       # (B,N)
            x = (jnp.sum(onehot_tok[:, :C, None] * cur_c, axis=1)
                 + jnp.sum(onehot_tok[:, C:, None] * fq_lat, axis=1))         # (B,H)

        op_logits = _softmax_last(jnp.dot(h_op, owT, preferred_element_type=f32) + ob)
        # lane-packed per-step row: [operator_encoded | latent | op_logits | operand1 | operand2]
        dec_ref[:, step, :] = jnp.concatenate(
            [op_enc_all[step * B:(step + 1) * B], h_op, op_logits, logps[0], logps[1]], axis=-1)


# ----------------------------- Model wrapper (glue in JAX) ------------------


def make_positional_encoding(max_len, d_model):
    position = jnp.arange(max_len, dtype=jnp.float32)[:, None]
    div_term = jnp.exp(jnp.arange(0, d_model, 2, dtype=jnp.float32)
                       * (-math.log(10000.0) / d_model))
    pe = jnp.zeros((max_len, d_model), dtype=jnp.float32)
    pe = pe.at[:, 0::2].set(jnp.sin(position * div_term))
    pe = pe.at[:, 1::2].set(jnp.cos(position * div_term))
    return pe


def bert_model_forward(params, question_ids, question_mask, facts_ids, facts_mask,
                       numbers_mask, program_ids, program_mask,
                       operator_ids, operator_mask):
    B, S = question_ids.shape
    H = HIDDEN

    # token ids for the synthetic encoder: question rows first, then facts rows
    ids_col = jnp.concatenate([question_ids.reshape(-1),
                               facts_ids.reshape(-1)]).astype(jnp.int32).reshape(-1, 1)
    # operator ids flattened step-major: rows (s0,b0),(s0,b1),(s1,b0),(s1,b1)
    op_ids_col = operator_ids.T.astype(jnp.int32).reshape(-1, 1)

    # pad mask (reference quirk: batch element 0's masks are applied to every element)
    q_mask = (1.0 - question_mask[0].astype(jnp.float32)).at[0].set(0.0)
    f_mask = 1.0 - facts_mask[0].astype(jnp.float32)
    dist_mask = jnp.outer(q_mask, f_mask)                                     # (S, S)

    attn_pack, dec_pack = pl.pallas_call(
        _forward_kernel,
        out_shape=(jax.ShapeDtypeStruct((B, S, 3 * S), jnp.float32),
                   jax.ShapeDtypeStruct((B, OP_LEN, DEC_PACK), jnp.float32)),
    )(ids_col, op_ids_col, dist_mask,
      params["emb_table"], params["bert_wT"], params["bert_b2"],
      params["pe_seq"], params["const_q"], params["operator_vocab"],
      params["in_proj_w3"], params["in_proj_b2"],
      params["cell_whhT"], params["cell_wsumT"], params["cell_b2"], params["cell_b0"],
      params["out_prj_wT"], params["out_prj_b2"],
      params["ptr_wihT"], params["ptr_b2"],
      params["dec_wT"], params["dec_b2"],
      params["enc_wT"], params["enc_b2"],
      params["ref_w2"], params["ref_b2"])

    # unpack the lane-packed kernel outputs
    distances_masked = attn_pack[..., 0:S]
    qf_weights = attn_pack[..., S:2 * S]
    fq_weights = attn_pack[..., 2 * S:3 * S]

    off = 0
    operator_encoded = dec_pack[..., off:off + H]; off += H
    operator_latents = dec_pack[..., off:off + H]; off += H
    operator_logits = dec_pack[..., off:off + OP_SIZE]; off += OP_SIZE
    op1_logits = dec_pack[..., off:off + N_OPTIONS]; off += N_OPTIONS
    op2_logits = dec_pack[..., off:off + N_OPTIONS]

    operator_indices = jnp.arange(OP_LEN) * 4
    operator_output = dict(
        operator_latents=operator_latents,
        operator_encoded=operator_encoded,
        operator_logits=operator_logits,
        operator_preds=jnp.argmax(operator_logits, axis=2),
        operator_golds=program_ids[:, operator_indices],
        operator_mask=operator_mask.astype(jnp.int32),
        operator_weights=qf_weights,
        program_ids=program_ids,
        program_mask=program_mask)
    operands_output = dict(
        operand1_logits=op1_logits,
        operand1_preds=jnp.argmax(op1_logits, axis=2),
        operand1_golds=program_ids[:, operator_indices + 1],
        operand2_logits=op2_logits,
        operand2_preds=jnp.argmax(op2_logits, axis=2),
        operand2_golds=program_ids[:, operator_indices + 2],
        operator_mask=operator_mask.astype(jnp.int32),
        operand_weights=fq_weights)
    return distances_masked, operator_output, operands_output


# ----------------------------- parameter init ------------------------------

def init_params():
    key = jax.random.PRNGKey(0)
    ks = list(jax.random.split(key, 24))

    def nrm(k, shape, scale=0.1):
        return scale * jax.random.normal(k, shape, dtype=jnp.float32)

    # torch-layout weights (out_features, in_features), pre-arranged for the kernel:
    #  - all Linear / LSTM gate weights transposed to (K, N) (transpose-free MXU pushes),
    #  - OperatorRNN: (W_ih + W_hh)^T pre-summed for the x == h steps, and the start-token
    #    contribution folded into the step-0 gate bias,
    #  - PointerNetwork: W_hh dropped entirely (h = c = 0 every call).
    emb_table = nrm(ks[0], (VOCAB, HIDDEN), 1.0)
    bert_w = nrm(ks[1], (HIDDEN, HIDDEN))
    bert_b = nrm(ks[2], (HIDDEN,))
    const_embed = nrm(ks[3], (CONST_SIZE, HIDDEN), 1.0)
    in_proj_w = nrm(ks[4], (1, SEQ - 1))
    in_proj_b = nrm(ks[5], (1,))
    cell_wih = nrm(ks[6], (4 * HIDDEN, HIDDEN))
    cell_whh = nrm(ks[7], (4 * HIDDEN, HIDDEN))
    cell_b = nrm(ks[8], (4 * HIDDEN,))
    out_prj_w = nrm(ks[9], (OP_SIZE, HIDDEN))
    out_prj_b = nrm(ks[10], (OP_SIZE,))
    lstm_wih = nrm(ks[11], (4 * HIDDEN, HIDDEN))
    lstm_b = nrm(ks[13], (4 * HIDDEN,))
    ref_w = nrm(ks[14], (1, HIDDEN))
    ref_b = nrm(ks[15], (1,))
    dec_w = nrm(ks[16], (HIDDEN, HIDDEN))
    dec_b = nrm(ks[17], (HIDDEN,))
    enc_w = nrm(ks[18], (HIDDEN, HIDDEN))
    enc_b = nrm(ks[19], (HIDDEN,))

    pe = make_positional_encoding(64, HIDDEN)

    # OperatorModel.__init__: operator_vocab = sum over the 4 tokens of each operator
    # (synthetic BERT encode done once at init, in pure JAX).
    operator_list_ids = (jnp.arange(OP_SIZE * 4, dtype=jnp.int32) % VOCAB).reshape(OP_SIZE, 4)
    op_tok = jnp.tanh(emb_table[operator_list_ids] @ bert_w.T + bert_b)       # (OP_SIZE, 4, H)
    operator_vocab = jnp.sum(op_tok, axis=1)                                  # (OP_SIZE, H)
    operator_start = operator_vocab[2:3, :]                                   # operator_vocab[:, 2, :]

    gate_b = cell_b.reshape(1, 4 * HIDDEN)                                    # b_ih + b_hh (fused)

    params = {
        "emb_table": emb_table,
        "bert_wT": bert_w.T,
        "bert_b2": bert_b.reshape(1, HIDDEN),
        "pe_seq": pe[:SEQ],
        "const_q": const_embed + pe[:CONST_SIZE],                             # pos-encoded constants
        "operator_vocab": operator_vocab,
        "in_proj_w3": in_proj_w.reshape(1, SEQ - 1, 1),                       # seq-axis reduction
        "in_proj_b2": in_proj_b.reshape(1, 1),
        "cell_whhT": cell_whh.T,                                              # step-0 matmul
        "cell_wsumT": (cell_wih + cell_whh).T,                                # steps >= 1 (x == h)
        "cell_b2": gate_b,
        "cell_b0": gate_b + operator_start @ cell_wih.T,                      # start token folded in
        "out_prj_wT": out_prj_w.T,
        "out_prj_b2": out_prj_b.reshape(1, OP_SIZE),
        "ptr_wihT": lstm_wih.T,
        "ptr_b2": lstm_b.reshape(1, 4 * HIDDEN),
        "dec_wT": dec_w.T,
        "dec_b2": dec_b.reshape(1, HIDDEN),
        "enc_wT": enc_w.T,
        "enc_b2": enc_b.reshape(1, HIDDEN),
        "ref_w2": ref_w,                                                      # (1, H)
        "ref_b2": ref_b.reshape(1, 1),
    }
    return params


# ----------------------------------- main -----------------------------------

if __name__ == "__main__":
    params = init_params()

    key = jax.random.PRNGKey(0)
    k1, k2, k3, k4 = jax.random.split(key, 4)
    question_ids = jax.random.randint(k1, (BATCH, SEQ), 0, VOCAB, dtype=jnp.int32)
    facts_ids = jax.random.randint(k2, (BATCH, SEQ), 0, VOCAB, dtype=jnp.int32)
    question_mask = jnp.ones((BATCH, SEQ), jnp.float32).at[:, SEQ - 2:].set(0.0)
    facts_mask = jnp.ones((BATCH, SEQ), jnp.float32).at[:, SEQ - 1:].set(0.0)
    numbers_mask = jnp.ones((BATCH, SEQ), jnp.float32)        # unused in forward (as in reference)
    program_ids = jax.random.randint(k3, (BATCH, PROGRAM_LENGTH), 0,
                                     CONST_SIZE + SEQ, dtype=jnp.int32)
    program_mask = jnp.ones((BATCH, PROGRAM_LENGTH), jnp.float32)
    operator_ids = jax.random.randint(k4, (BATCH, OP_LEN), 0, OP_SIZE, dtype=jnp.int32)
    operator_mask = jnp.ones((BATCH, OP_LEN), jnp.float32)

    fwd = jax.jit(bert_model_forward)
    out = fwd(params, question_ids, question_mask, facts_ids, facts_mask,
              numbers_mask, program_ids, program_mask, operator_ids, operator_mask)
    jax.block_until_ready(out)

    distances_masked, operator_output, operands_output = out
    assert distances_masked.shape == (BATCH, SEQ, SEQ)
    assert operator_output["operator_logits"].shape == (BATCH, OP_LEN, OP_SIZE)
    assert operator_output["operator_latents"].shape == (BATCH, OP_LEN, HIDDEN)
    assert operands_output["operand1_logits"].shape == (BATCH, OP_LEN, CONST_SIZE + SEQ)
    assert operands_output["operand1_preds"].shape == (BATCH, OP_LEN)
    assert operands_output["operand2_preds"].shape == (BATCH, OP_LEN)
    print("KERNEL_OK")
</pallas_src>

<mosaic_0001>
module attributes {stable_mosaic.version = 11 : i64} {
  func.func @_forward_kernel(%arg0: memref<32x1xi32, #tpu.memory_space<vmem>>, %arg1: memref<4x1xi32, #tpu.memory_space<vmem>>, %arg2: memref<8x8xf32, #tpu.memory_space<vmem>>, %arg3: memref<50x32xf32, #tpu.memory_space<vmem>>, %arg4: memref<32x32xf32, #tpu.memory_space<vmem>>, %arg5: memref<1x32xf32, #tpu.memory_space<vmem>>, %arg6: memref<8x32xf32, #tpu.memory_space<vmem>>, %arg7: memref<4x32xf32, #tpu.memory_space<vmem>>, %arg8: memref<6x32xf32, #tpu.memory_space<vmem>>, %arg9: memref<1x7x1xf32, #tpu.memory_space<vmem>>, %arg10: memref<1x1xf32, #tpu.memory_space<vmem>>, %arg11: memref<32x128xf32, #tpu.memory_space<vmem>>, %arg12: memref<32x128xf32, #tpu.memory_space<vmem>>, %arg13: memref<1x128xf32, #tpu.memory_space<vmem>>, %arg14: memref<1x128xf32, #tpu.memory_space<vmem>>, %arg15: memref<32x6xf32, #tpu.memory_space<vmem>>, %arg16: memref<1x6xf32, #tpu.memory_space<vmem>>, %arg17: memref<32x128xf32, #tpu.memory_space<vmem>>, %arg18: memref<1x128xf32, #tpu.memory_space<vmem>>, %arg19: memref<32x32xf32, #tpu.memory_space<vmem>>, %arg20: memref<1x32xf32, #tpu.memory_space<vmem>>, %arg21: memref<32x32xf32, #tpu.memory_space<vmem>>, %arg22: memref<1x32xf32, #tpu.memory_space<vmem>>, %arg23: memref<1x32xf32, #tpu.memory_space<vmem>>, %arg24: memref<1x1xf32, #tpu.memory_space<vmem>>, %arg25: memref<2x8x24xf32, #tpu.memory_space<vmem>>, %arg26: memref<2x2x94xf32, #tpu.memory_space<vmem>>) attributes {dimension_semantics = [], scalar_prefetch = 0 : i64, scratch_operands = 0 : i64, tpu.core_type = #tpu.core_type<tc>} {
    %c0 = arith.constant 0 : index
    %c0_0 = arith.constant 0 : index
    %0 = vector.load %arg0[%c0, %c0_0] : memref<32x1xi32, #tpu.memory_space<vmem>>, vector<32x1xi32>
    %1 = tpu.iota {dimensions = array<i32: 1>} : vector<32x50xi32>
    %2 = vector.broadcast %0 : vector<32x1xi32> to vector<32x50xi32>
    %3 = arith.cmpi eq, %1, %2 : vector<32x50xi32>
    %4 = arith.extui %3 : vector<32x50xi1> to vector<32x50xi32>
    %5 = arith.sitofp %4 : vector<32x50xi32> to vector<32x50xf32>
    %c0_1 = arith.constant 0 : index
    %c0_2 = arith.constant 0 : index
    %6 = vector.load %arg3[%c0_1, %c0_2] : memref<50x32xf32, #tpu.memory_space<vmem>>, vector<50x32xf32>
    %cst = arith.constant dense<0.000000e+00> : vector<32x32xf32>
    %7 = tpu.matmul %5, %6, %cst {dimension_numbers = #tpu.dot_dimension_numbers<[1], [0], [0], [1], [0, 0, 1, 1], [], []>} : vector<32x50xf32>, vector<50x32xf32>, vector<32x32xf32> -> vector<32x32xf32>
    %c0_3 = arith.constant 0 : index
    %c0_4 = arith.constant 0 : index
    %8 = vector.load %arg4[%c0_3, %c0_4] : memref<32x32xf32, #tpu.memory_space<vmem>>, vector<32x32xf32>
    %cst_5 = arith.constant dense<0.000000e+00> : vector<32x32xf32>
    %9 = tpu.matmul %7, %8, %cst_5 {dimension_numbers = #tpu.dot_dimension_numbers<[1], [0], [0], [1], [0, 0, 1, 1], [], []>} : vector<32x32xf32>, vector<32x32xf32>, vector<32x32xf32> -> vector<32x32xf32>
    %c0_6 = arith.constant 0 : index
    %c0_7 = arith.constant 0 : index
    %10 = vector.load %arg5[%c0_6, %c0_7] : memref<1x32xf32, #tpu.memory_space<vmem>>, vector<1x32xf32>
    %11 = vector.broadcast %10 : vector<1x32xf32> to vector<32x32xf32>
    %12 = arith.addf %9, %11 : vector<32x32xf32>
    %13 = math.tanh %12 : vector<32x32xf32>
    %14 = vector.extract_strided_slice %13 {offsets = [0, 0], sizes = [8, 32], strides = [1, 1]} : vector<32x32xf32> to vector<8x32xf32>
    %15 = vector.extract_strided_slice %13 {offsets = [8, 0], sizes = [8, 32], strides = [1, 1]} : vector<32x32xf32> to vector<8x32xf32>
    %16 = vector.shape_cast %14 : vector<8x32xf32> to vector<1x8x32xf32>
    %17 = vector.shape_cast %15 : vector<8x32xf32> to vector<1x8x32xf32>
    %18 = tpu.concatenate %16, %17 in 0 : vector<1x8x32xf32>, vector<1x8x32xf32> -> vector<2x8x32xf32>
    %19 = vector.extract_strided_slice %13 {offsets = [16, 0], sizes = [8, 32], strides = [1, 1]} : vector<32x32xf32> to vector<8x32xf32>
    %20 = vector.extract_strided_slice %13 {offsets = [24, 0], sizes = [8, 32], strides = [1, 1]} : vector<32x32xf32> to vector<8x32xf32>
    %21 = vector.shape_cast %19 : vector<8x32xf32> to vector<1x8x32xf32>
    %22 = vector.shape_cast %20 : vector<8x32xf32> to vector<1x8x32xf32>
    %23 = tpu.concatenate %21, %22 in 0 : vector<1x8x32xf32>, vector<1x8x32xf32> -> vector<2x8x32xf32>
    %c0_8 = arith.constant 0 : index
    %c0_9 = arith.constant 0 : index
    %24 = vector.load %arg6[%c0_8, %c0_9] : memref<8x32xf32, #tpu.memory_space<vmem>>, vector<8x32xf32>
    %25 = vector.shape_cast %24 : vector<8x32xf32> to vector<1x8x32xf32>
    %26 = vector.broadcast %25 : vector<1x8x32xf32> to vector<2x8x32xf32>
    %27 = arith.addf %18, %26 : vector<2x8x32xf32>
    %28 = vector.shape_cast %24 : vector<8x32xf32> to vector<1x8x32xf32>
    %29 = vector.broadcast %28 : vector<1x8x32xf32> to vector<2x8x32xf32>
    %30 = arith.addf %23, %29 : vector<2x8x32xf32>
    %c0_10 = arith.constant 0 : index
    %c0_11 = arith.constant 0 : index
    %31 = vector.load %arg7[%c0_10, %c0_11] : memref<4x32xf32, #tpu.memory_space<vmem>>, vector<4x32xf32>
    %32 = vector.shape_cast %31 : vector<4x32xf32> to vector<1x4x32xf32>
    %33 = vector.shape_cast %32 : vector<1x4x32xf32> to vector<1x4x32xf32>
    %34 = vector.broadcast %33 : vector<1x4x32xf32> to vector<2x4x32xf32>
    %35 = arith.mulf %18, %18 : vector<2x8x32xf32>
    %cst_12 = arith.constant dense<0.000000e+00> : vector<2x8xf32>
    %36 = vector.multi_reduction <add>, %35, %cst_12 [2] : vector<2x8x32xf32> to vector<2x8xf32>
    %37 = vector.shape_cast %36 : vector<2x8xf32> to vector<2x8x1xf32>
    %38 = math.sqrt %37 : vector<2x8x1xf32>
    %cst_13 = arith.constant 9.99999993E-9 : f32
    %39 = vector.broadcast %cst_13 : f32 to vector<2x8x1xf32>
    %40 = arith.maximumf %38, %39 : vector<2x8x1xf32>
    %41 = vector.broadcast %40 : vector<2x8x1xf32> to vector<2x8x32xf32>
    %42 = arith.divf %18, %41 : vector<2x8x32xf32>
    %43 = arith.mulf %23, %23 : vector<2x8x32xf32>
    %cst_14 = arith.constant dense<0.000000e+00> : vector<2x8xf32>
    %44 = vector.multi_reduction <add>, %43, %cst_14 [2] : vector<2x8x32xf32> to vector<2x8xf32>
    %45 = vector.shape_cast %44 : vector<2x8xf32> to vector<2x8x1xf32>
    %46 = math.sqrt %45 : vector<2x8x1xf32>
    %cst_15 = arith.constant 9.99999993E-9 : f32
    %47 = vector.broadcast %cst_15 : f32 to vector<2x8x1xf32>
    %48 = arith.maximumf %46, %47 : vector<2x8x1xf32>
    %49 = vector.broadcast %48 : vector<2x8x1xf32> to vector<2x8x32xf32>
    %50 = arith.divf %23, %49 : vector<2x8x32xf32>
    "tpu.trace_start"() <{level = 10 : i32, message = "bqd,bkd->bqk"}> : () -> ()
    %cst_16 = arith.constant dense<0.000000e+00> : vector<2x8x8xf32>
    %51 = tpu.matmul %42, %50, %cst_16 {dimension_numbers = #tpu.dot_dimension_numbers<[2], [2], [1], [1], [0, 0, 0, 1, 1, 1], [0], [0]>} : vector<2x8x32xf32>, vector<2x8x32xf32>, vector<2x8x8xf32> -> vector<2x8x8xf32>
    "tpu.trace_stop"() : () -> ()
    %cst_17 = arith.constant 2.000000e+00 : f32
    %52 = vector.broadcast %cst_17 : f32 to vector<2x8x8xf32>
    %53 = arith.subf %52, %51 : vector<2x8x8xf32>
    %cst_18 = arith.constant 5.000000e-01 : f32
    %54 = vector.broadcast %cst_18 : f32 to vector<2x8x8xf32>
    %55 = arith.mulf %53, %54 : vector<2x8x8xf32>
    %c0_19 = arith.constant 0 : index
    %c0_20 = arith.constant 0 : index
    %56 = vector.load %arg2[%c0_19, %c0_20] : memref<8x8xf32, #tpu.memory_space<vmem>>, vector<8x8xf32>
    %57 = vector.shape_cast %56 : vector<8x8xf32> to vector<1x8x8xf32>
    %58 = vector.broadcast %57 : vector<1x8x8xf32> to vector<2x8x8xf32>
    %59 = arith.mulf %55, %58 : vector<2x8x8xf32>
    %cst_21 = arith.constant dense<0x7F800000> : vector<2x8xf32>
    %60 = vector.multi_reduction <minimumf>, %55, %cst_21 [2] : vector<2x8x8xf32> to vector<2x8xf32>
    %61 = vector.shape_cast %60 : vector<2x8xf32> to vector<2x8x1xf32>
    "tpu.trace_start"() <{level = 10 : i32, message = "bqd,bkd->bqk"}> : () -> ()
    %cst_22 = arith.constant dense<0.000000e+00> : vector<2x8x8xf32>
    %62 = tpu.matmul %27, %30, %cst_22 {dimension_numbers = #tpu.dot_dimension_numbers<[2], [2], [1], [1], [0, 0, 0, 1, 1, 1], [0], [0]>} : vector<2x8x32xf32>, vector<2x8x32xf32>, vector<2x8x8xf32> -> vector<2x8x8xf32>
    "tpu.trace_stop"() : () -> ()
    %cst_23 = arith.constant dense<0xFF800000> : vector<2x8xf32>
    %63 = vector.multi_reduction <maximumf>, %62, %cst_23 [2] : vector<2x8x8xf32> to vector<2x8xf32>
    %64 = vector.shape_cast %63 : vector<2x8xf32> to vector<2x8x1xf32>
    %65 = vector.broadcast %64 : vector<2x8x1xf32> to vector<2x8x8xf32>
    %66 = arith.subf %62, %65 : vector<2x8x8xf32>
    %67 = math.exp %66 : vector<2x8x8xf32>
    %cst_24 = arith.constant dense<0.000000e+00> : vector<2x8xf32>
    %68 = vector.multi_reduction <add>, %67, %cst_24 [2] : vector<2x8x8xf32> to vector<2x8xf32>
    %69 = vector.shape_cast %68 : vector<2x8xf32> to vector<2x8x1xf32>
    %70 = vector.broadcast %69 : vector<2x8x1xf32> to vector<2x8x8xf32>
    %71 = arith.divf %67, %70 : vector<2x8x8xf32>
    "tpu.trace_start"() <{level = 10 : i32, message = "bqk,bkd->bqd"}> : () -> ()
    %cst_25 = arith.constant dense<0.000000e+00> : vector<2x8x32xf32>
    %72 = tpu.matmul %71, %30, %cst_25 {dimension_numbers = #tpu.dot_dimension_numbers<[2], [1], [1], [2], [0, 0, 0, 1, 1, 2], [0], [0]>} : vector<2x8x8xf32>, vector<2x8x32xf32>, vector<2x8x32xf32> -> vector<2x8x32xf32>
    "tpu.trace_stop"() : () -> ()
    "tpu.trace_start"() <{level = 10 : i32, message = "bqd,bkd->bqk"}> : () -> ()
    %cst_26 = arith.constant dense<0.000000e+00> : vector<2x8x8xf32>
    %73 = tpu.matmul %30, %27, %cst_26 {dimension_numbers = #tpu.dot_dimension_numbers<[2], [2], [1], [1], [0, 0, 0, 1, 1, 1], [0], [0]>} : vector<2x8x32xf32>, vector<2x8x32xf32>, vector<2x8x8xf32> -> vector<2x8x8xf32>
    "tpu.trace_stop"() : () -> ()
    %cst_27 = arith.constant dense<0xFF800000> : vector<2x8xf32>
    %74 = vector.multi_reduction <maximumf>, %73, %cst_27 [2] : vector<2x8x8xf32> to vector<2x8xf32>
    %75 = vector.shape_cast %74 : vector<2x8xf32> to vector<2x8x1xf32>
    %76 = vector.broadcast %75 : vector<2x8x1xf32> to vector<2x8x8xf32>
    %77 = arith.subf %73, %76 : vector<2x8x8xf32>
    %78 = math.exp %77 : vector<2x8x8xf32>
    %cst_28 = arith.constant dense<0.000000e+00> : vector<2x8xf32>
    %79 = vector.multi_reduction <add>, %78, %cst_28 [2] : vector<2x8x8xf32> to vector<2x8xf32>
    %80 = vector.shape_cast %79 : vector<2x8xf32> to vector<2x8x1xf32>
    %81 = vector.broadcast %80 : vector<2x8x1xf32> to vector<2x8x8xf32>
    %82 = arith.divf %78, %81 : vector<2x8x8xf32>
    "tpu.trace_start"() <{level = 10 : i32, message = "bqk,bkd->bqd"}> : () -> ()
    %cst_29 = arith.constant dense<0.000000e+00> : vector<2x8x32xf32>
    %83 = tpu.matmul %82, %27, %cst_29 {dimension_numbers = #tpu.dot_dimension_numbers<[2], [1], [1], [2], [0, 0, 0, 1, 1, 2], [0], [0]>} : vector<2x8x8xf32>, vector<2x8x32xf32>, vector<2x8x32xf32> -> vector<2x8x32xf32>
    "tpu.trace_stop"() : () -> ()
    "tpu.trace_start"() <{level = 10 : i32, message = "bqd,bkd->bqk"}> : () -> ()
    %cst_30 = arith.constant dense<0.000000e+00> : vector<2x4x8xf32>
    %84 = tpu.matmul %34, %27, %cst_30 {dimension_numbers = #tpu.dot_dimension_numbers<[2], [2], [1], [1], [0, 0, 0, 1, 1, 1], [0], [0]>} : vector<2x4x32xf32>, vector<2x8x32xf32>, vector<2x4x8xf32> -> vector<2x4x8xf32>
    "tpu.trace_stop"() : () -> ()
    %cst_31 = arith.constant dense<0xFF800000> : vector<2x4xf32>
    %85 = vector.multi_reduction <maximumf>, %84, %cst_31 [2] : vector<2x4x8xf32> to vector<2x4xf32>
    %86 = vector.shape_cast %85 : vector<2x4xf32> to vector<2x4x1xf32>
    %87 = vector.broadcast %86 : vector<2x4x1xf32> to vector<2x4x8xf32>
    %88 = arith.subf %84, %87 : vector<2x4x8xf32>
    %89 = math.exp %88 : vector<2x4x8xf32>
    %cst_32 = arith.constant dense<0.000000e+00> : vector<2x4xf32>
    %90 = vector.multi_reduction <add>, %89, %cst_32 [2] : vector<2x4x8xf32> to vector<2x4xf32>
    %91 = vector.shape_cast %90 : vector<2x4xf32> to vector<2x4x1xf32>
    %92 = vector.broadcast %91 : vector<2x4x1xf32> to vector<2x4x8xf32>
    %93 = arith.divf %89, %92 : vector<2x4x8xf32>
    "tpu.trace_start"() <{level = 10 : i32, message = "bqk,bkd->bqd"}> : () -> ()
    %cst_33 = arith.constant dense<0.000000e+00> : vector<2x4x32xf32>
    %94 = tpu.matmul %93, %27, %cst_33 {dimension_numbers = #tpu.dot_dimension_numbers<[2], [1], [1], [2], [0, 0, 0, 1, 1, 2], [0], [0]>} : vector<2x4x8xf32>, vector<2x8x32xf32>, vector<2x4x32xf32> -> vector<2x4x32xf32>
    "tpu.trace_stop"() : () -> ()
    %95 = tpu.concatenate %59, %71, %82 in 2 : vector<2x8x8xf32>, vector<2x8x8xf32>, vector<2x8x8xf32> -> vector<2x8x24xf32>
    %c0_34 = arith.constant 0 : index
    %c0_35 = arith.constant 0 : index
    %c0_36 = arith.constant 0 : index
    %96 = vector.load %arg25[%c0_34, %c0_35, %c0_36] : memref<2x8x24xf32, #tpu.memory_space<vmem>>, vector<2x8x24xf32>
    tpu.vector_store %arg25[%c0_34, %c0_35, %c0_36], %95 {strides = array<i32>} : memref<2x8x24xf32, #tpu.memory_space<vmem>>, vector<2x8x24xf32>,
    %c0_37 = arith.constant 0 : index
    %c0_38 = arith.constant 0 : index
    %97 = vector.load %arg1[%c0_37, %c0_38] : memref<4x1xi32, #tpu.memory_space<vmem>>, vector<4x1xi32>
    %98 = tpu.iota {dimensions = array<i32: 1>} : vector<4x6xi32>
    %99 = vector.broadcast %97 : vector<4x1xi32> to vector<4x6xi32>
    %100 = arith.cmpi eq, %98, %99 : vector<4x6xi32>
    %101 = arith.extui %100 : vector<4x6xi1> to vector<4x6xi32>
    %102 = arith.sitofp %101 : vector<4x6xi32> to vector<4x6xf32>
    %c0_39 = arith.constant 0 : index
    %c0_40 = arith.constant 0 : index
    %103 = vector.load %arg8[%c0_39, %c0_40] : memref<6x32xf32, #tpu.memory_space<vmem>>, vector<6x32xf32>
    %cst_41 = arith.constant dense<0.000000e+00> : vector<4x32xf32>
    %104 = tpu.matmul %102, %103, %cst_41 {dimension_numbers = #tpu.dot_dimension_numbers<[1], [0], [0], [1], [0, 0, 1, 1], [], []>} : vector<4x6xf32>, vector<6x32xf32>, vector<4x32xf32> -> vector<4x32xf32>
    %105 = vector.extract_strided_slice %72 {offsets = [0, 1, 0], sizes = [2, 7, 32], strides = [1, 1, 1]} : vector<2x8x32xf32> to vector<2x7x32xf32>
    %106 = vector.extract_strided_slice %61 {offsets = [0, 1, 0], sizes = [2, 7, 1], strides = [1, 1, 1]} : vector<2x8x1xf32> to vector<2x7x1xf32>
    %107 = vector.broadcast %106 : vector<2x7x1xf32> to vector<2x7x32xf32>
    %108 = arith.mulf %105, %107 : vector<2x7x32xf32>
    %c0_42 = arith.constant 0 : index
    %c0_43 = arith.constant 0 : index
    %c0_44 = arith.constant 0 : index
    %109 = vector.load %arg9[%c0_42, %c0_43, %c0_44] : memref<1x7x1xf32, #tpu.memory_space<vmem>>, vector<1x7x1xf32>
    %110 = vector.broadcast %109 : vector<1x7x1xf32> to vector<2x7x32xf32>
    %111 = arith.mulf %108, %110 : vector<2x7x32xf32>
    %cst_45 = arith.constant dense<0.000000e+00> : vector<2x32xf32>
    %112 = vector.multi_reduction <add>, %111, %cst_45 [1] : vector<2x7x32xf32> to vector<2x32xf32>
    %c0_46 = arith.constant 0 : index
    %c0_47 = arith.constant 0 : index
    %113 = vector.load %arg10[%c0_46, %c0_47] : memref<1x1xf32, #tpu.memory_space<vmem>>, vector<1x1xf32>
    %114 = vector.broadcast %113 : vector<1x1xf32> to vector<2x32xf32>
    %115 = arith.addf %112, %114 : vector<2x32xf32>
    %cst_48 = arith.constant 0.000000e+00 : f32
    %116 = vector.broadcast %cst_48 : f32 to vector<2x32xf32>
    %c0_49 = arith.constant 0 : index
    %c0_50 = arith.constant 0 : index
    %117 = vector.load %arg11[%c0_49, %c0_50] : memref<32x128xf32, #tpu.memory_space<vmem>>, vector<32x128xf32>
    %c0_51 = arith.constant 0 : index
    %c0_52 = arith.constant 0 : index
    %118 = vector.load %arg12[%c0_51, %c0_52] : memref<32x128xf32, #tpu.memory_space<vmem>>, vector<32x128xf32>
    %c0_53 = arith.constant 0 : index
    %c0_54 = arith.constant 0 : index
    %119 = vector.load %arg13[%c0_53, %c0_54] : memref<1x128xf32, #tpu.memory_space<vmem>>, vector<1x128xf32>
    %c0_55 = arith.constant 0 : index
    %c0_56 = arith.constant 0 : index
    %120 = vector.load %arg14[%c0_55, %c0_56] : memref<1x128xf32, #tpu.memory_space<vmem>>, vector<1x128xf32>
    %cst_57 = arith.constant dense<0.000000e+00> : vector<2x128xf32>
    %121 = tpu.matmul %115, %117, %cst_57 {dimension_numbers = #tpu.dot_dimension_numbers<[1], [0], [0], [1], [0, 0, 1, 1], [], []>} : vector<2x32xf32>, vector<32x128xf32>, vector<2x128xf32> -> vector<2x128xf32>
    %122 = vector.broadcast %120 : vector<1x128xf32> to vector<2x128xf32>
    %123 = arith.addf %121, %122 : vector<2x128xf32>
    %124 = vector.extract_strided_slice %123 {offsets = [0, 0], sizes = [2, 32], strides = [1, 1]} : vector<2x128xf32> to vector<2x32xf32>
    %125 = arith.negf %124 : vector<2x32xf32>
    %126 = math.exp %125 : vector<2x32xf32>
    %cst_58 = arith.constant 1.000000e+00 : f32
    %127 = vector.broadcast %cst_58 : f32 to vector<2x32xf32>
    %128 = arith.addf %127, %126 : vector<2x32xf32>
    %129 = arith.divf %127, %128 : vector<2x32xf32>
    %130 = vector.extract_strided_slice %123 {offsets = [0, 32], sizes = [2, 32], strides = [1, 1]} : vector<2x128xf32> to vector<2x32xf32>
    %131 = arith.negf %130 : vector<2x32xf32>
    %132 = math.exp %131 : vector<2x32xf32>
    %cst_59 = arith.constant 1.000000e+00 : f32
    %133 = vector.broadcast %cst_59 : f32 to vector<2x32xf32>
    %134 = arith.addf %133, %132 : vector<2x32xf32>
    %135 = arith.divf %133, %134 : vector<2x32xf32>
    %136 = vector.extract_strided_slice %123 {offsets = [0, 64], sizes = [2, 32], strides = [1, 1]} : vector<2x128xf32> to vector<2x32xf32>
    %137 = math.tanh %136 : vector<2x32xf32>
    %138 = vector.extract_strided_slice %123 {offsets = [0, 96], sizes = [2, 32], strides = [1, 1]} : vector<2x128xf32> to vector<2x32xf32>
    %139 = arith.negf %138 : vector<2x32xf32>
    %140 = math.exp %139 : vector<2x32xf32>
    %cst_60 = arith.constant 1.000000e+00 : f32
    %141 = vector.broadcast %cst_60 : f32 to vector<2x32xf32>
    %142 = arith.addf %141, %140 : vector<2x32xf32>
    %143 = arith.divf %141, %142 : vector<2x32xf32>
    %144 = arith.mulf %135, %116 : vector<2x32xf32>
    %145 = arith.mulf %129, %137 : vector<2x32xf32>
    %146 = arith.addf %144, %145 : vector<2x32xf32>
    %147 = math.tanh %146 : vector<2x32xf32>
    %148 = arith.mulf %143, %147 : vector<2x32xf32>
    %cst_61 = arith.constant dense<0.000000e+00> : vector<2x128xf32>
    %149 = tpu.matmul %148, %118, %cst_61 {dimension_numbers = #tpu.dot_dimension_numbers<[1], [0], [0], [1], [0, 0, 1, 1], [], []>} : vector<2x32xf32>, vector<32x128xf32>, vector<2x128xf32> -> vector<2x128xf32>
    %150 = vector.broadcast %119 : vector<1x128xf32> to vector<2x128xf32>
    %151 = arith.addf %149, %150 : vector<2x128xf32>
    %152 = vector.extract_strided_slice %151 {offsets = [0, 0], sizes = [2, 32], strides = [1, 1]} : vector<2x128xf32> to vector<2x32xf32>
    %153 = arith.negf %152 : vector<2x32xf32>
    %154 = math.exp %153 : vector<2x32xf32>
    %cst_62 = arith.constant 1.000000e+00 : f32
    %155 = vector.broadcast %cst_62 : f32 to vector<2x32xf32>
    %156 = arith.addf %155, %154 : vector<2x32xf32>
    %157 = arith.divf %155, %156 : vector<2x32xf32>
    %158 = vector.extract_strided_slice %151 {offsets = [0, 32], sizes = [2, 32], strides = [1, 1]} : vector<2x128xf32> to vector<2x32xf32>
    %159 = arith.negf %158 : vector<2x32xf32>
    %160 = math.exp %159 : vector<2x32xf32>
    %cst_63 = arith.constant 1.000000e+00 : f32
    %161 = vector.broadcast %cst_63 : f32 to vector<2x32xf32>
    %162 = arith.addf %161, %160 : vector<2x32xf32>
    %163 = arith.divf %161, %162 : vector<2x32xf32>
    %164 = vector.extract_strided_slice %151 {offsets = [0, 64], sizes = [2, 32], strides = [1, 1]} : vector<2x128xf32> to vector<2x32xf32>
    %165 = math.tanh %164 : vector<2x32xf32>
    %166 = vector.extract_strided_slice %151 {offsets = [0, 96], sizes = [2, 32], strides = [1, 1]} : vector<2x128xf32> to vector<2x32xf32>
    %167 = arith.negf %166 : vector<2x32xf32>
    %168 = math.exp %167 : vector<2x32xf32>
    %cst_64 = arith.constant 1.000000e+00 : f32
    %169 = vector.broadcast %cst_64 : f32 to vector<2x32xf32>
    %170 = arith.addf %169, %168 : vector<2x32xf32>
    %171 = arith.divf %169, %170 : vector<2x32xf32>
    %172 = arith.mulf %163, %146 : vector<2x32xf32>
    %173 = arith.mulf %157, %165 : vector<2x32xf32>
    %174 = arith.addf %172, %173 : vector<2x32xf32>
    %175 = math.tanh %174 : vector<2x32xf32>
    %176 = arith.mulf %171, %175 : vector<2x32xf32>
    %c0_65 = arith.constant 0 : index
    %c0_66 = arith.constant 0 : index
    %177 = vector.load %arg21[%c0_65, %c0_66] : memref<32x32xf32, #tpu.memory_space<vmem>>, vector<32x32xf32>
    %c0_67 = arith.constant 0 : index
    %c0_68 = arith.constant 0 : index
    %178 = vector.load %arg22[%c0_67, %c0_68] : memref<1x32xf32, #tpu.memory_space<vmem>>, vector<1x32xf32>
    %179 = vector.extract_strided_slice %94 {offsets = [0, 0, 0], sizes = [1, 4, 32], strides = [1, 1, 1]} : vector<2x4x32xf32> to vector<1x4x32xf32>
    %180 = vector.shape_cast %179 : vector<1x4x32xf32> to vector<4x32xf32>
    %cst_69 = arith.constant dense<0.000000e+00> : vector<4x32xf32>
    %181 = tpu.matmul %180, %177, %cst_69 {dimension_numbers = #tpu.dot_dimension_numbers<[1], [0], [0], [1], [0, 0, 1, 1], [], []>} : vector<4x32xf32>, vector<32x32xf32>, vector<4x32xf32> -> vector<4x32xf32>
    %182 = vector.broadcast %178 : vector<1x32xf32> to vector<4x32xf32>
    %183 = arith.addf %181, %182 : vector<4x32xf32>
    %184 = vector.extract_strided_slice %94 {offsets = [1, 0, 0], sizes = [1, 4, 32], strides = [1, 1, 1]} : vector<2x4x32xf32> to vector<1x4x32xf32>
    %185 = vector.shape_cast %184 : vector<1x4x32xf32> to vector<4x32xf32>
    %cst_70 = arith.constant dense<0.000000e+00> : vector<4x32xf32>
    %186 = tpu.matmul %185, %177, %cst_70 {dimension_numbers = #tpu.dot_dimension_numbers<[1], [0], [0], [1], [0, 0, 1, 1], [], []>} : vector<4x32xf32>, vector<32x32xf32>, vector<4x32xf32> -> vector<4x32xf32>
    %187 = vector.broadcast %178 : vector<1x32xf32> to vector<4x32xf32>
    %188 = arith.addf %186, %187 : vector<4x32xf32>
    %189 = vector.shape_cast %183 : vector<4x32xf32> to vector<1x4x32xf32>
    %190 = vector.shape_cast %188 : vector<4x32xf32> to vector<1x4x32xf32>
    %191 = tpu.concatenate %189, %190 in 0 : vector<1x4x32xf32>, vector<1x4x32xf32> -> vector<2x4x32xf32>
    %192 = vector.extract_strided_slice %83 {offsets = [0, 0, 0], sizes = [1, 8, 32], strides = [1, 1, 1]} : vector<2x8x32xf32> to vector<1x8x32xf32>
    %193 = vector.shape_cast %192 : vector<1x8x32xf32> to vector<8x32xf32>
    %cst_71 = arith.constant dense<0.000000e+00> : vector<8x32xf32>
    %194 = tpu.matmul %193, %177, %cst_71 {dimension_numbers = #tpu.dot_dimension_numbers<[1], [0], [0], [1], [0, 0, 1, 1], [], []>} : vector<8x32xf32>, vector<32x32xf32>, vector<8x32xf32> -> vector<8x32xf32>
    %195 = vector.broadcast %178 : vector<1x32xf32> to vector<8x32xf32>
    %196 = arith.addf %194, %195 : vector<8x32xf32>
    %197 = vector.extract_strided_slice %83 {offsets = [1, 0, 0], sizes = [1, 8, 32], strides = [1, 1, 1]} : vector<2x8x32xf32> to vector<1x8x32xf32>
    %198 = vector.shape_cast %197 : vector<1x8x32xf32> to vector<8x32xf32>
    %cst_72 = arith.constant dense<0.000000e+00> : vector<8x32xf32>
    %199 = tpu.matmul %198, %177, %cst_72 {dimension_numbers = #tpu.dot_dimension_numbers<[1], [0], [0], [1], [0, 0, 1, 1], [], []>} : vector<8x32xf32>, vector<32x32xf32>, vector<8x32xf32> -> vector<8x32xf32>
    %200 = vector.broadcast %178 : vector<1x32xf32> to vector<8x32xf32>
    %201 = arith.addf %199, %200 : vector<8x32xf32>
    %202 = vector.shape_cast %196 : vector<8x32xf32> to vector<1x8x32xf32>
    %203 = vector.shape_cast %201 : vector<8x32xf32> to vector<1x8x32xf32>
    %204 = tpu.concatenate %202, %203 in 0 : vector<1x8x32xf32>, vector<1x8x32xf32> -> vector<2x8x32xf32>
    %c0_73 = arith.constant 0 : index
    %c0_74 = arith.constant 0 : index
    %205 = vector.load %arg17[%c0_73, %c0_74] : memref<32x128xf32, #tpu.memory_space<vmem>>, vector<32x128xf32>
    %c0_75 = arith.constant 0 : index
    %c0_76 = arith.constant 0 : index
    %206 = vector.load %arg18[%c0_75, %c0_76] : memref<1x128xf32, #tpu.memory_space<vmem>>, vector<1x128xf32>
    %c0_77 = arith.constant 0 : index
    %c0_78 = arith.constant 0 : index
    %207 = vector.load %arg19[%c0_77, %c0_78] : memref<32x32xf32, #tpu.memory_space<vmem>>, vector<32x32xf32>
    %c0_79 = arith.constant 0 : index
    %c0_80 = arith.constant 0 : index
    %208 = vector.load %arg20[%c0_79, %c0_80] : memref<1x32xf32, #tpu.memory_space<vmem>>, vector<1x32xf32>
    %c0_81 = arith.constant 0 : index
    %c0_82 = arith.constant 0 : index
    %209 = vector.load %arg23[%c0_81, %c0_82] : memref<1x32xf32, #tpu.memory_space<vmem>>, vector<1x32xf32>
    %210 = vector.shape_cast %209 : vector<1x32xf32> to vector<1x1x32xf32>
    %c0_83 = arith.constant 0 : index
    %c0_84 = arith.constant 0 : index
    %211 = vector.load %arg24[%c0_83, %c0_84] : memref<1x1xf32, #tpu.memory_space<vmem>>, vector<1x1xf32>
    %212 = vector.extract %211[0, 0] : f32 from vector<1x1xf32>
    %c0_85 = arith.constant 0 : index
    %c0_86 = arith.constant 0 : index
    %213 = vector.load %arg15[%c0_85, %c0_86] : memref<32x6xf32, #tpu.memory_space<vmem>>, vector<32x6xf32>
    %c0_87 = arith.constant 0 : index
    %c0_88 = arith.constant 0 : index
    %214 = vector.load %arg16[%c0_87, %c0_88] : memref<1x6xf32, #tpu.memory_space<vmem>>, vector<1x6xf32>
    %215 = tpu.iota {dimensions = array<i32: 1>} : vector<1x4x1xi32>
    %216 = tpu.iota {dimensions = array<i32: 1>} : vector<2x12xi32>
    %c2_i32 = arith.constant 2 : i32
    %217 = vector.broadcast %c2_i32 : i32 to vector<1x4x1xi32>
    %218 = arith.cmpi slt, %215, %217 : vector<1x4x1xi32>
    %cst_89 = arith.constant 0.000000e+00 : f32
    %219 = vector.shape_cast %218 : vector<1x4x1xi1> to vector<1x4x1xi1>
    %220 = vector.broadcast %219 : vector<1x4x1xi1> to vector<2x4x32xi1>
    %221 = vector.broadcast %cst_89 : f32 to vector<2x4x32xf32>
    %222 = arith.select %220, %94, %221 : vector<2x4x32xi1>, vector<2x4x32xf32>
    %223 = vector.shape_cast %178 : vector<1x32xf32> to vector<1x1x32xf32>
    %224 = vector.shape_cast %218 : vector<1x4x1xi1> to vector<1x4x1xi1>
    %225 = vector.broadcast %224 : vector<1x4x1xi1> to vector<2x4x32xi1>
    %226 = vector.shape_cast %223 : vector<1x1x32xf32> to vector<1x1x32xf32>
    %227 = vector.broadcast %226 : vector<1x1x32xf32> to vector<2x4x32xf32>
    %228 = arith.select %225, %191, %227 : vector<2x4x32xi1>, vector<2x4x32xf32>
    %cst_90 = arith.constant dense<0.000000e+00> : vector<2x128xf32>
    %229 = tpu.matmul %148, %205, %cst_90 {dimension_numbers = #tpu.dot_dimension_numbers<[1], [0], [0], [1], [0, 0, 1, 1], [], []>} : vector<2x32xf32>, vector<32x128xf32>, vector<2x128xf32> -> vector<2x128xf32>
    %230 = vector.broadcast %206 : vector<1x128xf32> to vector<2x128xf32>
    %231 = arith.addf %229, %230 : vector<2x128xf32>
    %232 = vector.extract_strided_slice %231 {offsets = [0, 0], sizes = [2, 32], strides = [1, 1]} : vector<2x128xf32> to vector<2x32xf32>
    %233 = arith.negf %232 : vector<2x32xf32>
    %234 = math.exp %233 : vector<2x32xf32>
    %cst_91 = arith.constant 1.000000e+00 : f32
    %235 = vector.broadcast %cst_91 : f32 to vector<2x32xf32>
    %236 = arith.addf %235, %234 : vector<2x32xf32>
    %237 = arith.divf %235, %236 : vector<2x32xf32>
    %238 = vector.extract_strided_slice %231 {offsets = [0, 64], sizes = [2, 32], strides = [1, 1]} : vector<2x128xf32> to vector<2x32xf32>
    %239 = math.tanh %238 : vector<2x32xf32>
    %240 = vector.extract_strided_slice %231 {offsets = [0, 96], sizes = [2, 32], strides = [1, 1]} : vector<2x128xf32> to vector<2x32xf32>
    %241 = arith.negf %240 : vector<2x32xf32>
    %242 = math.exp %241 : vector<2x32xf32>
    %cst_92 = arith.constant 1.000000e+00 : f32
    %243 = vector.broadcast %cst_92 : f32 to vector<2x32xf32>
    %244 = arith.addf %243, %242 : vector<2x32xf32>
    %245 = arith.divf %243, %244 : vector<2x32xf32>
    %246 = arith.mulf %237, %239 : vector<2x32xf32>
    %247 = math.tanh %246 : vector<2x32xf32>
    %248 = arith.mulf %245, %247 : vector<2x32xf32>
    %cst_93 = arith.constant dense<0.000000e+00> : vector<2x32xf32>
    %249 = tpu.matmul %248, %207, %cst_93 {dimension_numbers = #tpu.dot_dimension_numbers<[1], [0], [0], [1], [0, 0, 1, 1], [], []>} : vector<2x32xf32>, vector<32x32xf32>, vector<2x32xf32> -> vector<2x32xf32>
    %250 = vector.broadcast %208 : vector<1x32xf32> to vector<2x32xf32>
    %251 = arith.addf %249, %250 : vector<2x32xf32>
    %252 = vector.shape_cast %251 : vector<2x32xf32> to vector<2x1x32xf32>
    %253 = vector.broadcast %252 : vector<2x1x32xf32> to vector<2x4x32xf32>
    %254 = arith.addf %228, %253 : vector<2x4x32xf32>
    %255 = math.tanh %254 : vector<2x4x32xf32>
    %256 = vector.broadcast %210 : vector<1x1x32xf32> to vector<2x4x32xf32>
    %257 = arith.mulf %255, %256 : vector<2x4x32xf32>
    %cst_94 = arith.constant dense<0.000000e+00> : vector<2x4xf32>
    %258 = vector.multi_reduction <add>, %257, %cst_94 [2] : vector<2x4x32xf32> to vector<2x4xf32>
    %259 = vector.broadcast %252 : vector<2x1x32xf32> to vector<2x8x32xf32>
    %260 = arith.addf %204, %259 : vector<2x8x32xf32>
    %261 = math.tanh %260 : vector<2x8x32xf32>
    %262 = vector.broadcast %210 : vector<1x1x32xf32> to vector<2x8x32xf32>
    %263 = arith.mulf %261, %262 : vector<2x8x32xf32>
    %cst_95 = arith.constant dense<0.000000e+00> : vector<2x8xf32>
    %264 = vector.multi_reduction <add>, %263, %cst_95 [2] : vector<2x8x32xf32> to vector<2x8xf32>
    %265 = tpu.concatenate %258, %264 in 1 : vector<2x4xf32>, vector<2x8xf32> -> vector<2x12xf32>
    %266 = vector.broadcast %212 : f32 to vector<2x12xf32>
    %267 = arith.addf %265, %266 : vector<2x12xf32>
    %cst_96 = arith.constant dense<0xFF800000> : vector<2xf32>
    %268 = vector.multi_reduction <maximumf>, %267, %cst_96 [1] : vector<2x12xf32> to vector<2xf32>
    %269 = vector.shape_cast %268 : vector<2xf32> to vector<2x1xf32>
    %270 = vector.broadcast %269 : vector<2x1xf32> to vector<2x12xf32>
    %271 = arith.subf %267, %270 : vector<2x12xf32>
    %272 = math.exp %271 : vector<2x12xf32>
    %cst_97 = arith.constant dense<0.000000e+00> : vector<2xf32>
    %273 = vector.multi_reduction <add>, %272, %cst_97 [1] : vector<2x12xf32> to vector<2xf32>
    %274 = vector.shape_cast %273 : vector<2xf32> to vector<2x1xf32>
    %275 = math.log %274 : vector<2x1xf32>
    %276 = arith.addf %269, %275 : vector<2x1xf32>
    %277 = vector.broadcast %276 : vector<2x1xf32> to vector<2x12xf32>
    %278 = arith.subf %267, %277 : vector<2x12xf32>
    %cst_98 = arith.constant dense<0xFF800000> : vector<2xf32>
    %279 = vector.multi_reduction <maximumf>, %278, %cst_98 [1] : vector<2x12xf32> to vector<2xf32>
    %280 = vector.shape_cast %279 : vector<2xf32> to vector<2x1xf32>
    %281 = vector.broadcast %280 : vector<2x1xf32> to vector<2x12xf32>
    %282 = arith.cmpf oeq, %278, %281 : vector<2x12xf32>
    %c12_i32 = arith.constant 12 : i32
    %283 = vector.broadcast %c12_i32 : i32 to vector<2x12xi32>
    %284 = arith.select %282, %216, %283 : vector<2x12xi1>, vector<2x12xi32>
    %cst_99 = arith.constant dense<2147483647> : vector<2xi32>
    %285 = vector.multi_reduction <minsi>, %284, %cst_99 [1] : vector<2x12xi32> to vector<2xi32>
    %286 = vector.shape_cast %285 : vector<2xi32> to vector<2x1xi32>
    %287 = vector.broadcast %286 : vector<2x1xi32> to vector<2x12xi32>
    %288 = arith.cmpi eq, %216, %287 : vector<2x12xi32>
    %289 = arith.extui %288 : vector<2x12xi1> to vector<2x12xi32>
    %290 = arith.sitofp %289 : vector<2x12xi32> to vector<2x12xf32>
    %291 = vector.extract_strided_slice %290 {offsets = [0, 0], sizes = [2, 4], strides = [1, 1]} : vector<2x12xf32> to vector<2x4xf32>
    %292 = vector.shape_cast %291 : vector<2x4xf32> to vector<2x4x1xf32>
    %293 = vector.broadcast %292 : vector<2x4x1xf32> to vector<2x4x32xf32>
    %294 = arith.mulf %293, %222 : vector<2x4x32xf32>
    %cst_100 = arith.constant dense<0.000000e+00> : vector<2x32xf32>
    %295 = vector.multi_reduction <add>, %294, %cst_100 [1] : vector<2x4x32xf32> to vector<2x32xf32>
    %296 = vector.extract_strided_slice %290 {offsets = [0, 4], sizes = [2, 8], strides = [1, 1]} : vector<2x12xf32> to vector<2x8xf32>
    %297 = vector.shape_cast %296 : vector<2x8xf32> to vector<2x8x1xf32>
    %298 = vector.broadcast %297 : vector<2x8x1xf32> to vector<2x8x32xf32>
    %299 = arith.mulf %298, %83 : vector<2x8x32xf32>
    %cst_101 = arith.constant dense<0.000000e+00> : vector<2x32xf32>
    %300 = vector.multi_reduction <add>, %299, %cst_101 [1] : vector<2x8x32xf32> to vector<2x32xf32>
    %301 = arith.addf %295, %300 : vector<2x32xf32>
    %cst_102 = arith.constant dense<0.000000e+00> : vector<2x128xf32>
    %302 = tpu.matmul %301, %205, %cst_102 {dimension_numbers = #tpu.dot_dimension_numbers<[1], [0], [0], [1], [0, 0, 1, 1], [], []>} : vector<2x32xf32>, vector<32x128xf32>, vector<2x128xf32> -> vector<2x128xf32>
    %303 = vector.broadcast %206 : vector<1x128xf32> to vector<2x128xf32>
    %304 = arith.addf %302, %303 : vector<2x128xf32>
    %305 = vector.extract_strided_slice %304 {offsets = [0, 0], sizes = [2, 32], strides = [1, 1]} : vector<2x128xf32> to vector<2x32xf32>
    %306 = arith.negf %305 : vector<2x32xf32>
    %307 = math.exp %306 : vector<2x32xf32>
    %cst_103 = arith.constant 1.000000e+00 : f32
    %308 = vector.broadcast %cst_103 : f32 to vector<2x32xf32>
    %309 = arith.addf %308, %307 : vector<2x32xf32>
    %310 = arith.divf %308, %309 : vector<2x32xf32>
    %311 = vector.extract_strided_slice %304 {offsets = [0, 64], sizes = [2, 32], strides = [1, 1]} : vector<2x128xf32> to vector<2x32xf32>
    %312 = math.tanh %311 : vector<2x32xf32>
    %313 = vector.extract_strided_slice %304 {offsets = [0, 96], sizes = [2, 32], strides = [1, 1]} : vector<2x128xf32> to vector<2x32xf32>
    %314 = arith.negf %313 : vector<2x32xf32>
    %315 = math.exp %314 : vector<2x32xf32>
    %cst_104 = arith.constant 1.000000e+00 : f32
    %316 = vector.broadcast %cst_104 : f32 to vector<2x32xf32>
    %317 = arith.addf %316, %315 : vector<2x32xf32>
    %318 = arith.divf %316, %317 : vector<2x32xf32>
    %319 = arith.mulf %310, %312 : vector<2x32xf32>
    %320 = math.tanh %319 : vector<2x32xf32>
    %321 = arith.mulf %318, %320 : vector<2x32xf32>
    %cst_105 = arith.constant dense<0.000000e+00> : vector<2x32xf32>
    %322 = tpu.matmul %321, %207, %cst_105 {dimension_numbers = #tpu.dot_dimension_numbers<[1], [0], [0], [1], [0, 0, 1, 1], [], []>} : vector<2x32xf32>, vector<32x32xf32>, vector<2x32xf32> -> vector<2x32xf32>
    %323 = vector.broadcast %208 : vector<1x32xf32> to vector<2x32xf32>
    %324 = arith.addf %322, %323 : vector<2x32xf32>
    %325 = vector.shape_cast %324 : vector<2x32xf32> to vector<2x1x32xf32>
    %326 = vector.broadcast %325 : vector<2x1x32xf32> to vector<2x4x32xf32>
    %327 = arith.addf %228, %326 : vector<2x4x32xf32>
    %328 = math.tanh %327 : vector<2x4x32xf32>
    %329 = vector.broadcast %210 : vector<1x1x32xf32> to vector<2x4x32xf32>
    %330 = arith.mulf %328, %329 : vector<2x4x32xf32>
    %cst_106 = arith.constant dense<0.000000e+00> : vector<2x4xf32>
    %331 = vector.multi_reduction <add>, %330, %cst_106 [2] : vector<2x4x32xf32> to vector<2x4xf32>
    %332 = vector.broadcast %325 : vector<2x1x32xf32> to vector<2x8x32xf32>
    %333 = arith.addf %204, %332 : vector<2x8x32xf32>
    %334 = math.tanh %333 : vector<2x8x32xf32>
    %335 = vector.broadcast %210 : vector<1x1x32xf32> to vector<2x8x32xf32>
    %336 = arith.mulf %334, %335 : vector<2x8x32xf32>
    %cst_107 = arith.constant dense<0.000000e+00> : vector<2x8xf32>
    %337 = vector.multi_reduction <add>, %336, %cst_107 [2] : vector<2x8x32xf32> to vector<2x8xf32>
    %338 = tpu.concatenate %331, %337 in 1 : vector<2x4xf32>, vector<2x8xf32> -> vector<2x12xf32>
    %339 = vector.broadcast %212 : f32 to vector<2x12xf32>
    %340 = arith.addf %338, %339 : vector<2x12xf32>
    %cst_108 = arith.constant dense<0xFF800000> : vector<2xf32>
    %341 = vector.multi_reduction <maximumf>, %340, %cst_108 [1] : vector<2x12xf32> to vector<2xf32>
    %342 = vector.shape_cast %341 : vector<2xf32> to vector<2x1xf32>
    %343 = vector.broadcast %342 : vector<2x1xf32> to vector<2x12xf32>
    %344 = arith.subf %340, %343 : vector<2x12xf32>
    %345 = math.exp %344 : vector<2x12xf32>
    %cst_109 = arith.constant dense<0.000000e+00> : vector<2xf32>
    %346 = vector.multi_reduction <add>, %345, %cst_109 [1] : vector<2x12xf32> to vector<2xf32>
    %347 = vector.shape_cast %346 : vector<2xf32> to vector<2x1xf32>
    %348 = math.log %347 : vector<2x1xf32>
    %349 = arith.addf %342, %348 : vector<2x1xf32>
    %350 = vector.broadcast %349 : vector<2x1xf32> to vector<2x12xf32>
    %351 = arith.subf %340, %350 : vector<2x12xf32>
    %cst_110 = arith.constant dense<0.000000e+00> : vector<2x6xf32>
    %352 = tpu.matmul %148, %213, %cst_110 {dimension_numbers = #tpu.dot_dimension_numbers<[1], [0], [0], [1], [0, 0, 1, 1], [], []>} : vector<2x32xf32>, vector<32x6xf32>, vector<2x6xf32> -> vector<2x6xf32>
    %353 = vector.broadcast %214 : vector<1x6xf32> to vector<2x6xf32>
    %354 = arith.addf %352, %353 : vector<2x6xf32>
    %cst_111 = arith.constant dense<0xFF800000> : vector<2xf32>
    %355 = vector.multi_reduction <maximumf>, %354, %cst_111 [1] : vector<2x6xf32> to vector<2xf32>
    %356 = vector.shape_cast %355 : vector<2xf32> to vector<2x1xf32>
    %357 = vector.broadcast %356 : vector<2x1xf32> to vector<2x6xf32>
    %358 = arith.subf %354, %357 : vector<2x6xf32>
    %359 = math.exp %358 : vector<2x6xf32>
    %cst_112 = arith.constant dense<0.000000e+00> : vector<2xf32>
    %360 = vector.multi_reduction <add>, %359, %cst_112 [1] : vector<2x6xf32> to vector<2xf32>
    %361 = vector.shape_cast %360 : vector<2xf32> to vector<2x1xf32>
    %362 = vector.broadcast %361 : vector<2x1xf32> to vector<2x6xf32>
    %363 = arith.divf %359, %362 : vector<2x6xf32>
    %364 = vector.extract_strided_slice %104 {offsets = [0, 0], sizes = [2, 32], strides = [1, 1]} : vector<4x32xf32> to vector<2x32xf32>
    %365 = tpu.concatenate %364, %148, %363, %278, %351 in 1 : vector<2x32xf32>, vector<2x32xf32>, vector<2x6xf32>, vector<2x12xf32>, vector<2x12xf32> -> vector<2x94xf32>
    %c0_113 = arith.constant 0 : index
    %c0_114 = arith.constant 0 : index
    %c0_115 = arith.constant 0 : index
    %366 = vector.load %arg26[%c0_113, %c0_114, %c0_115] : memref<2x2x94xf32, #tpu.memory_space<vmem>>, vector<2x1x94xf32>
    %367 = vector.shape_cast %366 : vector<2x1x94xf32> to vector<2x94xf32>
    %368 = vector.shape_cast %365 : vector<2x94xf32> to vector<2x1x94xf32>
    tpu.vector_store %arg26[%c0_113, %c0_114, %c0_115], %368 {strides = array<i32>} : memref<2x2x94xf32, #tpu.memory_space<vmem>>, vector<2x1x94xf32>,
    %c3_i32 = arith.constant 3 : i32
    %369 = vector.broadcast %c3_i32 : i32 to vector<1x4x1xi32>
    %370 = arith.cmpi slt, %215, %369 : vector<1x4x1xi32>
    %cst_116 = arith.constant 0.000000e+00 : f32
    %371 = vector.shape_cast %370 : vector<1x4x1xi1> to vector<1x4x1xi1>
    %372 = vector.broadcast %371 : vector<1x4x1xi1> to vector<2x4x32xi1>
    %373 = vector.broadcast %cst_116 : f32 to vector<2x4x32xf32>
    %374 = arith.select %372, %94, %373 : vector<2x4x32xi1>, vector<2x4x32xf32>
    %375 = vector.shape_cast %178 : vector<1x32xf32> to vector<1x1x32xf32>
    %376 = vector.shape_cast %370 : vector<1x4x1xi1> to vector<1x4x1xi1>
    %377 = vector.broadcast %376 : vector<1x4x1xi1> to vector<2x4x32xi1>
    %378 = vector.shape_cast %375 : vector<1x1x32xf32> to vector<1x1x32xf32>
    %379 = vector.broadcast %378 : vector<1x1x32xf32> to vector<2x4x32xf32>
    %380 = arith.select %377, %191, %379 : vector<2x4x32xi1>, vector<2x4x32xf32>
    %cst_117 = arith.constant dense<0.000000e+00> : vector<2x128xf32>
    %381 = tpu.matmul %176, %205, %cst_117 {dimension_numbers = #tpu.dot_dimension_numbers<[1], [0], [0], [1], [0, 0, 1, 1], [], []>} : vector<2x32xf32>, vector<32x128xf32>, vector<2x128xf32> -> vector<2x128xf32>
    %382 = vector.broadcast %206 : vector<1x128xf32> to vector<2x128xf32>
    %383 = arith.addf %381, %382 : vector<2x128xf32>
    %384 = vector.extract_strided_slice %383 {offsets = [0, 0], sizes = [2, 32], strides = [1, 1]} : vector<2x128xf32> to vector<2x32xf32>
    %385 = arith.negf %384 : vector<2x32xf32>
    %386 = math.exp %385 : vector<2x32xf32>
    %cst_118 = arith.constant 1.000000e+00 : f32
    %387 = vector.broadcast %cst_118 : f32 to vector<2x32xf32>
    %388 = arith.addf %387, %386 : vector<2x32xf32>
    %389 = arith.divf %387, %388 : vector<2x32xf32>
    %390 = vector.extract_strided_slice %383 {offsets = [0, 64], sizes = [2, 32], strides = [1, 1]} : vector<2x128xf32> to vector<2x32xf32>
    %391 = math.tanh %390 : vector<2x32xf32>
    %392 = vector.extract_strided_slice %383 {offsets = [0, 96], sizes = [2, 32], strides = [1, 1]} : vector<2x128xf32> to vector<2x32xf32>
    %393 = arith.negf %392 : vector<2x32xf32>
    %394 = math.exp %393 : vector<2x32xf32>
    %cst_119 = arith.constant 1.000000e+00 : f32
    %395 = vector.broadcast %cst_119 : f32 to vector<2x32xf32>
    %396 = arith.addf %395, %394 : vector<2x32xf32>
    %397 = arith.divf %395, %396 : vector<2x32xf32>
    %398 = arith.mulf %389, %391 : vector<2x32xf32>
    %399 = math.tanh %398 : vector<2x32xf32>
    %400 = arith.mulf %397, %399 : vector<2x32xf32>
    %cst_120 = arith.constant dense<0.000000e+00> : vector<2x32xf32>
    %401 = tpu.matmul %400, %207, %cst_120 {dimension_numbers = #tpu.dot_dimension_numbers<[1], [0], [0], [1], [0, 0, 1, 1], [], []>} : vector<2x32xf32>, vector<32x32xf32>, vector<2x32xf32> -> vector<2x32xf32>
    %402 = vector.broadcast %208 : vector<1x32xf32> to vector<2x32xf32>
    %403 = arith.addf %401, %402 : vector<2x32xf32>
    %404 = vector.shape_cast %403 : vector<2x32xf32> to vector<2x1x32xf32>
    %405 = vector.broadcast %404 : vector<2x1x32xf32> to vector<2x4x32xf32>
    %406 = arith.addf %380, %405 : vector<2x4x32xf32>
    %407 = math.tanh %406 : vector<2x4x32xf32>
    %408 = vector.broadcast %210 : vector<1x1x32xf32> to vector<2x4x32xf32>
    %409 = arith.mulf %407, %408 : vector<2x4x32xf32>
    %cst_121 = arith.constant dense<0.000000e+00> : vector<2x4xf32>
    %410 = vector.multi_reduction <add>, %409, %cst_121 [2] : vector<2x4x32xf32> to vector<2x4xf32>
    %411 = vector.broadcast %404 : vector<2x1x32xf32> to vector<2x8x32xf32>
    %412 = arith.addf %204, %411 : vector<2x8x32xf32>
    %413 = math.tanh %412 : vector<2x8x32xf32>
    %414 = vector.broadcast %210 : vector<1x1x32xf32> to vector<2x8x32xf32>
    %415 = arith.mulf %413, %414 : vector<2x8x32xf32>
    %cst_122 = arith.constant dense<0.000000e+00> : vector<2x8xf32>
    %416 = vector.multi_reduction <add>, %415, %cst_122 [2] : vector<2x8x32xf32> to vector<2x8xf32>
    %417 = tpu.concatenate %410, %416 in 1 : vector<2x4xf32>, vector<2x8xf32> -> vector<2x12xf32>
    %418 = vector.broadcast %212 : f32 to vector<2x12xf32>
    %419 = arith.addf %417, %418 : vector<2x12xf32>
    %cst_123 = arith.constant dense<0xFF800000> : vector<2xf32>
    %420 = vector.multi_reduction <maximumf>, %419, %cst_123 [1] : vector<2x12xf32> to vector<2xf32>
    %421 = vector.shape_cast %420 : vector<2xf32> to vector<2x1xf32>
    %422 = vector.broadcast %421 : vector<2x1xf32> to vector<2x12xf32>
    %423 = arith.subf %419, %422 : vector<2x12xf32>
    %424 = math.exp %423 : vector<2x12xf32>
    %cst_124 = arith.constant dense<0.000000e+00> : vector<2xf32>
    %425 = vector.multi_reduction <add>, %424, %cst_124 [1] : vector<2x12xf32> to vector<2xf32>
    %426 = vector.shape_cast %425 : vector<2xf32> to vector<2x1xf32>
    %427 = math.log %426 : vector<2x1xf32>
    %428 = arith.addf %421, %427 : vector<2x1xf32>
    %429 = vector.broadcast %428 : vector<2x1xf32> to vector<2x12xf32>
    %430 = arith.subf %419, %429 : vector<2x12xf32>
    %cst_125 = arith.constant dense<0xFF800000> : vector<2xf32>
    %431 = vector.multi_reduction <maximumf>, %430, %cst_125 [1] : vector<2x12xf32> to vector<2xf32>
    %432 = vector.shape_cast %431 : vector<2xf32> to vector<2x1xf32>
    %433 = vector.broadcast %432 : vector<2x1xf32> to vector<2x12xf32>
    %434 = arith.cmpf oeq, %430, %433 : vector<2x12xf32>
    %c12_i32_126 = arith.constant 12 : i32
    %435 = vector.broadcast %c12_i32_126 : i32 to vector<2x12xi32>
    %436 = arith.select %434, %216, %435 : vector<2x12xi1>, vector<2x12xi32>
    %cst_127 = arith.constant dense<2147483647> : vector<2xi32>
    %437 = vector.multi_reduction <minsi>, %436, %cst_127 [1] : vector<2x12xi32> to vector<2xi32>
    %438 = vector.shape_cast %437 : vector<2xi32> to vector<2x1xi32>
    %439 = vector.broadcast %438 : vector<2x1xi32> to vector<2x12xi32>
    %440 = arith.cmpi eq, %216, %439 : vector<2x12xi32>
    %441 = arith.extui %440 : vector<2x12xi1> to vector<2x12xi32>
    %442 = arith.sitofp %441 : vector<2x12xi32> to vector<2x12xf32>
    %443 = vector.extract_strided_slice %442 {offsets = [0, 0], sizes = [2, 4], strides = [1, 1]} : vector<2x12xf32> to vector<2x4xf32>
    %444 = vector.shape_cast %443 : vector<2x4xf32> to vector<2x4x1xf32>
    %445 = vector.broadcast %444 : vector<2x4x1xf32> to vector<2x4x32xf32>
    %446 = arith.mulf %445, %374 : vector<2x4x32xf32>
    %cst_128 = arith.constant dense<0.000000e+00> : vector<2x32xf32>
    %447 = vector.multi_reduction <add>, %446, %cst_128 [1] : vector<2x4x32xf32> to vector<2x32xf32>
    %448 = vector.extract_strided_slice %442 {offsets = [0, 4], sizes = [2, 8], strides = [1, 1]} : vector<2x12xf32> to vector<2x8xf32>
    %449 = vector.shape_cast %448 : vector<2x8xf32> to vector<2x8x1xf32>
    %450 = vector.broadcast %449 : vector<2x8x1xf32> to vector<2x8x32xf32>
    %451 = arith.mulf %450, %83 : vector<2x8x32xf32>
    %cst_129 = arith.constant dense<0.000000e+00> : vector<2x32xf32>
    %452 = vector.multi_reduction <add>, %451, %cst_129 [1] : vector<2x8x32xf32> to vector<2x32xf32>
    %453 = arith.addf %447, %452 : vector<2x32xf32>
    %cst_130 = arith.constant dense<0.000000e+00> : vector<2x128xf32>
    %454 = tpu.matmul %453, %205, %cst_130 {dimension_numbers = #tpu.dot_dimension_numbers<[1], [0], [0], [1], [0, 0, 1, 1], [], []>} : vector<2x32xf32>, vector<32x128xf32>, vector<2x128xf32> -> vector<2x128xf32>
    %455 = vector.broadcast %206 : vector<1x128xf32> to vector<2x128xf32>
    %456 = arith.addf %454, %455 : vector<2x128xf32>
    %457 = vector.extract_strided_slice %456 {offsets = [0, 0], sizes = [2, 32], strides = [1, 1]} : vector<2x128xf32> to vector<2x32xf32>
    %458 = arith.negf %457 : vector<2x32xf32>
    %459 = math.exp %458 : vector<2x32xf32>
    %cst_131 = arith.constant 1.000000e+00 : f32
    %460 = vector.broadcast %cst_131 : f32 to vector<2x32xf32>
    %461 = arith.addf %460, %459 : vector<2x32xf32>
    %462 = arith.divf %460, %461 : vector<2x32xf32>
    %463 = vector.extract_strided_slice %456 {offsets = [0, 64], sizes = [2, 32], strides = [1, 1]} : vector<2x128xf32> to vector<2x32xf32>
    %464 = math.tanh %463 : vector<2x32xf32>
    %465 = vector.extract_strided_slice %456 {offsets = [0, 96], sizes = [2, 32], strides = [1, 1]} : vector<2x128xf32> to vector<2x32xf32>
    %466 = arith.negf %465 : vector<2x32xf32>
    %467 = math.exp %466 : vector<2x32xf32>
    %cst_132 = arith.constant 1.000000e+00 : f32
    %468 = vector.broadcast %cst_132 : f32 to vector<2x32xf32>
    %469 = arith.addf %468, %467 : vector<2x32xf32>
    %470 = arith.divf %468, %469 : vector<2x32xf32>
    %471 = arith.mulf %462, %464 : vector<2x32xf32>
    %472 = math.tanh %471 : vector<2x32xf32>
    %473 = arith.mulf %470, %472 : vector<2x32xf32>
    %cst_133 = arith.constant dense<0.000000e+00> : vector<2x32xf32>
    %474 = tpu.matmul %473, %207, %cst_133 {dimension_numbers = #tpu.dot_dimension_numbers<[1], [0], [0], [1], [0, 0, 1, 1], [], []>} : vector<2x32xf32>, vector<32x32xf32>, vector<2x32xf32> -> vector<2x32xf32>
    %475 = vector.broadcast %208 : vector<1x32xf32> to vector<2x32xf32>
    %476 = arith.addf %474, %475 : vector<2x32xf32>
    %477 = vector.shape_cast %476 : vector<2x32xf32> to vector<2x1x32xf32>
    %478 = vector.broadcast %477 : vector<2x1x32xf32> to vector<2x4x32xf32>
    %479 = arith.addf %380, %478 : vector<2x4x32xf32>
    %480 = math.tanh %479 : vector<2x4x32xf32>
    %481 = vector.broadcast %210 : vector<1x1x32xf32> to vector<2x4x32xf32>
    %482 = arith.mulf %480, %481 : vector<2x4x32xf32>
    %cst_134 = arith.constant dense<0.000000e+00> : vector<2x4xf32>
    %483 = vector.multi_reduction <add>, %482, %cst_134 [2] : vector<2x4x32xf32> to vector<2x4xf32>
    %484 = vector.broadcast %477 : vector<2x1x32xf32> to vector<2x8x32xf32>
    %485 = arith.addf %204, %484 : vector<2x8x32xf32>
    %486 = math.tanh %485 : vector<2x8x32xf32>
    %487 = vector.broadcast %210 : vector<1x1x32xf32> to vector<2x8x32xf32>
    %488 = arith.mulf %486, %487 : vector<2x8x32xf32>
    %cst_135 = arith.constant dense<0.000000e+00> : vector<2x8xf32>
    %489 = vector.multi_reduction <add>, %488, %cst_135 [2] : vector<2x8x32xf32> to vector<2x8xf32>
    %490 = tpu.concatenate %483, %489 in 1 : vector<2x4xf32>, vector<2x8xf32> -> vector<2x12xf32>
    %491 = vector.broadcast %212 : f32 to vector<2x12xf32>
    %492 = arith.addf %490, %491 : vector<2x12xf32>
    %cst_136 = arith.constant dense<0xFF800000> : vector<2xf32>
    %493 = vector.multi_reduction <maximumf>, %492, %cst_136 [1] : vector<2x12xf32> to vector<2xf32>
    %494 = vector.shape_cast %493 : vector<2xf32> to vector<2x1xf32>
    %495 = vector.broadcast %494 : vector<2x1xf32> to vector<2x12xf32>
    %496 = arith.subf %492, %495 : vector<2x12xf32>
    %497 = math.exp %496 : vector<2x12xf32>
    %cst_137 = arith.constant dense<0.000000e+00> : vector<2xf32>
    %498 = vector.multi_reduction <add>, %497, %cst_137 [1] : vector<2x12xf32> to vector<2xf32>
    %499 = vector.shape_cast %498 : vector<2xf32> to vector<2x1xf32>
    %500 = math.log %499 : vector<2x1xf32>
    %501 = arith.addf %494, %500 : vector<2x1xf32>
    %502 = vector.broadcast %501 : vector<2x1xf32> to vector<2x12xf32>
    %503 = arith.subf %492, %502 : vector<2x12xf32>
    %cst_138 = arith.constant dense<0.000000e+00> : vector<2x6xf32>
    %504 = tpu.matmul %176, %213, %cst_138 {dimension_numbers = #tpu.dot_dimension_numbers<[1], [0], [0], [1], [0, 0, 1, 1], [], []>} : vector<2x32xf32>, vector<32x6xf32>, vector<2x6xf32> -> vector<2x6xf32>
    %505 = vector.broadcast %214 : vector<1x6xf32> to vector<2x6xf32>
    %506 = arith.addf %504, %505 : vector<2x6xf32>
    %cst_139 = arith.constant dense<0xFF800000> : vector<2xf32>
    %507 = vector.multi_reduction <maximumf>, %506, %cst_139 [1] : vector<2x6xf32> to vector<2xf32>
    %508 = vector.shape_cast %507 : vector<2xf32> to vector<2x1xf32>
    %509 = vector.broadcast %508 : vector<2x1xf32> to vector<2x6xf32>
    %510 = arith.subf %506, %509 : vector<2x6xf32>
    %511 = math.exp %510 : vector<2x6xf32>
    %cst_140 = arith.constant dense<0.000000e+00> : vector<2xf32>
    %512 = vector.multi_reduction <add>, %511, %cst_140 [1] : vector<2x6xf32> to vector<2xf32>
    %513 = vector.shape_cast %512 : vector<2xf32> to vector<2x1xf32>
    %514 = vector.broadcast %513 : vector<2x1xf32> to vector<2x6xf32>
    %515 = arith.divf %511, %514 : vector<2x6xf32>
    %516 = vector.extract_strided_slice %104 {offsets = [2, 0], sizes = [2, 32], strides = [1, 1]} : vector<4x32xf32> to vector<2x32xf32>
    %517 = tpu.concatenate %516, %176, %515, %430, %503 in 1 : vector<2x32xf32>, vector<2x32xf32>, vector<2x6xf32>, vector<2x12xf32>, vector<2x12xf32> -> vector<2x94xf32>
    %c0_141 = arith.constant 0 : index
    %c1 = arith.constant 1 : index
    %c0_142 = arith.constant 0 : index
    %518 = vector.load %arg26[%c0_141, %c1, %c0_142] : memref<2x2x94xf32, #tpu.memory_space<vmem>>, vector<2x1x94xf32>
    %519 = vector.shape_cast %518 : vector<2x1x94xf32> to vector<2x94xf32>
    %520 = vector.shape_cast %517 : vector<2x94xf32> to vector<2x1x94xf32>
    tpu.vector_store %arg26[%c0_141, %c1, %c0_142], %520 {strides = array<i32>} : memref<2x2x94xf32, #tpu.memory_space<vmem>>, vector<2x1x94xf32>,
    return
  }
}

</mosaic_0001>

<llo_original>
// kernel: bert_model_forward.1
$region0: #{bert_model_forward.1}
  #allocation0 [shape = 'u32[]', space=smem, size = 0x4, offset = 0x4, fixed_abs, tag = 'smem constant byte address 0x4 - core index']
  #allocation1 [shape = 'u32[144,128]{1,0:T(1,128)}', space=vmem, size = 0x12000, scoped, tag = 'internal scratch']
  #allocation2 [shape = 'f32[1,1]{1,0:T(1,128)S(1)}', space=vmem, size = 0x200, scoped, tag = 'scoped memory for bert_model_forward.1']
  #allocation3 [shape = 'f32[1,1]{1,0:T(1,128)S(1)}', space=vmem, size = 0x200, scoped, tag = 'scoped memory for bert_model_forward.1']
  %s0 = inlined_call_operand.vmem [shape: s32[32,1], index: 0, kind: input, shape index: {}]
  %s1 = inlined_call_operand.vmem [shape: s32[4,1], index: 1, kind: input, shape index: {}]
  %s2 = inlined_call_operand.vmem [shape: f32[8,8], index: 2, kind: input, shape index: {}]
  %s3 = inlined_call_operand.vmem [shape: f32[50,32], index: 3, kind: input, shape index: {}]
  %s4 = inlined_call_operand.vmem [shape: f32[32,32], index: 4, kind: input, shape index: {}]
  %s5 = inlined_call_operand.vmem [shape: f32[1,32], index: 5, kind: input, shape index: {}]
  %s6 = inlined_call_operand.vmem [shape: f32[8,32], index: 6, kind: input, shape index: {}]
  %s7 = inlined_call_operand.vmem [shape: f32[4,32], index: 7, kind: input, shape index: {}]
  %s8 = inlined_call_operand.vmem [shape: f32[6,32], index: 8, kind: input, shape index: {}]
  %s9 = inlined_call_operand.vmem [shape: f32[1,7,1], index: 9, kind: input, shape index: {}]
  %s10 = inlined_call_operand.<no memory space> [shape: f32[1,1], index: 10, kind: input, shape index: {}]
  %s11 = inlined_call_operand.vmem [shape: f32[32,128], index: 11, kind: input, shape index: {}]
  %s12 = inlined_call_operand.vmem [shape: f32[32,128], index: 12, kind: input, shape index: {}]
  %s13 = inlined_call_operand.vmem [shape: f32[1,128], index: 13, kind: input, shape index: {}]
  %s14 = inlined_call_operand.vmem [shape: f32[1,128], index: 14, kind: input, shape index: {}]
  %s15 = inlined_call_operand.vmem [shape: f32[32,6], index: 15, kind: input, shape index: {}]
  %s16 = inlined_call_operand.vmem [shape: f32[1,6], index: 16, kind: input, shape index: {}]
  %s17 = inlined_call_operand.vmem [shape: f32[32,128], index: 17, kind: input, shape index: {}]
  %s18 = inlined_call_operand.vmem [shape: f32[1,128], index: 18, kind: input, shape index: {}]
  %s19 = inlined_call_operand.vmem [shape: f32[32,32], index: 19, kind: input, shape index: {}]
  %s20 = inlined_call_operand.vmem [shape: f32[1,32], index: 20, kind: input, shape index: {}]
  %s21 = inlined_call_operand.vmem [shape: f32[32,32], index: 21, kind: input, shape index: {}]
  %s22 = inlined_call_operand.vmem [shape: f32[1,32], index: 22, kind: input, shape index: {}]
  %s23 = inlined_call_operand.vmem [shape: f32[1,32], index: 23, kind: input, shape index: {}]
  %s24 = inlined_call_operand.<no memory space> [shape: f32[1,1], index: 24, kind: input, shape index: {}]
  %s25 = inlined_call_operand.vmem [shape: f32[2,8,24], index: 25, kind: output, shape index: {0}]
  %s26 = inlined_call_operand.vmem [shape: f32[2,2,94], index: 26, kind: output, shape index: {1}]
  %27 = xla_tuple %s25, %s26
  %s28 = sld [smem:[#allocation0]]
  $region118: #{bert_model_forward.1} parent=0
    _
  %s30 = ssub.s32 1, %s28
  %s31 = scalar_select 0, %s30, %s28
  %v32 = vstv %s10
  %33 = vst [vmem:[#allocation2] sm:$0x1] %v32
  %v34 = vstv %s24
  %35 = vst [vmem:[#allocation3] sm:$0x1] %v34
  // Predicated region
  $region2: #{bert_model_forward.1} parent=0 // pred_check
    _
  $region3: #{bert_model_forward.1} parent=0 // pred_check_branch
    %37 = sbr.rel (0) target = $region5
  $region4: #{bert_model_forward.1} parent=0 // pred_region
    _
  $region5: #{bert_model_forward.1} parent=0 // pred_fallthru
    _
  // Predicated region
  $region6: #{bert_model_forward.1} parent=0 // pred_check
    _
  $region7: #{bert_model_forward.1} parent=0 // pred_check_branch
    %39 = sbr.rel (0) target = $region9
  $region8: #{bert_model_forward.1} parent=0 // pred_region
    _
  $region9: #{bert_model_forward.1} parent=0 // pred_fallthru
    _
  // Predicated region
  $region10: #{bert_model_forward.1} parent=0 // pred_check
    _
  $region11: #{bert_model_forward.1} parent=0 // pred_check_branch
    %41 = sbr.rel (0) target = $region13
  $region12: #{bert_model_forward.1} parent=0 // pred_region
    _
  $region13: #{bert_model_forward.1} parent=0 // pred_fallthru
    _
  // Predicated region
  $region14: #{bert_model_forward.1} parent=0 // pred_check
    _
  $region15: #{bert_model_forward.1} parent=0 // pred_check_branch
    %43 = sbr.rel (0) target = $region17
  $region16: #{bert_model_forward.1} parent=0 // pred_region
    _
  $region17: #{bert_model_forward.1} parent=0 // pred_fallthru
    _
  // Predicated region
  $region18: #{bert_model_forward.1} parent=0 // pred_check
    _
  $region19: #{bert_model_forward.1} parent=0 // pred_check_branch
    %45 = sbr.rel (0) target = $region21
  $region20: #{bert_model_forward.1} parent=0 // pred_region
    _
  $region21: #{bert_model_forward.1} parent=0 // pred_fallthru
    _
  // Predicated region
  $region22: #{bert_model_forward.1} parent=0 // pred_check
    _
  $region23: #{bert_model_forward.1} parent=0 // pred_check_branch
    %47 = sbr.rel (0) target = $region25
  $region24: #{bert_model_forward.1} parent=0 // pred_region
    _
  $region25: #{bert_model_forward.1} parent=0 // pred_fallthru
    _
  // Predicated region
  $region26: #{bert_model_forward.1} parent=0 // pred_check
    _
  $region27: #{bert_model_forward.1} parent=0 // pred_check_branch
    %49 = sbr.rel (0) target = $region29
  $region28: #{bert_model_forward.1} parent=0 // pred_region
    _
  $region29: #{bert_model_forward.1} parent=0 // pred_fallthru
    _
  // Predicated region
  $region30: #{bert_model_forward.1} parent=0 // pred_check
    _
  $region31: #{bert_model_forward.1} parent=0 // pred_check_branch
    %51 = sbr.rel (0) target = $region33
  $region32: #{bert_model_forward.1} parent=0 // pred_region
    _
  $region33: #{bert_model_forward.1} parent=0 // pred_fallthru
    _
  // Predicated region
  $region34: #{bert_model_forward.1} parent=0 // pred_check
    _
  $region35: #{bert_model_forward.1} parent=0 // pred_check_branch
    %53 = sbr.rel (0) target = $region37
  $region36: #{bert_model_forward.1} parent=0 // pred_region
    _
  $region37: #{bert_model_forward.1} parent=0 // pred_fallthru
    _
  // Predicated region
  $region38: #{bert_model_forward.1} parent=0 // pred_check
    _
  $region39: #{bert_model_forward.1} parent=0 // pred_check_branch
    %55 = sbr.rel (0) target = $region41
  $region40: #{bert_model_forward.1} parent=0 // pred_region
    _
  $region41: #{bert_model_forward.1} parent=0 // pred_fallthru
    _
  // Predicated region
  $region42: #{bert_model_forward.1} parent=0 // pred_check
    _
  $region43: #{bert_model_forward.1} parent=0 // pred_check_branch
    %57 = sbr.rel (0) target = $region45
  $region44: #{bert_model_forward.1} parent=0 // pred_region
    _
  $region45: #{bert_model_forward.1} parent=0 // pred_fallthru
    _
  // Predicated region
  $region46: #{bert_model_forward.1} parent=0 // pred_check
    _
  $region47: #{bert_model_forward.1} parent=0 // pred_check_branch
    %59 = sbr.rel (0) target = $region49
  $region48: #{bert_model_forward.1} parent=0 // pred_region
    _
  $region49: #{bert_model_forward.1} parent=0 // pred_fallthru
    _
  // Predicated region
  $region50: #{bert_model_forward.1} parent=0 // pred_check
    _
  $region51: #{bert_model_forward.1} parent=0 // pred_check_branch
    %61 = sbr.rel (0) target = $region53
  $region52: #{bert_model_forward.1} parent=0 // pred_region
    _
  $region53: #{bert_model_forward.1} parent=0 // pred_fallthru
    _
  // Predicated region
  $region54: #{bert_model_forward.1} parent=0 // pred_check
    _
  $region55: #{bert_model_forward.1} parent=0 // pred_check_branch
    %63 = sbr.rel (0) target = $region57
  $region56: #{bert_model_forward.1} parent=0 // pred_region
    _
  $region57: #{bert_model_forward.1} parent=0 // pred_fallthru
    _
  // Predicated region
  $region58: #{bert_model_forward.1} parent=0 // pred_check
    _
  $region59: #{bert_model_forward.1} parent=0 // pred_check_branch
    %65 = sbr.rel (0) target = $region61
  $region60: #{bert_model_forward.1} parent=0 // pred_region
    _
  $region61: #{bert_model_forward.1} parent=0 // pred_fallthru
    _
  // Predicated region
  $region62: #{bert_model_forward.1} parent=0 // pred_check
    _
  $region63: #{bert_model_forward.1} parent=0 // pred_check_branch
    %67 = sbr.rel (0) target = $region65
  $region64: #{bert_model_forward.1} parent=0 // pred_region
    _
  $region65: #{bert_model_forward.1} parent=0 // pred_fallthru
    _
  // Predicated region
  $region66: #{bert_model_forward.1} parent=0 // pred_check
    _
  $region67: #{bert_model_forward.1} parent=0 // pred_check_branch
    %69 = sbr.rel (0) target = $region69
  $region68: #{bert_model_forward.1} parent=0 // pred_region
    _
  $region69: #{bert_model_forward.1} parent=0 // pred_fallthru
    _
  // Predicated region
  $region70: #{bert_model_forward.1} parent=0 // pred_check
    _
  $region71: #{bert_model_forward.1} parent=0 // pred_check_branch
    %71 = sbr.rel (0) target = $region73
  $region72: #{bert_model_forward.1} parent=0 // pred_region
    _
  $region73: #{bert_model_forward.1} parent=0 // pred_fallthru
    _
  // Predicated region
  $region74: #{bert_model_forward.1} parent=0 // pred_check
    _
  $region75: #{bert_model_forward.1} parent=0 // pred_check_branch
    %73 = sbr.rel (0) target = $region77
  $region76: #{bert_model_forward.1} parent=0 // pred_region
    _
  $region77: #{bert_model_forward.1} parent=0 // pred_fallthru
    _
  // Predicated region
  $region78: #{bert_model_forward.1} parent=0 // pred_check
    _
  $region79: #{bert_model_forward.1} parent=0 // pred_check_branch
    %75 = sbr.rel (0) target = $region81
  $region80: #{bert_model_forward.1} parent=0 // pred_region
    _
  $region81: #{bert_model_forward.1} parent=0 // pred_fallthru
    _
  // Predicated region
  $region82: #{bert_model_forward.1} parent=0 // pred_check
    _
  $region83: #{bert_model_forward.1} parent=0 // pred_check_branch
    %77 = sbr.rel (0) target = $region85
  $region84: #{bert_model_forward.1} parent=0 // pred_region
    _
  $region85: #{bert_model_forward.1} parent=0 // pred_fallthru
    _
  // Predicated region
  $region86: #{bert_model_forward.1} parent=0 // pred_check
    _
  $region87: #{bert_model_forward.1} parent=0 // pred_check_branch
    %79 = sbr.rel (0) target = $region89
  $region88: #{bert_model_forward.1} parent=0 // pred_region
    _
  $region89: #{bert_model_forward.1} parent=0 // pred_fallthru
    _
  // Predicated region
  $region90: #{bert_model_forward.1} parent=0 // pred_check
    _
  $region91: #{bert_model_forward.1} parent=0 // pred_check_branch
    %81 = sbr.rel (0) target = $region93
  $region92: #{bert_model_forward.1} parent=0 // pred_region
    _
  $region93: #{bert_model_forward.1} parent=0 // pred_fallthru
    _
  // Predicated region
  $region94: #{bert_model_forward.1} parent=0 // pred_check
    _
  $region95: #{bert_model_forward.1} parent=0 // pred_check_branch
    %83 = sbr.rel (0) target = $region97
  $region96: #{bert_model_forward.1} parent=0 // pred_region
    _
  $region97: #{bert_model_forward.1} parent=0 // pred_fallthru
    _
  // Predicated region
  $region98: #{bert_model_forward.1} parent=0 // pred_check
    _
  $region99: #{bert_model_forward.1} parent=0 // pred_check_branch
    %85 = sbr.rel (0) target = $region101
  $region100: #{bert_model_forward.1} parent=0 // pred_region
    _
  $region101: #{bert_model_forward.1} parent=0 // pred_fallthru
    _
  %v86 = vld [vmem:[%s0] sm:$0xff]
  %v87 = vld [vmem:[%s0 + $0x8] sm:$0xff]
  %v88 = vld [vmem:[%s0 + $0x10] sm:$0xff]
  %v89 = vld [vmem:[%s0 + $0x18] sm:$0xff]
  %v90 = vlaneseq
  %v91 = vand.u32 %v90, 127
  %92 = vset.pattern.permute.xlu0 0
  %93 = vperm.xlu0 %92, %v86
  %v94 = vpop.permute.xlu0 %93
  %95 = vset.pattern.permute.xlu0 0
  %96 = vperm.xlu0 %95, %v87
  %v97 = vpop.permute.xlu0 %96
  %98 = vset.pattern.permute.xlu0 0
  %99 = vperm.xlu0 %98, %v88
  %v100 = vpop.permute.xlu0 %99
  %101 = vset.pattern.permute.xlu0 0
  %102 = vperm.xlu0 %101, %v89
  %v103 = vpop.permute.xlu0 %102
  %vm104 = vcmp.eq.s32.totalorder %v91, %v94
  %vm105 = vcmp.eq.s32.totalorder %v91, %v97
  %vm106 = vcmp.eq.s32.totalorder %v91, %v100
  %vm107 = vcmp.eq.s32.totalorder %v91, %v103
  %v108 = vsel %vm104, 1, 0
  %v109 = vsel %vm105, 1, 0
  %v110 = vsel %vm106, 1, 0
  %v111 = vsel %vm107, 1, 0
  %v112 = vcvt.s32.f32 %v108
  %v113 = vcvt.s32.f32 %v109
  %v114 = vcvt.s32.f32 %v110
  %v115 = vcvt.s32.f32 %v111
  %v116 = vld [vmem:[%s3] sm:$0xff]
  %v117 = vld [vmem:[%s3 + $0x8] sm:$0xff]
  %v118 = vld [vmem:[%s3 + $0x10] sm:$0xff]
  %v119 = vld [vmem:[%s3 + $0x18] sm:$0xff]
  %v120 = vld [vmem:[%s3 + $0x20] sm:$0xff]
  %v121 = vld [vmem:[%s3 + $0x28] sm:$0xff]
  %v122 = vld [vmem:[%s3 + $0x30] sm:$0x3]
  %vm123 = vcmask 408576
  %v125 = vsel %vm123, %v112, 0
  %v128 = vsel %vm123, %v113, 0
  %v131 = vsel %vm123, %v114, 0
  %v134 = vsel %vm123, %v115, 0
  %vm136 = vcmask 1041408
  %v138 = vsel %vm136, %v122, 0
  %140 = vmatprep.subr.mxu0 0.0
  %141 = vmatpush1.msra.mxu0 %v116
  %142 = vmatprep.subr.mxu0 0.0
  %143 = vmatpush1.msra.mxu0 %v117
  %144 = vmatprep.subr.mxu0 0.0
  %145 = vmatpush1.msra.mxu0 %v118
  %146 = vmatprep.subr.mxu0 0.0
  %147 = vmatpush1.msra.mxu0 %v119
  %148 = vmatprep.subr.mxu0 0.0
  %149 = vmatpush1.msra.mxu0 %v120
  %150 = vmatprep.subr.mxu0 0.0
  %151 = vmatpush1.msra.mxu0 %v121
  %152 = vmatprep.subr.mxu0 0.0
  %153 = vmatpush1.msra.mxu0 %v138
  %154 = vmatprep.subr.mxu0 0.0
  %155 = vmatpush1.msra.mxu0 0.0
  %156 = vmatprep.subr.mxu0 0.0
  %157 = vmatpush1.msra.mxu0 0.0
  %158 = vmatprep.subr.mxu0 0.0
  %159 = vmatpush1.msra.mxu0 0.0
  %160 = vmatprep.subr.mxu0 0.0
  %161 = vmatpush1.msra.mxu0 0.0
  %162 = vmatprep.subr.mxu0 0.0
  %163 = vmatpush1.msra.mxu0 0.0
  %164 = vmatprep.subr.mxu0 0.0
  %165 = vmatpush1.msra.mxu0 0.0
  %166 = vmatprep.subr.mxu0 0.0
  %167 = vmatpush1.msra.mxu0 0.0
  %168 = vmatprep.subr.mxu0 0.0
  %169 = vmatpush1.msra.mxu0 0.0
  %170 = vmatprep.subr.mxu0 0.0
  %171 = vmatpush1.msra.mxu0 0.0
  %172 = vmatprep.subr.mxu0 0.0
  %173 = vmatpush1.msra.mxu0 0.0
  %174 = vmatprep.subr.mxu0 0.0
  %175 = vmatpush1.msra.mxu0 0.0
  %176 = vmatprep.subr.mxu0 0.0
  %177 = vmatpush1.msra.mxu0 0.0
  %178 = vmatprep.subr.mxu0 0.0
  %179 = vmatpush1.msra.mxu0 0.0
  %180 = vmatprep.subr.mxu0 0.0
  %181 = vmatpush1.msra.mxu0 0.0
  %182 = vmatprep.subr.mxu0 0.0
  %183 = vmatpush1.msra.mxu0 0.0
  %184 = vmatprep.subr.mxu0 0.0
  %185 = vmatpush1.msra.mxu0 0.0
  %186 = vmatprep.subr.mxu0 0.0
  %187 = vmatpush1.msra.mxu0 0.0
  %188 = vmatprep.subr.mxu0 0.0
  %189 = vmatpush1.msra.mxu0 0.0
  %190 = vmatprep.subr.mxu0 0.0
  %191 = vmatpush1.msra.mxu0 0.0
  %192 = vmatprep.subr.mxu0 0.0
  %193 = vmatpush1.msra.mxu0 0.0
  %194 = vmatprep.subr.mxu0 0.0
  %195 = vmatpush1.msra.mxu0 0.0
  %196 = vmatprep.subr.mxu0 0.0
  %197 = vmatpush1.msra.mxu0 0.0
  %198 = vmatprep.subr.mxu0 0.0
  %199 = vmatpush1.msra.mxu0 0.0
  %200 = vmatprep.subr.mxu0 0.0
  %201 = vmatpush1.msra.mxu0 0.0
  %202 = vmatprep.subr.mxu0 0.0
  %203 = vmatpush1.msra.mxu0 0.0
  %204 = vmatprep.mubr.f32.mxu0 0.0
  %205 = vmatmul.mubr.f32.gmra.mrb[0].mxu0 %v125
  %v206 = vpop.f32.mrb[0].mxu0
  %v207 = vadd.f32 0.0, %v206
  %v208 = vpop.f32.mrb[0].mxu0
  %209 = vmatprep.mubr.f32.mxu0 0.0
  %210 = vmatmul.mubr.f32.gmra.mrb[0].mxu0 %v128
  %v211 = vpop.f32.mrb[0].mxu0
  %v212 = vadd.f32 0.0, %v211
  %v213 = vpop.f32.mrb[0].mxu0
  %214 = vmatprep.mubr.f32.mxu0 0.0
  %215 = vmatmul.mubr.f32.gmra.mrb[0].mxu0 %v131
  %v216 = vpop.f32.mrb[0].mxu0
  %v217 = vadd.f32 0.0, %v216
  %v218 = vpop.f32.mrb[0].mxu0
  %219 = vmatprep.mubr.f32.mxu0 0.0
  %220 = vmatmul.mubr.f32.gmra.mrb[0].mxu0 %v134
  %v221 = vpop.f32.mrb[0].mxu0
  %v222 = vadd.f32 0.0, %v221
  %v223 = vpop.f32.mrb[0].mxu0
  %224 = vdwg.mxu0
  %v225 = vld [vmem:[%s4] sm:$0xff]
  %v226 = vld [vmem:[%s4 + $0x8] sm:$0xff]
  %v227 = vld [vmem:[%s4 + $0x10] sm:$0xff]
  %v228 = vld [vmem:[%s4 + $0x18] sm:$0xff]
  %v229 = vld [vmem:[%s5] sm:$0x1]
  %v231 = vlaneseq
  %v232 = vshrl.u32 %v231, 7
  %v233 = vsub.s32 0, %v232
  %v234 = vrot.slane %v229, %v233
  %vm236 = vcmask 261120
  %v238 = vsel %vm236, %v207, 0
  %v241 = vsel %vm236, %v212, 0
  %v244 = vsel %vm236, %v217, 0
  %v247 = vsel %vm236, %v222, 0
  %249 = vmatprep.subr.mxu0 0.0
  %250 = vmatpush1.msra.mxu0 %v225
  %251 = vmatprep.subr.mxu0 0.0
  %252 = vmatpush1.msra.mxu0 %v226
  %253 = vmatprep.subr.mxu0 0.0
  %254 = vmatpush1.msra.mxu0 %v227
  %255 = vmatprep.subr.mxu0 0.0
  %256 = vmatpush1.msra.mxu0 %v228
  %257 = vmatprep.subr.mxu0 0.0
  %258 = vmatpush1.msra.mxu0 0.0
  %259 = vmatprep.subr.mxu0 0.0
  %260 = vmatpush1.msra.mxu0 0.0
  %261 = vmatprep.subr.mxu0 0.0
  %262 = vmatpush1.msra.mxu0 0.0
  %263 = vmatprep.subr.mxu0 0.0
  %264 = vmatpush1.msra.mxu0 0.0
  %265 = vmatprep.subr.mxu0 0.0
  %266 = vmatpush1.msra.mxu0 0.0
  %267 = vmatprep.subr.mxu0 0.0
  %268 = vmatpush1.msra.mxu0 0.0
  %269 = vmatprep.subr.mxu0 0.0
  %270 = vmatpush1.msra.mxu0 0.0
  %271 = vmatprep.subr.mxu0 0.0
  %272 = vmatpush1.msra.mxu0 0.0
  %273 = vmatprep.subr.mxu0 0.0
  %274 = vmatpush1.msra.mxu0 0.0
  %275 = vmatprep.subr.mxu0 0.0
  %276 = vmatpush1.msra.mxu0 0.0
  %277 = vmatprep.subr.mxu0 0.0
  %278 = vmatpush1.msra.mxu0 0.0
  %279 = vmatprep.subr.mxu0 0.0
  %280 = vmatpush1.msra.mxu0 0.0
  %281 = vmatprep.subr.mxu0 0.0
  %282 = vmatpush1.msra.mxu0 0.0
  %283 = vmatprep.subr.mxu0 0.0
  %284 = vmatpush1.msra.mxu0 0.0
  %285 = vmatprep.subr.mxu0 0.0
  %286 = vmatpush1.msra.mxu0 0.0
  %287 = vmatprep.subr.mxu0 0.0
  %288 = vmatpush1.msra.mxu0 0.0
  %289 = vmatprep.subr.mxu0 0.0
  %290 = vmatpush1.msra.mxu0 0.0
  %291 = vmatprep.subr.mxu0 0.0
  %292 = vmatpush1.msra.mxu0 0.0
  %293 = vmatprep.subr.mxu0 0.0
  %294 = vmatpush1.msra.mxu0 0.0
  %295 = vmatprep.subr.mxu0 0.0
  %296 = vmatpush1.msra.mxu0 0.0
  %297 = vmatprep.subr.mxu0 0.0
  %298 = vmatpush1.msra.mxu0 0.0
  %299 = vmatprep.subr.mxu0 0.0
  %300 = vmatpush1.msra.mxu0 0.0
  %301 = vmatprep.subr.mxu0 0.0
  %302 = vmatpush1.msra.mxu0 0.0
  %303 = vmatprep.subr.mxu0 0.0
  %304 = vmatpush1.msra.mxu0 0.0
  %305 = vmatprep.subr.mxu0 0.0
  %306 = vmatpush1.msra.mxu0 0.0
  %307 = vmatprep.subr.mxu0 0.0
  %308 = vmatpush1.msra.mxu0 0.0
  %309 = vmatprep.subr.mxu0 0.0
  %310 = vmatpush1.msra.mxu0 0.0
  %311 = vmatprep.subr.mxu0 0.0
  %312 = vmatpush1.msra.mxu0 0.0
  %313 = vmatprep.mubr.f32.mxu0 0.0
  %314 = vmatmul.mubr.f32.gmra.mrb[0].mxu0 %v238
  %v315 = vpop.f32.mrb[0].mxu0
  %v316 = vadd.f32 %v234, %v315
  %v317 = vpop.f32.mrb[0].mxu0
  %318 = vmatprep.mubr.f32.mxu0 0.0
  %319 = vmatmul.mubr.f32.gmra.mrb[0].mxu0 %v241
  %v320 = vpop.f32.mrb[0].mxu0
  %v321 = vadd.f32 %v234, %v320
  %v322 = vpop.f32.mrb[0].mxu0
  %323 = vmatprep.mubr.f32.mxu0 0.0
  %324 = vmatmul.mubr.f32.gmra.mrb[0].mxu0 %v244
  %v325 = vpop.f32.mrb[0].mxu0
  %v326 = vadd.f32 %v234, %v325
  %v327 = vpop.f32.mrb[0].mxu0
  %328 = vmatprep.mubr.f32.mxu0 0.0
  %329 = vmatmul.mubr.f32.gmra.mrb[0].mxu0 %v247
  %v330 = vpop.f32.mrb[0].mxu0
  %v331 = vadd.f32 %v234, %v330
  %v332 = vpop.f32.mrb[0].mxu0
  %333 = vdwg.mxu0
  %v334 = vtanh.pop %v316
  %v335 = vtanh.pop %v321
  %v336 = vtanh.pop %v326
  %v337 = vtanh.pop %v331
  %v338 = vld [vmem:[%s6] sm:$0xff]
  %v339 = vadd.f32 %v334, %v338
  %v340 = vadd.f32 %v335, %v338
  %v341 = vadd.f32 %v336, %v338
  %v342 = vadd.f32 %v337, %v338
  %v343 = vld [vmem:[%s7] sm:$0xf]
  %v344 = vmul.f32 %v334, %v334
  %v345 = vmul.f32 %v335, %v335
  %v346 = vsel %vm236, %v344, 0.0
  %347 = vadd.xlane.f32.xlu0 %v346
  %v348 = vpop.xlane.xlu0 %347
  %v349 = vsel %vm236, %v345, 0.0
  %350 = vadd.xlane.f32.xlu0 %v349
  %v351 = vpop.xlane.xlu0 %350
  %v352 = vrsqrt.pop %v348
  %v353 = vmul.f32 %v348, %v352
  %vm354 = vcmp.eq.f32.partialorder %v348, inf
  %v355 = vsel %vm354, %v348, %v353
  %vm356 = vcmp.eq.f32.partialorder %v348, 0.0
  %v357 = vand.u32 %v348, 2147483648
  %v358 = vsel %vm356, %v357, %v355
  %v359 = vrsqrt.pop %v351
  %v360 = vmul.f32 %v351, %v359
  %vm361 = vcmp.eq.f32.partialorder %v351, inf
  %v362 = vsel %vm361, %v351, %v360
  %vm363 = vcmp.eq.f32.partialorder %v351, 0.0
  %v364 = vand.u32 %v351, 2147483648
  %v365 = vsel %vm363, %v364, %v362
  %v366 = vmax.f32 %v358, 1e-08
  %v367 = vmax.f32 %v365, 1e-08
  %v368 = vrcp.pop %v366
  %v369 = vmul.f32 %v334, %v368
  %v370 = vrcp.pop %v367
  %v371 = vmul.f32 %v335, %v370
  %v372 = vmul.f32 %v336, %v336
  %v373 = vmul.f32 %v337, %v337
  %v374 = vsel %vm236, %v372, 0.0
  %375 = vadd.xlane.f32.xlu0 %v374
  %v376 = vpop.xlane.xlu0 %375
  %v377 = vsel %vm236, %v373, 0.0
  %378 = vadd.xlane.f32.xlu0 %v377
  %v379 = vpop.xlane.xlu0 %378
  %v380 = vrsqrt.pop %v376
  %v381 = vmul.f32 %v376, %v380
  %vm382 = vcmp.eq.f32.partialorder %v376, inf
  %v383 = vsel %vm382, %v376, %v381
  %vm384 = vcmp.eq.f32.partialorder %v376, 0.0
  %v385 = vand.u32 %v376, 2147483648
  %v386 = vsel %vm384, %v385, %v383
  %v387 = vrsqrt.pop %v379
  %v388 = vmul.f32 %v379, %v387
  %vm389 = vcmp.eq.f32.partialorder %v379, inf
  %v390 = vsel %vm389, %v379, %v388
  %vm391 = vcmp.eq.f32.partialorder %v379, 0.0
  %v392 = vand.u32 %v379, 2147483648
  %v393 = vsel %vm391, %v392, %v390
  %v394 = vmax.f32 %v386, 1e-08
  %v395 = vmax.f32 %v393, 1e-08
  %v396 = vrcp.pop %v394
  %v397 = vmul.f32 %v336, %v396
  %v398 = vrcp.pop %v395
  %v399 = vmul.f32 %v337, %v398
  %v401 = vsel %vm236, %v369, 0
  %v404 = vsel %vm236, %v397, 0
  %406 = vmatprep.subr.mxu0 0.0
  %407 = vmatpush1.xpose.msra.mxu0 %v404
  %408 = vmatprep.subr.mxu0 0.0
  %409 = vmatpush1.xpose.msra.mxu0 0.0
  %410 = vmatprep.subr.mxu0 0.0
  %411 = vmatpush1.xpose.msra.mxu0 0.0
  %412 = vmatprep.subr.mxu0 0.0
  %413 = vmatpush1.xpose.msra.mxu0 0.0
  %414 = vmatprep.subr.mxu0 0.0
  %415 = vmatpush1.xpose.msra.mxu0 0.0
  %416 = vmatprep.subr.mxu0 0.0
  %417 = vmatpush1.xpose.msra.mxu0 0.0
  %418 = vmatprep.subr.mxu0 0.0
  %419 = vmatpush1.xpose.msra.mxu0 0.0
  %420 = vmatprep.subr.mxu0 0.0
  %421 = vmatpush1.xpose.msra.mxu0 0.0
  %422 = vmatprep.subr.mxu0 0.0
  %423 = vmatpush1.xpose.msra.mxu0 0.0
  %424 = vmatprep.subr.mxu0 0.0
  %425 = vmatpush1.xpose.msra.mxu0 0.0
  %426 = vmatprep.subr.mxu0 0.0
  %427 = vmatpush1.xpose.msra.mxu0 0.0
  %428 = vmatprep.subr.mxu0 0.0
  %429 = vmatpush1.xpose.msra.mxu0 0.0
  %430 = vmatprep.subr.mxu0 0.0
  %431 = vmatpush1.xpose.msra.mxu0 0.0
  %432 = vmatprep.subr.mxu0 0.0
  %433 = vmatpush1.xpose.msra.mxu0 0.0
  %434 = vmatprep.subr.mxu0 0.0
  %435 = vmatpush1.xpose.msra.mxu0 0.0
  %436 = vmatprep.subr.mxu0 0.0
  %437 = vmatpush1.xpose.msra.mxu0 0.0
  %438 = vmatprep.subr.mxu0 0.0
  %439 = vmatpush1.xpose.msra.mxu0 0.0
  %440 = vmatprep.subr.mxu0 0.0
  %441 = vmatpush1.xpose.msra.mxu0 0.0
  %442 = vmatprep.subr.mxu0 0.0
  %443 = vmatpush1.xpose.msra.mxu0 0.0
  %444 = vmatprep.subr.mxu0 0.0
  %445 = vmatpush1.xpose.msra.mxu0 0.0
  %446 = vmatprep.subr.mxu0 0.0
  %447 = vmatpush1.xpose.msra.mxu0 0.0
  %448 = vmatprep.subr.mxu0 0.0
  %449 = vmatpush1.xpose.msra.mxu0 0.0
  %450 = vmatprep.subr.mxu0 0.0
  %451 = vmatpush1.xpose.msra.mxu0 0.0
  %452 = vmatprep.subr.mxu0 0.0
  %453 = vmatpush1.xpose.msra.mxu0 0.0
  %454 = vmatprep.subr.mxu0 0.0
  %455 = vmatpush1.xpose.msra.mxu0 0.0
  %456 = vmatprep.subr.mxu0 0.0
  %457 = vmatpush1.xpose.msra.mxu0 0.0
  %458 = vmatprep.subr.mxu0 0.0
  %459 = vmatpush1.xpose.msra.mxu0 0.0
  %460 = vmatprep.subr.mxu0 0.0
  %461 = vmatpush1.xpose.msra.mxu0 0.0
  %462 = vmatprep.subr.mxu0 0.0
  %463 = vmatpush1.xpose.msra.mxu0 0.0
  %464 = vmatprep.subr.mxu0 0.0
  %465 = vmatpush1.xpose.msra.mxu0 0.0
  %466 = vmatprep.subr.mxu0 0.0
  %467 = vmatpush1.xpose.msra.mxu0 0.0
  %468 = vmatprep.subr.mxu0 0.0
  %469 = vmatpush1.xpose.msra.mxu0 0.0
  %470 = vmatprep.mubr.f32.mxu0 0.0
  %471 = vmatmul.mubr.f32.gmra.mrb[0].mxu0 %v401
  %v472 = vpop.f32.mrb[0].mxu0
  %v473 = vadd.f32 0.0, %v472
  %v474 = vpop.f32.mrb[0].mxu0
  %475 = vdwg.mxu0
  %v477 = vsel %vm236, %v371, 0
  %v480 = vsel %vm236, %v399, 0
  %482 = vmatprep.subr.mxu0 0.0
  %483 = vmatpush1.xpose.msra.mxu0 %v480
  %484 = vmatprep.subr.mxu0 0.0
  %485 = vmatpush1.xpose.msra.mxu0 0.0
  %486 = vmatprep.subr.mxu0 0.0
  %487 = vmatpush1.xpose.msra.mxu0 0.0
  %488 = vmatprep.subr.mxu0 0.0
  %489 = vmatpush1.xpose.msra.mxu0 0.0
  %490 = vmatprep.subr.mxu0 0.0
  %491 = vmatpush1.xpose.msra.mxu0 0.0
  %492 = vmatprep.subr.mxu0 0.0
  %493 = vmatpush1.xpose.msra.mxu0 0.0
  %494 = vmatprep.subr.mxu0 0.0
  %495 = vmatpush1.xpose.msra.mxu0 0.0
  %496 = vmatprep.subr.mxu0 0.0
  %497 = vmatpush1.xpose.msra.mxu0 0.0
  %498 = vmatprep.subr.mxu0 0.0
  %499 = vmatpush1.xpose.msra.mxu0 0.0
  %500 = vmatprep.subr.mxu0 0.0
  %501 = vmatpush1.xpose.msra.mxu0 0.0
  %502 = vmatprep.subr.mxu0 0.0
  %503 = vmatpush1.xpose.msra.mxu0 0.0
  %504 = vmatprep.subr.mxu0 0.0
  %505 = vmatpush1.xpose.msra.mxu0 0.0
  %506 = vmatprep.subr.mxu0 0.0
  %507 = vmatpush1.xpose.msra.mxu0 0.0
  %508 = vmatprep.subr.mxu0 0.0
  %509 = vmatpush1.xpose.msra.mxu0 0.0
  %510 = vmatprep.subr.mxu0 0.0
  %511 = vmatpush1.xpose.msra.mxu0 0.0
  %512 = vmatprep.subr.mxu0 0.0
  %513 = vmatpush1.xpose.msra.mxu0 0.0
  %514 = vmatprep.subr.mxu0 0.0
  %515 = vmatpush1.xpose.msra.mxu0 0.0
  %516 = vmatprep.subr.mxu0 0.0
  %517 = vmatpush1.xpose.msra.mxu0 0.0
  %518 = vmatprep.subr.mxu0 0.0
  %519 = vmatpush1.xpose.msra.mxu0 0.0
  %520 = vmatprep.subr.mxu0 0.0
  %521 = vmatpush1.xpose.msra.mxu0 0.0
  %522 = vmatprep.subr.mxu0 0.0
  %523 = vmatpush1.xpose.msra.mxu0 0.0
  %524 = vmatprep.subr.mxu0 0.0
  %525 = vmatpush1.xpose.msra.mxu0 0.0
  %526 = vmatprep.subr.mxu0 0.0
  %527 = vmatpush1.xpose.msra.mxu0 0.0
  %528 = vmatprep.subr.mxu0 0.0
  %529 = vmatpush1.xpose.msra.mxu0 0.0
  %530 = vmatprep.subr.mxu0 0.0
  %531 = vmatpush1.xpose.msra.mxu0 0.0
  %532 = vmatprep.subr.mxu0 0.0
  %533 = vmatpush1.xpose.msra.mxu0 0.0
  %534 = vmatprep.subr.mxu0 0.0
  %535 = vmatpush1.xpose.msra.mxu0 0.0
  %536 = vmatprep.subr.mxu0 0.0
  %537 = vmatpush1.xpose.msra.mxu0 0.0
  %538 = vmatprep.subr.mxu0 0.0
  %539 = vmatpush1.xpose.msra.mxu0 0.0
  %540 = vmatprep.subr.mxu0 0.0
  %541 = vmatpush1.xpose.msra.mxu0 0.0
  %542 = vmatprep.subr.mxu0 0.0
  %543 = vmatpush1.xpose.msra.mxu0 0.0
  %544 = vmatprep.subr.mxu0 0.0
  %545 = vmatpush1.xpose.msra.mxu0 0.0
  %546 = vmatprep.mubr.f32.mxu0 0.0
  %547 = vmatmul.mubr.f32.gmra.mrb[0].mxu0 %v477
  %v548 = vpop.f32.mrb[0].mxu0
  %v549 = vadd.f32 0.0, %v548
  %v550 = vpop.f32.mrb[0].mxu0
  %551 = vdwg.mxu0
  %v552 = vsub.f32 2.0, %v473
  %v553 = vsub.f32 2.0, %v549
  %v554 = vmul.f32 %v552, 0.5
  %v555 = vmul.f32 %v553, 0.5
  %v556 = vld [vmem:[%s2] sm:$0xff]
  %v557 = vmul.f32 %v554, %v556
  %v558 = vmul.f32 %v555, %v556
  %vm559 = vcmask 64512
  %v560 = vsel %vm559, %v554, inf
  %561 = vmin.xlane.f32.xlu0 %v560
  %v562 = vpop.xlane.xlu0 %561
  %v563 = vsel %vm559, %v555, inf
  %564 = vmin.xlane.f32.xlu0 %v563
  %v565 = vpop.xlane.xlu0 %564
  %v567 = vsel %vm236, %v339, 0
  %v570 = vsel %vm236, %v341, 0
  %572 = vmatprep.subr.mxu0 0.0
  %573 = vmatpush1.xpose.msra.mxu0 %v570
  %574 = vmatprep.subr.mxu0 0.0
  %575 = vmatpush1.xpose.msra.mxu0 0.0
  %576 = vmatprep.subr.mxu0 0.0
  %577 = vmatpush1.xpose.msra.mxu0 0.0
  %578 = vmatprep.subr.mxu0 0.0
  %579 = vmatpush1.xpose.msra.mxu0 0.0
  %580 = vmatprep.subr.mxu0 0.0
  %581 = vmatpush1.xpose.msra.mxu0 0.0
  %582 = vmatprep.subr.mxu0 0.0
  %583 = vmatpush1.xpose.msra.mxu0 0.0
  %584 = vmatprep.subr.mxu0 0.0
  %585 = vmatpush1.xpose.msra.mxu0 0.0
  %586 = vmatprep.subr.mxu0 0.0
  %587 = vmatpush1.xpose.msra.mxu0 0.0
  %588 = vmatprep.subr.mxu0 0.0
  %589 = vmatpush1.xpose.msra.mxu0 0.0
  %590 = vmatprep.subr.mxu0 0.0
  %591 = vmatpush1.xpose.msra.mxu0 0.0
  %592 = vmatprep.subr.mxu0 0.0
  %593 = vmatpush1.xpose.msra.mxu0 0.0
  %594 = vmatprep.subr.mxu0 0.0
  %595 = vmatpush1.xpose.msra.mxu0 0.0
  %596 = vmatprep.subr.mxu0 0.0
  %597 = vmatpush1.xpose.msra.mxu0 0.0
  %598 = vmatprep.subr.mxu0 0.0
  %599 = vmatpush1.xpose.msra.mxu0 0.0
  %600 = vmatprep.subr.mxu0 0.0
  %601 = vmatpush1.xpose.msra.mxu0 0.0
  %602 = vmatprep.subr.mxu0 0.0
  %603 = vmatpush1.xpose.msra.mxu0 0.0
  %604 = vmatprep.subr.mxu0 0.0
  %605 = vmatpush1.xpose.msra.mxu0 0.0
  %606 = vmatprep.subr.mxu0 0.0
  %607 = vmatpush1.xpose.msra.mxu0 0.0
  %608 = vmatprep.subr.mxu0 0.0
  %609 = vmatpush1.xpose.msra.mxu0 0.0
  %610 = vmatprep.subr.mxu0 0.0
  %611 = vmatpush1.xpose.msra.mxu0 0.0
  %612 = vmatprep.subr.mxu0 0.0
  %613 = vmatpush1.xpose.msra.mxu0 0.0
  %614 = vmatprep.subr.mxu0 0.0
  %615 = vmatpush1.xpose.msra.mxu0 0.0
  %616 = vmatprep.subr.mxu0 0.0
  %617 = vmatpush1.xpose.msra.mxu0 0.0
  %618 = vmatprep.subr.mxu0 0.0
  %619 = vmatpush1.xpose.msra.mxu0 0.0
  %620 = vmatprep.subr.mxu0 0.0
  %621 = vmatpush1.xpose.msra.mxu0 0.0
  %622 = vmatprep.subr.mxu0 0.0
  %623 = vmatpush1.xpose.msra.mxu0 0.0
  %624 = vmatprep.subr.mxu0 0.0
  %625 = vmatpush1.xpose.msra.mxu0 0.0
  %626 = vmatprep.subr.mxu0 0.0
  %627 = vmatpush1.xpose.msra.mxu0 0.0
  %628 = vmatprep.subr.mxu0 0.0
  %629 = vmatpush1.xpose.msra.mxu0 0.0
  %630 = vmatprep.subr.mxu0 0.0
  %631 = vmatpush1.xpose.msra.mxu0 0.0
  %632 = vmatprep.subr.mxu0 0.0
  %633 = vmatpush1.xpose.msra.mxu0 0.0
  %634 = vmatprep.subr.mxu0 0.0
  %635 = vmatpush1.xpose.msra.mxu0 0.0
  %636 = vmatprep.mubr.f32.mxu0 0.0
  %637 = vmatmul.mubr.f32.gmra.mrb[0].mxu0 %v567
  %v638 = vpop.f32.mrb[0].mxu0
  %v639 = vadd.f32 0.0, %v638
  %v640 = vpop.f32.mrb[0].mxu0
  %641 = vdwg.mxu0
  %v643 = vsel %vm236, %v340, 0
  %v646 = vsel %vm236, %v342, 0
  %648 = vmatprep.subr.mxu0 0.0
  %649 = vmatpush1.xpose.msra.mxu0 %v646
  %650 = vmatprep.subr.mxu0 0.0
  %651 = vmatpush1.xpose.msra.mxu0 0.0
  %652 = vmatprep.subr.mxu0 0.0
  %653 = vmatpush1.xpose.msra.mxu0 0.0
  %654 = vmatprep.subr.mxu0 0.0
  %655 = vmatpush1.xpose.msra.mxu0 0.0
  %656 = vmatprep.subr.mxu0 0.0
  %657 = vmatpush1.xpose.msra.mxu0 0.0
  %658 = vmatprep.subr.mxu0 0.0
  %659 = vmatpush1.xpose.msra.mxu0 0.0
  %660 = vmatprep.subr.mxu0 0.0
  %661 = vmatpush1.xpose.msra.mxu0 0.0
  %662 = vmatprep.subr.mxu0 0.0
  %663 = vmatpush1.xpose.msra.mxu0 0.0
  %664 = vmatprep.subr.mxu0 0.0
  %665 = vmatpush1.xpose.msra.mxu0 0.0
  %666 = vmatprep.subr.mxu0 0.0
  %667 = vmatpush1.xpose.msra.mxu0 0.0
  %668 = vmatprep.subr.mxu0 0.0
  %669 = vmatpush1.xpose.msra.mxu0 0.0
  %670 = vmatprep.subr.mxu0 0.0
  %671 = vmatpush1.xpose.msra.mxu0 0.0
  %672 = vmatprep.subr.mxu0 0.0
  %673 = vmatpush1.xpose.msra.mxu0 0.0
  %674 = vmatprep.subr.mxu0 0.0
  %675 = vmatpush1.xpose.msra.mxu0 0.0
  %676 = vmatprep.subr.mxu0 0.0
  %677 = vmatpush1.xpose.msra.mxu0 0.0
  %678 = vmatprep.subr.mxu0 0.0
  %679 = vmatpush1.xpose.msra.mxu0 0.0
  %680 = vmatprep.subr.mxu0 0.0
  %681 = vmatpush1.xpose.msra.mxu0 0.0
  %682 = vmatprep.subr.mxu0 0.0
  %683 = vmatpush1.xpose.msra.mxu0 0.0
  %684 = vmatprep.subr.mxu0 0.0
  %685 = vmatpush1.xpose.msra.mxu0 0.0
  %686 = vmatprep.subr.mxu0 0.0
  %687 = vmatpush1.xpose.msra.mxu0 0.0
  %688 = vmatprep.subr.mxu0 0.0
  %689 = vmatpush1.xpose.msra.mxu0 0.0
  %690 = vmatprep.subr.mxu0 0.0
  %691 = vmatpush1.xpose.msra.mxu0 0.0
  %692 = vmatprep.subr.mxu0 0.0
  %693 = vmatpush1.xpose.msra.mxu0 0.0
  %694 = vmatprep.subr.mxu0 0.0
  %695 = vmatpush1.xpose.msra.mxu0 0.0
  %696 = vmatprep.subr.mxu0 0.0
  %697 = vmatpush1.xpose.msra.mxu0 0.0
  %698 = vmatprep.subr.mxu0 0.0
  %699 = vmatpush1.xpose.msra.mxu0 0.0
  %700 = vmatprep.subr.mxu0 0.0
  %701 = vmatpush1.xpose.msra.mxu0 0.0
  %702 = vmatprep.subr.mxu0 0.0
  %703 = vmatpush1.xpose.msra.mxu0 0.0
  %704 = vmatprep.subr.mxu0 0.0
  %705 = vmatpush1.xpose.msra.mxu0 0.0
  %706 = vmatprep.subr.mxu0 0.0
  %707 = vmatpush1.xpose.msra.mxu0 0.0
  %708 = vmatprep.subr.mxu0 0.0
  %709 = vmatpush1.xpose.msra.mxu0 0.0
  %710 = vmatprep.subr.mxu0 0.0
  %711 = vmatpush1.xpose.msra.mxu0 0.0
  %712 = vmatprep.mubr.f32.mxu0 0.0
  %713 = vmatmul.mubr.f32.gmra.mrb[0].mxu0 %v643
  %v714 = vpop.f32.mrb[0].mxu0
  %v715 = vadd.f32 0.0, %v714
  %v716 = vpop.f32.mrb[0].mxu0
  %717 = vdwg.mxu0
  %v718 = vsel %vm559, %v639, -inf
  %719 = vmax.xlane.f32.xlu0 %v718
  %v720 = vpop.xlane.xlu0 %719
  %v721 = vsel %vm559, %v715, -inf
  %722 = vmax.xlane.f32.xlu0 %v721
  %v723 = vpop.xlane.xlu0 %722
  %v724 = vsub.f32 %v639, %v720
  %v725 = vsub.f32 %v715, %v723
  %v726 = vmul.f32 %v724, 1.442695
  %v727 = vpow.pop %v726
  %v728 = vmul.f32 %v725, 1.442695
  %v729 = vpow.pop %v728
  %v730 = vsel %vm559, %v727, 0.0
  %731 = vadd.xlane.f32.xlu0 %v730
  %v732 = vpop.xlane.xlu0 %731
  %v733 = vsel %vm559, %v729, 0.0
  %734 = vadd.xlane.f32.xlu0 %v733
  %v735 = vpop.xlane.xlu0 %734
  %v736 = vrcp.pop %v732
  %v737 = vmul.f32 %v727, %v736
  %v738 = vrcp.pop %v735
  %v739 = vmul.f32 %v729, %v738
  %v741 = vsel %vm559, %v737, 0
  %743 = vmatprep.subr.mxu0 0.0
  %744 = vmatpush1.msra.mxu0 %v341
  %745 = vmatprep.subr.mxu0 0.0
  %746 = vmatpush1.msra.mxu0 0.0
  %747 = vmatprep.subr.mxu0 0.0
  %748 = vmatpush1.msra.mxu0 0.0
  %749 = vmatprep.subr.mxu0 0.0
  %750 = vmatpush1.msra.mxu0 0.0
  %751 = vmatprep.subr.mxu0 0.0
  %752 = vmatpush1.msra.mxu0 0.0
  %753 = vmatprep.subr.mxu0 0.0
  %754 = vmatpush1.msra.mxu0 0.0
  %755 = vmatprep.subr.mxu0 0.0
  %756 = vmatpush1.msra.mxu0 0.0
  %757 = vmatprep.subr.mxu0 0.0
  %758 = vmatpush1.msra.mxu0 0.0
  %759 = vmatprep.subr.mxu0 0.0
  %760 = vmatpush1.msra.mxu0 0.0
  %761 = vmatprep.subr.mxu0 0.0
  %762 = vmatpush1.msra.mxu0 0.0
  %763 = vmatprep.subr.mxu0 0.0
  %764 = vmatpush1.msra.mxu0 0.0
  %765 = vmatprep.subr.mxu0 0.0
  %766 = vmatpush1.msra.mxu0 0.0
  %767 = vmatprep.subr.mxu0 0.0
  %768 = vmatpush1.msra.mxu0 0.0
  %769 = vmatprep.subr.mxu0 0.0
  %770 = vmatpush1.msra.mxu0 0.0
  %771 = vmatprep.subr.mxu0 0.0
  %772 = vmatpush1.msra.mxu0 0.0
  %773 = vmatprep.subr.mxu0 0.0
  %774 = vmatpush1.msra.mxu0 0.0
  %775 = vmatprep.subr.mxu0 0.0
  %776 = vmatpush1.msra.mxu0 0.0
  %777 = vmatprep.subr.mxu0 0.0
  %778 = vmatpush1.msra.mxu0 0.0
  %779 = vmatprep.subr.mxu0 0.0
  %780 = vmatpush1.msra.mxu0 0.0
  %781 = vmatprep.subr.mxu0 0.0
  %782 = vmatpush1.msra.mxu0 0.0
  %783 = vmatprep.subr.mxu0 0.0
  %784 = vmatpush1.msra.mxu0 0.0
  %785 = vmatprep.subr.mxu0 0.0
  %786 = vmatpush1.msra.mxu0 0.0
  %787 = vmatprep.subr.mxu0 0.0
  %788 = vmatpush1.msra.mxu0 0.0
  %789 = vmatprep.subr.mxu0 0.0
  %790 = vmatpush1.msra.mxu0 0.0
  %791 = vmatprep.subr.mxu0 0.0
  %792 = vmatpush1.msra.mxu0 0.0
  %793 = vmatprep.subr.mxu0 0.0
  %794 = vmatpush1.msra.mxu0 0.0
  %795 = vmatprep.subr.mxu0 0.0
  %796 = vmatpush1.msra.mxu0 0.0
  %797 = vmatprep.subr.mxu0 0.0
  %798 = vmatpush1.msra.mxu0 0.0
  %799 = vmatprep.subr.mxu0 0.0
  %800 = vmatpush1.msra.mxu0 0.0
  %801 = vmatprep.subr.mxu0 0.0
  %802 = vmatpush1.msra.mxu0 0.0
  %803 = vmatprep.subr.mxu0 0.0
  %804 = vmatpush1.msra.mxu0 0.0
  %805 = vmatprep.subr.mxu0 0.0
  %806 = vmatpush1.msra.mxu0 0.0
  %807 = vmatprep.mubr.f32.mxu0 0.0
  %808 = vmatmul.mubr.f32.gmra.mrb[0].mxu0 %v741
  %v809 = vpop.f32.mrb[0].mxu0
  %v810 = vadd.f32 0.0, %v809
  %v811 = vpop.f32.mrb[0].mxu0
  %812 = vdwg.mxu0
  %v814 = vsel %vm559, %v739, 0
  %816 = vmatprep.subr.mxu0 0.0
  %817 = vmatpush1.msra.mxu0 %v342
  %818 = vmatprep.subr.mxu0 0.0
  %819 = vmatpush1.msra.mxu0 0.0
  %820 = vmatprep.subr.mxu0 0.0
  %821 = vmatpush1.msra.mxu0 0.0
  %822 = vmatprep.subr.mxu0 0.0
  %823 = vmatpush1.msra.mxu0 0.0
  %824 = vmatprep.subr.mxu0 0.0
  %825 = vmatpush1.msra.mxu0 0.0
  %826 = vmatprep.subr.mxu0 0.0
  %827 = vmatpush1.msra.mxu0 0.0
  %828 = vmatprep.subr.mxu0 0.0
  %829 = vmatpush1.msra.mxu0 0.0
  %830 = vmatprep.subr.mxu0 0.0
  %831 = vmatpush1.msra.mxu0 0.0
  %832 = vmatprep.subr.mxu0 0.0
  %833 = vmatpush1.msra.mxu0 0.0
  %834 = vmatprep.subr.mxu0 0.0
  %835 = vmatpush1.msra.mxu0 0.0
  %836 = vmatprep.subr.mxu0 0.0
  %837 = vmatpush1.msra.mxu0 0.0
  %838 = vmatprep.subr.mxu0 0.0
  %839 = vmatpush1.msra.mxu0 0.0
  %840 = vmatprep.subr.mxu0 0.0
  %841 = vmatpush1.msra.mxu0 0.0
  %842 = vmatprep.subr.mxu0 0.0
  %843 = vmatpush1.msra.mxu0 0.0
  %844 = vmatprep.subr.mxu0 0.0
  %845 = vmatpush1.msra.mxu0 0.0
  %846 = vmatprep.subr.mxu0 0.0
  %847 = vmatpush1.msra.mxu0 0.0
  %848 = vmatprep.subr.mxu0 0.0
  %849 = vmatpush1.msra.mxu0 0.0
  %850 = vmatprep.subr.mxu0 0.0
  %851 = vmatpush1.msra.mxu0 0.0
  %852 = vmatprep.subr.mxu0 0.0
  %853 = vmatpush1.msra.mxu0 0.0
  %854 = vmatprep.subr.mxu0 0.0
  %855 = vmatpush1.msra.mxu0 0.0
  %856 = vmatprep.subr.mxu0 0.0
  %857 = vmatpush1.msra.mxu0 0.0
  %858 = vmatprep.subr.mxu0 0.0
  %859 = vmatpush1.msra.mxu0 0.0
  %860 = vmatprep.subr.mxu0 0.0
  %861 = vmatpush1.msra.mxu0 0.0
  %862 = vmatprep.subr.mxu0 0.0
  %863 = vmatpush1.msra.mxu0 0.0
  %864 = vmatprep.subr.mxu0 0.0
  %865 = vmatpush1.msra.mxu0 0.0
  %866 = vmatprep.subr.mxu0 0.0
  %867 = vmatpush1.msra.mxu0 0.0
  %868 = vmatprep.subr.mxu0 0.0
  %869 = vmatpush1.msra.mxu0 0.0
  %870 = vmatprep.subr.mxu0 0.0
  %871 = vmatpush1.msra.mxu0 0.0
  %872 = vmatprep.subr.mxu0 0.0
  %873 = vmatpush1.msra.mxu0 0.0
  %874 = vmatprep.subr.mxu0 0.0
  %875 = vmatpush1.msra.mxu0 0.0
  %876 = vmatprep.subr.mxu0 0.0
  %877 = vmatpush1.msra.mxu0 0.0
  %878 = vmatprep.subr.mxu0 0.0
  %879 = vmatpush1.msra.mxu0 0.0
  %880 = vmatprep.mubr.f32.mxu0 0.0
  %881 = vmatmul.mubr.f32.gmra.mrb[0].mxu0 %v814
  %v882 = vpop.f32.mrb[0].mxu0
  %v883 = vadd.f32 0.0, %v882
  %v884 = vpop.f32.mrb[0].mxu0
  %885 = vdwg.mxu0
  %886 = vmatprep.subr.mxu0 0.0
  %887 = vmatpush1.xpose.msra.mxu0 %v567
  %888 = vmatprep.subr.mxu0 0.0
  %889 = vmatpush1.xpose.msra.mxu0 0.0
  %890 = vmatprep.subr.mxu0 0.0
  %891 = vmatpush1.xpose.msra.mxu0 0.0
  %892 = vmatprep.subr.mxu0 0.0
  %893 = vmatpush1.xpose.msra.mxu0 0.0
  %894 = vmatprep.subr.mxu0 0.0
  %895 = vmatpush1.xpose.msra.mxu0 0.0
  %896 = vmatprep.subr.mxu0 0.0
  %897 = vmatpush1.xpose.msra.mxu0 0.0
  %898 = vmatprep.subr.mxu0 0.0
  %899 = vmatpush1.xpose.msra.mxu0 0.0
  %900 = vmatprep.subr.mxu0 0.0
  %901 = vmatpush1.xpose.msra.mxu0 0.0
  %902 = vmatprep.subr.mxu0 0.0
  %903 = vmatpush1.xpose.msra.mxu0 0.0
  %904 = vmatprep.subr.mxu0 0.0
  %905 = vmatpush1.xpose.msra.mxu0 0.0
  %906 = vmatprep.subr.mxu0 0.0
  %907 = vmatpush1.xpose.msra.mxu0 0.0
  %908 = vmatprep.subr.mxu0 0.0
  %909 = vmatpush1.xpose.msra.mxu0 0.0
  %910 = vmatprep.subr.mxu0 0.0
  %911 = vmatpush1.xpose.msra.mxu0 0.0
  %912 = vmatprep.subr.mxu0 0.0
  %913 = vmatpush1.xpose.msra.mxu0 0.0
  %914 = vmatprep.subr.mxu0 0.0
  %915 = vmatpush1.xpose.msra.mxu0 0.0
  %916 = vmatprep.subr.mxu0 0.0
  %917 = vmatpush1.xpose.msra.mxu0 0.0
  %918 = vmatprep.subr.mxu0 0.0
  %919 = vmatpush1.xpose.msra.mxu0 0.0
  %920 = vmatprep.subr.mxu0 0.0
  %921 = vmatpush1.xpose.msra.mxu0 0.0
  %922 = vmatprep.subr.mxu0 0.0
  %923 = vmatpush1.xpose.msra.mxu0 0.0
  %924 = vmatprep.subr.mxu0 0.0
  %925 = vmatpush1.xpose.msra.mxu0 0.0
  %926 = vmatprep.subr.mxu0 0.0
  %927 = vmatpush1.xpose.msra.mxu0 0.0
  %928 = vmatprep.subr.mxu0 0.0
  %929 = vmatpush1.xpose.msra.mxu0 0.0
  %930 = vmatprep.subr.mxu0 0.0
  %931 = vmatpush1.xpose.msra.mxu0 0.0
  %932 = vmatprep.subr.mxu0 0.0
  %933 = vmatpush1.xpose.msra.mxu0 0.0
  %934 = vmatprep.subr.mxu0 0.0
  %935 = vmatpush1.xpose.msra.mxu0 0.0
  %936 = vmatprep.subr.mxu0 0.0
  %937 = vmatpush1.xpose.msra.mxu0 0.0
  %938 = vmatprep.subr.mxu0 0.0
  %939 = vmatpush1.xpose.msra.mxu0 0.0
  %940 = vmatprep.subr.mxu0 0.0
  %941 = vmatpush1.xpose.msra.mxu0 0.0
  %942 = vmatprep.subr.mxu0 0.0
  %943 = vmatpush1.xpose.msra.mxu0 0.0
  %944 = vmatprep.subr.mxu0 0.0
  %945 = vmatpush1.xpose.msra.mxu0 0.0
  %946 = vmatprep.subr.mxu0 0.0
  %947 = vmatpush1.xpose.msra.mxu0 0.0
  %948 = vmatprep.subr.mxu0 0.0
  %949 = vmatpush1.xpose.msra.mxu0 0.0
  %950 = vmatprep.mubr.f32.mxu0 0.0
  %951 = vmatmul.mubr.f32.gmra.mrb[0].mxu0 %v570
  %v952 = vpop.f32.mrb[0].mxu0
  %v953 = vadd.f32 0.0, %v952
  %v954 = vpop.f32.mrb[0].mxu0
  %955 = vdwg.mxu0
  %956 = vmatprep.subr.mxu0 0.0
  %957 = vmatpush1.xpose.msra.mxu0 %v643
  %958 = vmatprep.subr.mxu0 0.0
  %959 = vmatpush1.xpose.msra.mxu0 0.0
  %960 = vmatprep.subr.mxu0 0.0
  %961 = vmatpush1.xpose.msra.mxu0 0.0
  %962 = vmatprep.subr.mxu0 0.0
  %963 = vmatpush1.xpose.msra.mxu0 0.0
  %964 = vmatprep.subr.mxu0 0.0
  %965 = vmatpush1.xpose.msra.mxu0 0.0
  %966 = vmatprep.subr.mxu0 0.0
  %967 = vmatpush1.xpose.msra.mxu0 0.0
  %968 = vmatprep.subr.mxu0 0.0
  %969 = vmatpush1.xpose.msra.mxu0 0.0
  %970 = vmatprep.subr.mxu0 0.0
  %971 = vmatpush1.xpose.msra.mxu0 0.0
  %972 = vmatprep.subr.mxu0 0.0
  %973 = vmatpush1.xpose.msra.mxu0 0.0
  %974 = vmatprep.subr.mxu0 0.0
  %975 = vmatpush1.xpose.msra.mxu0 0.0
  %976 = vmatprep.subr.mxu0 0.0
  %977 = vmatpush1.xpose.msra.mxu0 0.0
  %978 = vmatprep.subr.mxu0 0.0
  %979 = vmatpush1.xpose.msra.mxu0 0.0
  %980 = vmatprep.subr.mxu0 0.0
  %981 = vmatpush1.xpose.msra.mxu0 0.0
  %982 = vmatprep.subr.mxu0 0.0
  %983 = vmatpush1.xpose.msra.mxu0 0.0
  %984 = vmatprep.subr.mxu0 0.0
  %985 = vmatpush1.xpose.msra.mxu0 0.0
  %986 = vmatprep.subr.mxu0 0.0
  %987 = vmatpush1.xpose.msra.mxu0 0.0
  %988 = vmatprep.subr.mxu0 0.0
  %989 = vmatpush1.xpose.msra.mxu0 0.0
  %990 = vmatprep.subr.mxu0 0.0
  %991 = vmatpush1.xpose.msra.mxu0 0.0
  %992 = vmatprep.subr.mxu0 0.0
  %993 = vmatpush1.xpose.msra.mxu0 0.0
  %994 = vmatprep.subr.mxu0 0.0
  %995 = vmatpush1.xpose.msra.mxu0 0.0
  %996 = vmatprep.subr.mxu0 0.0
  %997 = vmatpush1.xpose.msra.mxu0 0.0
  %998 = vmatprep.subr.mxu0 0.0
  %999 = vmatpush1.xpose.msra.mxu0 0.0
  %1000 = vmatprep.subr.mxu0 0.0
  %1001 = vmatpush1.xpose.msra.mxu0 0.0
  %1002 = vmatprep.subr.mxu0 0.0
  %1003 = vmatpush1.xpose.msra.mxu0 0.0
  %1004 = vmatprep.subr.mxu0 0.0
  %1005 = vmatpush1.xpose.msra.mxu0 0.0
  %1006 = vmatprep.subr.mxu0 0.0
  %1007 = vmatpush1.xpose.msra.mxu0 0.0
  %1008 = vmatprep.subr.mxu0 0.0
  %1009 = vmatpush1.xpose.msra.mxu0 0.0
  %1010 = vmatprep.subr.mxu0 0.0
  %1011 = vmatpush1.xpose.msra.mxu0 0.0
  %1012 = vmatprep.subr.mxu0 0.0
  %1013 = vmatpush1.xpose.msra.mxu0 0.0
  %1014 = vmatprep.subr.mxu0 0.0
  %1015 = vmatpush1.xpose.msra.mxu0 0.0
  %1016 = vmatprep.subr.mxu0 0.0
  %1017 = vmatpush1.xpose.msra.mxu0 0.0
  %1018 = vmatprep.subr.mxu0 0.0
  %1019 = vmatpush1.xpose.msra.mxu0 0.0
  %1020 = vmatprep.mubr.f32.mxu0 0.0
  %1021 = vmatmul.mubr.f32.gmra.mrb[0].mxu0 %v646
  %v1022 = vpop.f32.mrb[0].mxu0
  %v1023 = vadd.f32 0.0, %v1022
  %v1024 = vpop.f32.mrb[0].mxu0
  %1025 = vdwg.mxu0
  %v1026 = vsel %vm559, %v953, -inf
  %1027 = vmax.xlane.f32.xlu0 %v1026
  %v1028 = vpop.xlane.xlu0 %1027
  %v1029 = vsel %vm559, %v1023, -inf
  %1030 = vmax.xlane.f32.xlu0 %v1029
  %v1031 = vpop.xlane.xlu0 %1030
  %v1032 = vsub.f32 %v953, %v1028
  %v1033 = vsub.f32 %v1023, %v1031
  %v1034 = vmul.f32 %v1032, 1.442695
  %v1035 = vpow.pop %v1034
  %v1036 = vmul.f32 %v1033, 1.442695
  %v1037 = vpow.pop %v1036
  %v1038 = vsel %vm559, %v1035, 0.0
  %1039 = vadd.xlane.f32.xlu0 %v1038
  %v1040 = vpop.xlane.xlu0 %1039
  %v1041 = vsel %vm559, %v1037, 0.0
  %1042 = vadd.xlane.f32.xlu0 %v1041
  %v1043 = vpop.xlane.xlu0 %1042
  %v1044 = vrcp.pop %v1040
  %v1045 = vmul.f32 %v1035, %v1044
  %v1046 = vrcp.pop %v1043
  %v1047 = vmul.f32 %v1037, %v1046
  %v1049 = vsel %vm559, %v1045, 0
  %1051 = vmatprep.subr.mxu0 0.0
  %1052 = vmatpush1.msra.mxu0 %v339
  %1053 = vmatprep.subr.mxu0 0.0
  %1054 = vmatpush1.msra.mxu0 0.0
  %1055 = vmatprep.subr.mxu0 0.0
  %1056 = vmatpush1.msra.mxu0 0.0
  %1057 = vmatprep.subr.mxu0 0.0
  %1058 = vmatpush1.msra.mxu0 0.0
  %1059 = vmatprep.subr.mxu0 0.0
  %1060 = vmatpush1.msra.mxu0 0.0
  %1061 = vmatprep.subr.mxu0 0.0
  %1062 = vmatpush1.msra.mxu0 0.0
  %1063 = vmatprep.subr.mxu0 0.0
  %1064 = vmatpush1.msra.mxu0 0.0
  %1065 = vmatprep.subr.mxu0 0.0
  %1066 = vmatpush1.msra.mxu0 0.0
  %1067 = vmatprep.subr.mxu0 0.0
  %1068 = vmatpush1.msra.mxu0 0.0
  %1069 = vmatprep.subr.mxu0 0.0
  %1070 = vmatpush1.msra.mxu0 0.0
  %1071 = vmatprep.subr.mxu0 0.0
  %1072 = vmatpush1.msra.mxu0 0.0
  %1073 = vmatprep.subr.mxu0 0.0
  %1074 = vmatpush1.msra.mxu0 0.0
  %1075 = vmatprep.subr.mxu0 0.0
  %1076 = vmatpush1.msra.mxu0 0.0
  %1077 = vmatprep.subr.mxu0 0.0
  %1078 = vmatpush1.msra.mxu0 0.0
  %1079 = vmatprep.subr.mxu0 0.0
  %1080 = vmatpush1.msra.mxu0 0.0
  %1081 = vmatprep.subr.mxu0 0.0
  %1082 = vmatpush1.msra.mxu0 0.0
  %1083 = vmatprep.subr.mxu0 0.0
  %1084 = vmatpush1.msra.mxu0 0.0
  %1085 = vmatprep.subr.mxu0 0.0
  %1086 = vmatpush1.msra.mxu0 0.0
  %1087 = vmatprep.subr.mxu0 0.0
  %1088 = vmatpush1.msra.mxu0 0.0
  %1089 = vmatprep.subr.mxu0 0.0
  %1090 = vmatpush1.msra.mxu0 0.0
  %1091 = vmatprep.subr.mxu0 0.0
  %1092 = vmatpush1.msra.mxu0 0.0
  %1093 = vmatprep.subr.mxu0 0.0
  %1094 = vmatpush1.msra.mxu0 0.0
  %1095 = vmatprep.subr.mxu0 0.0
  %1096 = vmatpush1.msra.mxu0 0.0
  %1097 = vmatprep.subr.mxu0 0.0
  %1098 = vmatpush1.msra.mxu0 0.0
  %1099 = vmatprep.subr.mxu0 0.0
  %1100 = vmatpush1.msra.mxu0 0.0
  %1101 = vmatprep.subr.mxu0 0.0
  %1102 = vmatpush1.msra.mxu0 0.0
  %1103 = vmatprep.subr.mxu0 0.0
  %1104 = vmatpush1.msra.mxu0 0.0
  %1105 = vmatprep.subr.mxu0 0.0
  %1106 = vmatpush1.msra.mxu0 0.0
  %1107 = vmatprep.subr.mxu0 0.0
  %1108 = vmatpush1.msra.mxu0 0.0
  %1109 = vmatprep.subr.mxu0 0.0
  %1110 = vmatpush1.msra.mxu0 0.0
  %1111 = vmatprep.subr.mxu0 0.0
  %1112 = vmatpush1.msra.mxu0 0.0
  %1113 = vmatprep.subr.mxu0 0.0
  %1114 = vmatpush1.msra.mxu0 0.0
  %1115 = vmatprep.mubr.f32.mxu0 0.0
  %1116 = vmatmul.mubr.f32.gmra.mrb[0].mxu0 %v1049
  %v1117 = vpop.f32.mrb[0].mxu0
  %v1118 = vadd.f32 0.0, %v1117
  %v1119 = vpop.f32.mrb[0].mxu0
  %1120 = vdwg.mxu0
  %v1122 = vsel %vm559, %v1047, 0
  %1124 = vmatprep.subr.mxu0 0.0
  %1125 = vmatpush1.msra.mxu0 %v340
  %1126 = vmatprep.subr.mxu0 0.0
  %1127 = vmatpush1.msra.mxu0 0.0
  %1128 = vmatprep.subr.mxu0 0.0
  %1129 = vmatpush1.msra.mxu0 0.0
  %1130 = vmatprep.subr.mxu0 0.0
  %1131 = vmatpush1.msra.mxu0 0.0
  %1132 = vmatprep.subr.mxu0 0.0
  %1133 = vmatpush1.msra.mxu0 0.0
  %1134 = vmatprep.subr.mxu0 0.0
  %1135 = vmatpush1.msra.mxu0 0.0
  %1136 = vmatprep.subr.mxu0 0.0
  %1137 = vmatpush1.msra.mxu0 0.0
  %1138 = vmatprep.subr.mxu0 0.0
  %1139 = vmatpush1.msra.mxu0 0.0
  %1140 = vmatprep.subr.mxu0 0.0
  %1141 = vmatpush1.msra.mxu0 0.0
  %1142 = vmatprep.subr.mxu0 0.0
  %1143 = vmatpush1.msra.mxu0 0.0
  %1144 = vmatprep.subr.mxu0 0.0
  %1145 = vmatpush1.msra.mxu0 0.0
  %1146 = vmatprep.subr.mxu0 0.0
  %1147 = vmatpush1.msra.mxu0 0.0
  %1148 = vmatprep.subr.mxu0 0.0
  %1149 = vmatpush1.msra.mxu0 0.0
  %1150 = vmatprep.subr.mxu0 0.0
  %1151 = vmatpush1.msra.mxu0 0.0
  %1152 = vmatprep.subr.mxu0 0.0
  %1153 = vmatpush1.msra.mxu0 0.0
  %1154 = vmatprep.subr.mxu0 0.0
  %1155 = vmatpush1.msra.mxu0 0.0
  %1156 = vmatprep.subr.mxu0 0.0
  %1157 = vmatpush1.msra.mxu0 0.0
  %1158 = vmatprep.subr.mxu0 0.0
  %1159 = vmatpush1.msra.mxu0 0.0
  %1160 = vmatprep.subr.mxu0 0.0
  %1161 = vmatpush1.msra.mxu0 0.0
  %1162 = vmatprep.subr.mxu0 0.0
  %1163 = vmatpush1.msra.mxu0 0.0
  %1164 = vmatprep.subr.mxu0 0.0
  %1165 = vmatpush1.msra.mxu0 0.0
  %1166 = vmatprep.subr.mxu0 0.0
  %1167 = vmatpush1.msra.mxu0 0.0
  %1168 = vmatprep.subr.mxu0 0.0
  %1169 = vmatpush1.msra.mxu0 0.0
  %1170 = vmatprep.subr.mxu0 0.0
  %1171 = vmatpush1.msra.mxu0 0.0
  %1172 = vmatprep.subr.mxu0 0.0
  %1173 = vmatpush1.msra.mxu0 0.0
  %1174 = vmatprep.subr.mxu0 0.0
  %1175 = vmatpush1.msra.mxu0 0.0
  %1176 = vmatprep.subr.mxu0 0.0
  %1177 = vmatpush1.msra.mxu0 0.0
  %1178 = vmatprep.subr.mxu0 0.0
  %1179 = vmatpush1.msra.mxu0 0.0
  %1180 = vmatprep.subr.mxu0 0.0
  %1181 = vmatpush1.msra.mxu0 0.0
  %1182 = vmatprep.subr.mxu0 0.0
  %1183 = vmatpush1.msra.mxu0 0.0
  %1184 = vmatprep.subr.mxu0 0.0
  %1185 = vmatpush1.msra.mxu0 0.0
  %1186 = vmatprep.subr.mxu0 0.0
  %1187 = vmatpush1.msra.mxu0 0.0
  %1188 = vmatprep.mubr.f32.mxu0 0.0
  %1189 = vmatmul.mubr.f32.gmra.mrb[0].mxu0 %v1122
  %v1190 = vpop.f32.mrb[0].mxu0
  %v1191 = vadd.f32 0.0, %v1190
  %v1192 = vpop.f32.mrb[0].mxu0
  %1193 = vdwg.mxu0
  %v1195 = vsel %vm236, %v343, 0
  %1197 = vmatprep.subr.mxu0 0.0
  %1198 = vmatpush1.xpose.msra.mxu0 %v567
  %1199 = vmatprep.subr.mxu0 0.0
  %1200 = vmatpush1.xpose.msra.mxu0 0.0
  %1201 = vmatprep.subr.mxu0 0.0
  %1202 = vmatpush1.xpose.msra.mxu0 0.0
  %1203 = vmatprep.subr.mxu0 0.0
  %1204 = vmatpush1.xpose.msra.mxu0 0.0
  %1205 = vmatprep.subr.mxu0 0.0
  %1206 = vmatpush1.xpose.msra.mxu0 0.0
  %1207 = vmatprep.subr.mxu0 0.0
  %1208 = vmatpush1.xpose.msra.mxu0 0.0
  %1209 = vmatprep.subr.mxu0 0.0
  %1210 = vmatpush1.xpose.msra.mxu0 0.0
  %1211 = vmatprep.subr.mxu0 0.0
  %1212 = vmatpush1.xpose.msra.mxu0 0.0
  %1213 = vmatprep.subr.mxu0 0.0
  %1214 = vmatpush1.xpose.msra.mxu0 0.0
  %1215 = vmatprep.subr.mxu0 0.0
  %1216 = vmatpush1.xpose.msra.mxu0 0.0
  %1217 = vmatprep.subr.mxu0 0.0
  %1218 = vmatpush1.xpose.msra.mxu0 0.0
  %1219 = vmatprep.subr.mxu0 0.0
  %1220 = vmatpush1.xpose.msra.mxu0 0.0
  %1221 = vmatprep.subr.mxu0 0.0
  %1222 = vmatpush1.xpose.msra.mxu0 0.0
  %1223 = vmatprep.subr.mxu0 0.0
  %1224 = vmatpush1.xpose.msra.mxu0 0.0
  %1225 = vmatprep.subr.mxu0 0.0
  %1226 = vmatpush1.xpose.msra.mxu0 0.0
  %1227 = vmatprep.subr.mxu0 0.0
  %1228 = vmatpush1.xpose.msra.mxu0 0.0
  %1229 = vmatprep.subr.mxu0 0.0
  %1230 = vmatpush1.xpose.msra.mxu0 0.0
  %1231 = vmatprep.subr.mxu0 0.0
  %1232 = vmatpush1.xpose.msra.mxu0 0.0
  %1233 = vmatprep.subr.mxu0 0.0
  %1234 = vmatpush1.xpose.msra.mxu0 0.0
  %1235 = vmatprep.subr.mxu0 0.0
  %1236 = vmatpush1.xpose.msra.mxu0 0.0
  %1237 = vmatprep.subr.mxu0 0.0
  %1238 = vmatpush1.xpose.msra.mxu0 0.0
  %1239 = vmatprep.subr.mxu0 0.0
  %1240 = vmatpush1.xpose.msra.mxu0 0.0
  %1241 = vmatprep.subr.mxu0 0.0
  %1242 = vmatpush1.xpose.msra.mxu0 0.0
  %1243 = vmatprep.subr.mxu0 0.0
  %1244 = vmatpush1.xpose.msra.mxu0 0.0
  %1245 = vmatprep.subr.mxu0 0.0
  %1246 = vmatpush1.xpose.msra.mxu0 0.0
  %1247 = vmatprep.subr.mxu0 0.0
  %1248 = vmatpush1.xpose.msra.mxu0 0.0
  %1249 = vmatprep.subr.mxu0 0.0
  %1250 = vmatpush1.xpose.msra.mxu0 0.0
  %1251 = vmatprep.subr.mxu0 0.0
  %1252 = vmatpush1.xpose.msra.mxu0 0.0
  %1253 = vmatprep.subr.mxu0 0.0
  %1254 = vmatpush1.xpose.msra.mxu0 0.0
  %1255 = vmatprep.subr.mxu0 0.0
  %1256 = vmatpush1.xpose.msra.mxu0 0.0
  %1257 = vmatprep.subr.mxu0 0.0
  %1258 = vmatpush1.xpose.msra.mxu0 0.0
  %1259 = vmatprep.subr.mxu0 0.0
  %1260 = vmatpush1.xpose.msra.mxu0 0.0
  %1261 = vmatprep.mubr.f32.mxu0 0.0
  %1262 = vmatmul.mubr.f32.gmra.mrb[0].mxu0 %v1195
  %v1263 = vpop.f32.mrb[0].mxu0
  %v1264 = vadd.f32 0.0, %v1263
  %v1265 = vpop.f32.mrb[0].mxu0
  %1266 = vdwg.mxu0
  %1267 = vmatprep.subr.mxu0 0.0
  %1268 = vmatpush1.xpose.msra.mxu0 %v643
  %1269 = vmatprep.subr.mxu0 0.0
  %1270 = vmatpush1.xpose.msra.mxu0 0.0
  %1271 = vmatprep.subr.mxu0 0.0
  %1272 = vmatpush1.xpose.msra.mxu0 0.0
  %1273 = vmatprep.subr.mxu0 0.0
  %1274 = vmatpush1.xpose.msra.mxu0 0.0
  %1275 = vmatprep.subr.mxu0 0.0
  %1276 = vmatpush1.xpose.msra.mxu0 0.0
  %1277 = vmatprep.subr.mxu0 0.0
  %1278 = vmatpush1.xpose.msra.mxu0 0.0
  %1279 = vmatprep.subr.mxu0 0.0
  %1280 = vmatpush1.xpose.msra.mxu0 0.0
  %1281 = vmatprep.subr.mxu0 0.0
  %1282 = vmatpush1.xpose.msra.mxu0 0.0
  %1283 = vmatprep.subr.mxu0 0.0
  %1284 = vmatpush1.xpose.msra.mxu0 0.0
  %1285 = vmatprep.subr.mxu0 0.0
  %1286 = vmatpush1.xpose.msra.mxu0 0.0
  %1287 = vmatprep.subr.mxu0 0.0
  %1288 = vmatpush1.xpose.msra.mxu0 0.0
  %1289 = vmatprep.subr.mxu0 0.0
  %1290 = vmatpush1.xpose.msra.mxu0 0.0
  %1291 = vmatprep.subr.mxu0 0.0
  %1292 = vmatpush1.xpose.msra.mxu0 0.0
  %1293 = vmatprep.subr.mxu0 0.0
  %1294 = vmatpush1.xpose.msra.mxu0 0.0
  %1295 = vmatprep.subr.mxu0 0.0
  %1296 = vmatpush1.xpose.msra.mxu0 0.0
  %1297 = vmatprep.subr.mxu0 0.0
  %1298 = vmatpush1.xpose.msra.mxu0 0.0
  %1299 = vmatprep.subr.mxu0 0.0
  %1300 = vmatpush1.xpose.msra.mxu0 0.0
  %1301 = vmatprep.subr.mxu0 0.0
  %1302 = vmatpush1.xpose.msra.mxu0 0.0
  %1303 = vmatprep.subr.mxu0 0.0
  %1304 = vmatpush1.xpose.msra.mxu0 0.0
  %1305 = vmatprep.subr.mxu0 0.0
  %1306 = vmatpush1.xpose.msra.mxu0 0.0
  %1307 = vmatprep.subr.mxu0 0.0
  %1308 = vmatpush1.xpose.msra.mxu0 0.0
  %1309 = vmatprep.subr.mxu0 0.0
  %1310 = vmatpush1.xpose.msra.mxu0 0.0
  %1311 = vmatprep.subr.mxu0 0.0
  %1312 = vmatpush1.xpose.msra.mxu0 0.0
  %1313 = vmatprep.subr.mxu0 0.0
  %1314 = vmatpush1.xpose.msra.mxu0 0.0
  %1315 = vmatprep.subr.mxu0 0.0
  %1316 = vmatpush1.xpose.msra.mxu0 0.0
  %1317 = vmatprep.subr.mxu0 0.0
  %1318 = vmatpush1.xpose.msra.mxu0 0.0
  %1319 = vmatprep.subr.mxu0 0.0
  %1320 = vmatpush1.xpose.msra.mxu0 0.0
  %1321 = vmatprep.subr.mxu0 0.0
  %1322 = vmatpush1.xpose.msra.mxu0 0.0
  %1323 = vmatprep.subr.mxu0 0.0
  %1324 = vmatpush1.xpose.msra.mxu0 0.0
  %1325 = vmatprep.subr.mxu0 0.0
  %1326 = vmatpush1.xpose.msra.mxu0 0.0
  %1327 = vmatprep.subr.mxu0 0.0
  %1328 = vmatpush1.xpose.msra.mxu0 0.0
  %1329 = vmatprep.subr.mxu0 0.0
  %1330 = vmatpush1.xpose.msra.mxu0 0.0
  %1331 = vmatprep.mubr.f32.mxu0 0.0
  %1332 = vmatmul.mubr.f32.gmra.mrb[0].mxu0 %v1195
  %v1333 = vpop.f32.mrb[0].mxu0
  %v1334 = vadd.f32 0.0, %v1333
  %v1335 = vpop.f32.mrb[0].mxu0
  %1336 = vdwg.mxu0
  %vm1337 = vcmask 60416
  %v1338 = vsel %vm1337, %v1264, -inf
  %1339 = vmax.xlane.f32.xlu0 %v1338
  %v1340 = vpop.xlane.xlu0 %1339
  %v1341 = vsel %vm1337, %v1334, -inf
  %1342 = vmax.xlane.f32.xlu0 %v1341
  %v1343 = vpop.xlane.xlu0 %1342
  %v1344 = vsub.f32 %v1264, %v1340
  %v1345 = vsub.f32 %v1334, %v1343
  %v1346 = vmul.f32 %v1344, 1.442695
  %v1347 = vpow.pop %v1346
  %v1348 = vmul.f32 %v1345, 1.442695
  %v1349 = vpow.pop %v1348
  %v1350 = vsel %vm1337, %v1347, 0.0
  %1351 = vadd.xlane.f32.xlu0 %v1350
  %v1352 = vpop.xlane.xlu0 %1351
  %v1353 = vsel %vm1337, %v1349, 0.0
  %1354 = vadd.xlane.f32.xlu0 %v1353
  %v1355 = vpop.xlane.xlu0 %1354
  %v1356 = vrcp.pop %v1352
  %v1357 = vmul.f32 %v1347, %v1356
  %v1358 = vrcp.pop %v1355
  %v1359 = vmul.f32 %v1349, %v1358
  %v1361 = vsel %vm559, %v1357, 0
  %1363 = vmatprep.subr.mxu0 0.0
  %1364 = vmatpush1.msra.mxu0 %v339
  %1365 = vmatprep.subr.mxu0 0.0
  %1366 = vmatpush1.msra.mxu0 0.0
  %1367 = vmatprep.subr.mxu0 0.0
  %1368 = vmatpush1.msra.mxu0 0.0
  %1369 = vmatprep.subr.mxu0 0.0
  %1370 = vmatpush1.msra.mxu0 0.0
  %1371 = vmatprep.subr.mxu0 0.0
  %1372 = vmatpush1.msra.mxu0 0.0
  %1373 = vmatprep.subr.mxu0 0.0
  %1374 = vmatpush1.msra.mxu0 0.0
  %1375 = vmatprep.subr.mxu0 0.0
  %1376 = vmatpush1.msra.mxu0 0.0
  %1377 = vmatprep.subr.mxu0 0.0
  %1378 = vmatpush1.msra.mxu0 0.0
  %1379 = vmatprep.subr.mxu0 0.0
  %1380 = vmatpush1.msra.mxu0 0.0
  %1381 = vmatprep.subr.mxu0 0.0
  %1382 = vmatpush1.msra.mxu0 0.0
  %1383 = vmatprep.subr.mxu0 0.0
  %1384 = vmatpush1.msra.mxu0 0.0
  %1385 = vmatprep.subr.mxu0 0.0
  %1386 = vmatpush1.msra.mxu0 0.0
  %1387 = vmatprep.subr.mxu0 0.0
  %1388 = vmatpush1.msra.mxu0 0.0
  %1389 = vmatprep.subr.mxu0 0.0
  %1390 = vmatpush1.msra.mxu0 0.0
  %1391 = vmatprep.subr.mxu0 0.0
  %1392 = vmatpush1.msra.mxu0 0.0
  %1393 = vmatprep.subr.mxu0 0.0
  %1394 = vmatpush1.msra.mxu0 0.0
  %1395 = vmatprep.subr.mxu0 0.0
  %1396 = vmatpush1.msra.mxu0 0.0
  %1397 = vmatprep.subr.mxu0 0.0
  %1398 = vmatpush1.msra.mxu0 0.0
  %1399 = vmatprep.subr.mxu0 0.0
  %1400 = vmatpush1.msra.mxu0 0.0
  %1401 = vmatprep.subr.mxu0 0.0
  %1402 = vmatpush1.msra.mxu0 0.0
  %1403 = vmatprep.subr.mxu0 0.0
  %1404 = vmatpush1.msra.mxu0 0.0
  %1405 = vmatprep.subr.mxu0 0.0
  %1406 = vmatpush1.msra.mxu0 0.0
  %1407 = vmatprep.subr.mxu0 0.0
  %1408 = vmatpush1.msra.mxu0 0.0
  %1409 = vmatprep.subr.mxu0 0.0
  %1410 = vmatpush1.msra.mxu0 0.0
  %1411 = vmatprep.subr.mxu0 0.0
  %1412 = vmatpush1.msra.mxu0 0.0
  %1413 = vmatprep.subr.mxu0 0.0
  %1414 = vmatpush1.msra.mxu0 0.0
  %1415 = vmatprep.subr.mxu0 0.0
  %1416 = vmatpush1.msra.mxu0 0.0
  %1417 = vmatprep.subr.mxu0 0.0
  %1418 = vmatpush1.msra.mxu0 0.0
  %1419 = vmatprep.subr.mxu0 0.0
  %1420 = vmatpush1.msra.mxu0 0.0
  %1421 = vmatprep.subr.mxu0 0.0
  %1422 = vmatpush1.msra.mxu0 0.0
  %1423 = vmatprep.subr.mxu0 0.0
  %1424 = vmatpush1.msra.mxu0 0.0
  %1425 = vmatprep.subr.mxu0 0.0
  %1426 = vmatpush1.msra.mxu0 0.0
  %1427 = vmatprep.mubr.f32.mxu0 0.0
  %1428 = vmatmul.mubr.f32.gmra.mrb[0].mxu0 %v1361
  %v1429 = vpop.f32.mrb[0].mxu0
  %v1430 = vadd.f32 0.0, %v1429
  %v1431 = vpop.f32.mrb[0].mxu0
  %1432 = vdwg.mxu0
  %v1434 = vsel %vm559, %v1359, 0
  %1436 = vmatprep.subr.mxu0 0.0
  %1437 = vmatpush1.msra.mxu0 %v340
  %1438 = vmatprep.subr.mxu0 0.0
  %1439 = vmatpush1.msra.mxu0 0.0
  %1440 = vmatprep.subr.mxu0 0.0
  %1441 = vmatpush1.msra.mxu0 0.0
  %1442 = vmatprep.subr.mxu0 0.0
  %1443 = vmatpush1.msra.mxu0 0.0
  %1444 = vmatprep.subr.mxu0 0.0
  %1445 = vmatpush1.msra.mxu0 0.0
  %1446 = vmatprep.subr.mxu0 0.0
  %1447 = vmatpush1.msra.mxu0 0.0
  %1448 = vmatprep.subr.mxu0 0.0
  %1449 = vmatpush1.msra.mxu0 0.0
  %1450 = vmatprep.subr.mxu0 0.0
  %1451 = vmatpush1.msra.mxu0 0.0
  %1452 = vmatprep.subr.mxu0 0.0
  %1453 = vmatpush1.msra.mxu0 0.0
  %1454 = vmatprep.subr.mxu0 0.0
  %1455 = vmatpush1.msra.mxu0 0.0
  %1456 = vmatprep.subr.mxu0 0.0
  %1457 = vmatpush1.msra.mxu0 0.0
  %1458 = vmatprep.subr.mxu0 0.0
  %1459 = vmatpush1.msra.mxu0 0.0
  %1460 = vmatprep.subr.mxu0 0.0
  %1461 = vmatpush1.msra.mxu0 0.0
  %1462 = vmatprep.subr.mxu0 0.0
  %1463 = vmatpush1.msra.mxu0 0.0
  %1464 = vmatprep.subr.mxu0 0.0
  %1465 = vmatpush1.msra.mxu0 0.0
  %1466 = vmatprep.subr.mxu0 0.0
  %1467 = vmatpush1.msra.mxu0 0.0
  %1468 = vmatprep.subr.mxu0 0.0
  %1469 = vmatpush1.msra.mxu0 0.0
  %1470 = vmatprep.subr.mxu0 0.0
  %1471 = vmatpush1.msra.mxu0 0.0
  %1472 = vmatprep.subr.mxu0 0.0
  %1473 = vmatpush1.msra.mxu0 0.0
  %1474 = vmatprep.subr.mxu0 0.0
  %1475 = vmatpush1.msra.mxu0 0.0
  %1476 = vmatprep.subr.mxu0 0.0
  %1477 = vmatpush1.msra.mxu0 0.0
  %1478 = vmatprep.subr.mxu0 0.0
  %1479 = vmatpush1.msra.mxu0 0.0
  %1480 = vmatprep.subr.mxu0 0.0
  %1481 = vmatpush1.msra.mxu0 0.0
  %1482 = vmatprep.subr.mxu0 0.0
  %1483 = vmatpush1.msra.mxu0 0.0
  %1484 = vmatprep.subr.mxu0 0.0
  %1485 = vmatpush1.msra.mxu0 0.0
  %1486 = vmatprep.subr.mxu0 0.0
  %1487 = vmatpush1.msra.mxu0 0.0
  %1488 = vmatprep.subr.mxu0 0.0
  %1489 = vmatpush1.msra.mxu0 0.0
  %1490 = vmatprep.subr.mxu0 0.0
  %1491 = vmatpush1.msra.mxu0 0.0
  %1492 = vmatprep.subr.mxu0 0.0
  %1493 = vmatpush1.msra.mxu0 0.0
  %1494 = vmatprep.subr.mxu0 0.0
  %1495 = vmatpush1.msra.mxu0 0.0
  %1496 = vmatprep.subr.mxu0 0.0
  %1497 = vmatpush1.msra.mxu0 0.0
  %1498 = vmatprep.subr.mxu0 0.0
  %1499 = vmatpush1.msra.mxu0 0.0
  %1500 = vmatprep.mubr.f32.mxu0 0.0
  %1501 = vmatmul.mubr.f32.gmra.mrb[0].mxu0 %v1434
  %v1502 = vpop.f32.mrb[0].mxu0
  %v1503 = vadd.f32 0.0, %v1502
  %v1504 = vpop.f32.mrb[0].mxu0
  %1505 = vdwg.mxu0
  %1506 = vrot.lane.b32.xlu0 %v737, 8
  %v1507 = vpop.permute.xlu0 %1506
  %1508 = vrot.lane.b32.xlu0 %v739, 8
  %v1509 = vpop.permute.xlu0 %1508
  %1512 = vrot.lane.b32.xlu0 %v1045, 16
  %v1513 = vpop.permute.xlu0 %1512
  %1514 = vrot.lane.b32.xlu0 %v1047, 16
  %v1515 = vpop.permute.xlu0 %1514
  %v1518 = vsel %vm559, %v557, %v1507
  %v1519 = vsel %vm559, %v558, %v1509
  %vm1520 = vcmask 130048
  %v1521 = vsel %vm1520, %v1518, %v1513
  %v1522 = vsel %vm1520, %v1519, %v1515
  %vm1523 = vcmask 195584
  %1524 = vst.msk [vmem:[%s25] sm:$0xff] %vm1523, %v1521
  %1525 = vst.msk [vmem:[%s25 + $0x8] sm:$0xff] %vm1523, %v1522
  %v1526 = vld [vmem:[%s1] sm:$0xf]
  %1527 = vset.pattern.permute.xlu0 0
  %1528 = vperm.xlu0 %1527, %v1526
  %v1529 = vpop.permute.xlu0 %1528
  %vm1530 = vcmp.eq.s32.totalorder %v91, %v1529
  %v1531 = vsel %vm1530, 1, 0
  %v1532 = vcvt.s32.f32 %v1531
  %v1533 = vld [vmem:[%s8] sm:$0x3f]
  %vm1534 = vcmask 48128
  %v1536 = vsel %vm1534, %v1532, 0
  %vm1538 = vcmask 1045504
  %v1540 = vsel %vm1538, %v1533, 0
  %1542 = vmatprep.subr.mxu0 0.0
  %1543 = vmatpush1.msra.mxu0 %v1540
  %1544 = vmatprep.subr.mxu0 0.0
  %1545 = vmatpush1.msra.mxu0 0.0
  %1546 = vmatprep.subr.mxu0 0.0
  %1547 = vmatpush1.msra.mxu0 0.0
  %1548 = vmatprep.subr.mxu0 0.0
  %1549 = vmatpush1.msra.mxu0 0.0
  %1550 = vmatprep.subr.mxu0 0.0
  %1551 = vmatpush1.msra.mxu0 0.0
  %1552 = vmatprep.subr.mxu0 0.0
  %1553 = vmatpush1.msra.mxu0 0.0
  %1554 = vmatprep.subr.mxu0 0.0
  %1555 = vmatpush1.msra.mxu0 0.0
  %1556 = vmatprep.subr.mxu0 0.0
  %1557 = vmatpush1.msra.mxu0 0.0
  %1558 = vmatprep.subr.mxu0 0.0
  %1559 = vmatpush1.msra.mxu0 0.0
  %1560 = vmatprep.subr.mxu0 0.0
  %1561 = vmatpush1.msra.mxu0 0.0
  %1562 = vmatprep.subr.mxu0 0.0
  %1563 = vmatpush1.msra.mxu0 0.0
  %1564 = vmatprep.subr.mxu0 0.0
  %1565 = vmatpush1.msra.mxu0 0.0
  %1566 = vmatprep.subr.mxu0 0.0
  %1567 = vmatpush1.msra.mxu0 0.0
  %1568 = vmatprep.subr.mxu0 0.0
  %1569 = vmatpush1.msra.mxu0 0.0
  %1570 = vmatprep.subr.mxu0 0.0
  %1571 = vmatpush1.msra.mxu0 0.0
  %1572 = vmatprep.subr.mxu0 0.0
  %1573 = vmatpush1.msra.mxu0 0.0
  %1574 = vmatprep.subr.mxu0 0.0
  %1575 = vmatpush1.msra.mxu0 0.0
  %1576 = vmatprep.subr.mxu0 0.0
  %1577 = vmatpush1.msra.mxu0 0.0
  %1578 = vmatprep.subr.mxu0 0.0
  %1579 = vmatpush1.msra.mxu0 0.0
  %1580 = vmatprep.subr.mxu0 0.0
  %1581 = vmatpush1.msra.mxu0 0.0
  %1582 = vmatprep.subr.mxu0 0.0
  %1583 = vmatpush1.msra.mxu0 0.0
  %1584 = vmatprep.subr.mxu0 0.0
  %1585 = vmatpush1.msra.mxu0 0.0
  %1586 = vmatprep.subr.mxu0 0.0
  %1587 = vmatpush1.msra.mxu0 0.0
  %1588 = vmatprep.subr.mxu0 0.0
  %1589 = vmatpush1.msra.mxu0 0.0
  %1590 = vmatprep.subr.mxu0 0.0
  %1591 = vmatpush1.msra.mxu0 0.0
  %1592 = vmatprep.subr.mxu0 0.0
  %1593 = vmatpush1.msra.mxu0 0.0
  %1594 = vmatprep.subr.mxu0 0.0
  %1595 = vmatpush1.msra.mxu0 0.0
  %1596 = vmatprep.subr.mxu0 0.0
  %1597 = vmatpush1.msra.mxu0 0.0
  %1598 = vmatprep.subr.mxu0 0.0
  %1599 = vmatpush1.msra.mxu0 0.0
  %1600 = vmatprep.subr.mxu0 0.0
  %1601 = vmatpush1.msra.mxu0 0.0
  %1602 = vmatprep.subr.mxu0 0.0
  %1603 = vmatpush1.msra.mxu0 0.0
  %1604 = vmatprep.subr.mxu0 0.0
  %1605 = vmatpush1.msra.mxu0 0.0
  %1606 = vmatprep.mubr.f32.mxu0 0.0
  %1607 = vmatmul.mubr.f32.gmra.mrb[0].mxu0 %v1536
  %v1608 = vpop.f32.mrb[0].mxu0
  %v1609 = vadd.f32 0.0, %v1608
  %v1610 = vpop.f32.mrb[0].mxu0
  %1611 = vdwg.mxu0
  %v1612 = vmul.f32 %v810, %v562
  %v1613 = vmul.f32 %v883, %v565
  %v1614 = vld [vmem:[%s9] sm:$0x7f]
  %1616 = vset.pattern.permute.xlu0 0
  %1617 = vperm.xlu0 %1616, %v1614
  %v1618 = vpop.permute.xlu0 %1617
  %v1619 = vrot.slane %v1618, 7
  %v1621 = vmul.f32 %v1612, %v1619
  %v1622 = vmul.f32 %v1613, %v1619
  %v1625 = vrot.slane %v1621, 1
  %v1626 = vrot.slane %v1622, 1
  %vm1629 = vcmask 260096
  %v1630 = vsel %vm1629, %v1625, 0.0
  %v1631 = vrot.slane %v1630, 4
  %v1632 = vadd.f32 %v1630, %v1631
  %v1633 = vrot.slane %v1632, 2
  %v1634 = vadd.f32 %v1632, %v1633
  %v1635 = vrot.slane %v1634, 1
  %v1636 = vadd.f32 %v1634, %v1635
  %v1637 = vsel %vm1629, %v1626, 0.0
  %v1638 = vrot.slane %v1637, 4
  %v1639 = vadd.f32 %v1637, %v1638
  %v1640 = vrot.slane %v1639, 2
  %v1641 = vadd.f32 %v1639, %v1640
  %v1642 = vrot.slane %v1641, 1
  %v1643 = vadd.f32 %v1641, %v1642
  %v1644 = vld [vmem:[#allocation2] sm:$0x1]
  %v1646 = vlaneseq
  %v1647 = vshrl.u32 %v1646, 7
  %v1648 = vsub.s32 0, %v1647
  %v1649 = vrot.slane %v1644, %v1648
  %1650 = vset.pattern.permute.xlu0 0
  %1651 = vperm.xlu0 %1650, %v1649
  %v1652 = vpop.permute.xlu0 %1651
  %v1654 = vadd.f32 %v1636, %v1652
  %v1655 = vadd.f32 %v1643, %v1652
  %v1656 = vld [vmem:[%s11] sm:$0xff]
  %v1657 = vld [vmem:[%s11 + $0x8] sm:$0xff]
  %v1658 = vld [vmem:[%s11 + $0x10] sm:$0xff]
  %v1659 = vld [vmem:[%s11 + $0x18] sm:$0xff]
  %v1660 = vld [vmem:[%s12] sm:$0xff]
  %v1661 = vld [vmem:[%s12 + $0x8] sm:$0xff]
  %v1662 = vld [vmem:[%s12 + $0x10] sm:$0xff]
  %v1663 = vld [vmem:[%s12 + $0x18] sm:$0xff]
  %v1664 = vld [vmem:[%s13] sm:$0x1]
  %v1665 = vld [vmem:[%s14] sm:$0x1]
  %v1667 = vlaneseq
  %v1668 = vshrl.u32 %v1667, 7
  %v1669 = vsub.s32 0, %v1668
  %v1670 = vrot.slane %v1665, %v1669
  %vm1674 = vcmask 1041409
  %v1675 = vsel %vm1674, %v1655, %v1654
  %v1676 = vsel %vm236, %v1675, 0
  %1678 = vmatprep.subr.mxu0 0.0
  %1679 = vmatpush1.msra.mxu0 %v1656
  %1680 = vmatprep.subr.mxu0 0.0
  %1681 = vmatpush1.msra.mxu0 %v1657
  %1682 = vmatprep.subr.mxu0 0.0
  %1683 = vmatpush1.msra.mxu0 %v1658
  %1684 = vmatprep.subr.mxu0 0.0
  %1685 = vmatpush1.msra.mxu0 %v1659
  %1686 = vmatprep.subr.mxu0 0.0
  %1687 = vmatpush1.msra.mxu0 0.0
  %1688 = vmatprep.subr.mxu0 0.0
  %1689 = vmatpush1.msra.mxu0 0.0
  %1690 = vmatprep.subr.mxu0 0.0
  %1691 = vmatpush1.msra.mxu0 0.0
  %1692 = vmatprep.subr.mxu0 0.0
  %1693 = vmatpush1.msra.mxu0 0.0
  %1694 = vmatprep.subr.mxu0 0.0
  %1695 = vmatpush1.msra.mxu0 0.0
  %1696 = vmatprep.subr.mxu0 0.0
  %1697 = vmatpush1.msra.mxu0 0.0
  %1698 = vmatprep.subr.mxu0 0.0
  %1699 = vmatpush1.msra.mxu0 0.0
  %1700 = vmatprep.subr.mxu0 0.0
  %1701 = vmatpush1.msra.mxu0 0.0
  %1702 = vmatprep.subr.mxu0 0.0
  %1703 = vmatpush1.msra.mxu0 0.0
  %1704 = vmatprep.subr.mxu0 0.0
  %1705 = vmatpush1.msra.mxu0 0.0
  %1706 = vmatprep.subr.mxu0 0.0
  %1707 = vmatpush1.msra.mxu0 0.0
  %1708 = vmatprep.subr.mxu0 0.0
  %1709 = vmatpush1.msra.mxu0 0.0
  %1710 = vmatprep.subr.mxu0 0.0
  %1711 = vmatpush1.msra.mxu0 0.0
  %1712 = vmatprep.subr.mxu0 0.0
  %1713 = vmatpush1.msra.mxu0 0.0
  %1714 = vmatprep.subr.mxu0 0.0
  %1715 = vmatpush1.msra.mxu0 0.0
  %1716 = vmatprep.subr.mxu0 0.0
  %1717 = vmatpush1.msra.mxu0 0.0
  %1718 = vmatprep.subr.mxu0 0.0
  %1719 = vmatpush1.msra.mxu0 0.0
  %1720 = vmatprep.subr.mxu0 0.0
  %1721 = vmatpush1.msra.mxu0 0.0
  %1722 = vmatprep.subr.mxu0 0.0
  %1723 = vmatpush1.msra.mxu0 0.0
  %1724 = vmatprep.subr.mxu0 0.0
  %1725 = vmatpush1.msra.mxu0 0.0
  %1726 = vmatprep.subr.mxu0 0.0
  %1727 = vmatpush1.msra.mxu0 0.0
  %1728 = vmatprep.subr.mxu0 0.0
  %1729 = vmatpush1.msra.mxu0 0.0
  %1730 = vmatprep.subr.mxu0 0.0
  %1731 = vmatpush1.msra.mxu0 0.0
  %1732 = vmatprep.subr.mxu0 0.0
  %1733 = vmatpush1.msra.mxu0 0.0
  %1734 = vmatprep.subr.mxu0 0.0
  %1735 = vmatpush1.msra.mxu0 0.0
  %1736 = vmatprep.subr.mxu0 0.0
  %1737 = vmatpush1.msra.mxu0 0.0
  %1738 = vmatprep.subr.mxu0 0.0
  %1739 = vmatpush1.msra.mxu0 0.0
  %1740 = vmatprep.subr.mxu0 0.0
  %1741 = vmatpush1.msra.mxu0 0.0
  %1742 = vmatprep.mubr.f32.mxu0 0.0
  %1743 = vmatmul.mubr.f32.gmra.mrb[0].mxu0 %v1676
  %v1744 = vpop.f32.mrb[0].mxu0
  %v1745 = vadd.f32 %v1670, %v1744
  %v1746 = vpop.f32.mrb[0].mxu0
  %1747 = vdwg.mxu0
  %v1748 = vxor.u32 %v1745, 2147483648
  %v1749 = vmul.f32 %v1748, 1.442695
  %v1750 = vpow.pop %v1749
  %v1751 = vadd.f32 %v1750, 1.0
  %v1752 = vrcp.pop %v1751
  %v1753 = vmul.f32 1.0, %v1752
  %v1754 = vtanh.pop %v1745
  %v1755 = vmul.f32 %v1753, 0.0
  %1757 = vrot.lane.b32.xlu0 %v1754, 64
  %v1758 = vpop.permute.xlu0 %1757
  %v1760 = vmul.f32 %v1753, %v1758
  %1762 = vrot.lane.b32.xlu0 %v1760, 32
  %v1763 = vpop.permute.xlu0 %1762
  %v1765 = vadd.f32 %v1755, %v1763
  %v1766 = vtanh.pop %v1765
  %1768 = vrot.lane.b32.xlu0 %v1766, 64
  %v1769 = vpop.permute.xlu0 %1768
  %v1771 = vmul.f32 %v1753, %v1769
  %v1773 = vlaneseq
  %v1774 = vshrl.u32 %v1773, 7
  %v1775 = vsub.s32 0, %v1774
  %v1776 = vrot.slane %v1664, %v1775
  %1779 = vrot.lane.b32.xlu0 %v1771, 32
  %v1780 = vpop.permute.xlu0 %1779
  %v1781 = vsel %vm236, %v1780, 0
  %1783 = vmatprep.subr.mxu0 0.0
  %1784 = vmatpush1.msra.mxu0 %v1660
  %1785 = vmatprep.subr.mxu0 0.0
  %1786 = vmatpush1.msra.mxu0 %v1661
  %1787 = vmatprep.subr.mxu0 0.0
  %1788 = vmatpush1.msra.mxu0 %v1662
  %1789 = vmatprep.subr.mxu0 0.0
  %1790 = vmatpush1.msra.mxu0 %v1663
  %1791 = vmatprep.subr.mxu0 0.0
  %1792 = vmatpush1.msra.mxu0 0.0
  %1793 = vmatprep.subr.mxu0 0.0
  %1794 = vmatpush1.msra.mxu0 0.0
  %1795 = vmatprep.subr.mxu0 0.0
  %1796 = vmatpush1.msra.mxu0 0.0
  %1797 = vmatprep.subr.mxu0 0.0
  %1798 = vmatpush1.msra.mxu0 0.0
  %1799 = vmatprep.subr.mxu0 0.0
  %1800 = vmatpush1.msra.mxu0 0.0
  %1801 = vmatprep.subr.mxu0 0.0
  %1802 = vmatpush1.msra.mxu0 0.0
  %1803 = vmatprep.subr.mxu0 0.0
  %1804 = vmatpush1.msra.mxu0 0.0
  %1805 = vmatprep.subr.mxu0 0.0
  %1806 = vmatpush1.msra.mxu0 0.0
  %1807 = vmatprep.subr.mxu0 0.0
  %1808 = vmatpush1.msra.mxu0 0.0
  %1809 = vmatprep.subr.mxu0 0.0
  %1810 = vmatpush1.msra.mxu0 0.0
  %1811 = vmatprep.subr.mxu0 0.0
  %1812 = vmatpush1.msra.mxu0 0.0
  %1813 = vmatprep.subr.mxu0 0.0
  %1814 = vmatpush1.msra.mxu0 0.0
  %1815 = vmatprep.subr.mxu0 0.0
  %1816 = vmatpush1.msra.mxu0 0.0
  %1817 = vmatprep.subr.mxu0 0.0
  %1818 = vmatpush1.msra.mxu0 0.0
  %1819 = vmatprep.subr.mxu0 0.0
  %1820 = vmatpush1.msra.mxu0 0.0
  %1821 = vmatprep.subr.mxu0 0.0
  %1822 = vmatpush1.msra.mxu0 0.0
  %1823 = vmatprep.subr.mxu0 0.0
  %1824 = vmatpush1.msra.mxu0 0.0
  %1825 = vmatprep.subr.mxu0 0.0
  %1826 = vmatpush1.msra.mxu0 0.0
  %1827 = vmatprep.subr.mxu0 0.0
  %1828 = vmatpush1.msra.mxu0 0.0
  %1829 = vmatprep.subr.mxu0 0.0
  %1830 = vmatpush1.msra.mxu0 0.0
  %1831 = vmatprep.subr.mxu0 0.0
  %1832 = vmatpush1.msra.mxu0 0.0
  %1833 = vmatprep.subr.mxu0 0.0
  %1834 = vmatpush1.msra.mxu0 0.0
  %1835 = vmatprep.subr.mxu0 0.0
  %1836 = vmatpush1.msra.mxu0 0.0
  %1837 = vmatprep.subr.mxu0 0.0
  %1838 = vmatpush1.msra.mxu0 0.0
  %1839 = vmatprep.subr.mxu0 0.0
  %1840 = vmatpush1.msra.mxu0 0.0
  %1841 = vmatprep.subr.mxu0 0.0
  %1842 = vmatpush1.msra.mxu0 0.0
  %1843 = vmatprep.subr.mxu0 0.0
  %1844 = vmatpush1.msra.mxu0 0.0
  %1845 = vmatprep.subr.mxu0 0.0
  %1846 = vmatpush1.msra.mxu0 0.0
  %1847 = vmatprep.mubr.f32.mxu0 0.0
  %1848 = vmatmul.mubr.f32.gmra.mrb[0].mxu0 %v1781
  %v1849 = vpop.f32.mrb[0].mxu0
  %v1850 = vadd.f32 %v1776, %v1849
  %v1851 = vpop.f32.mrb[0].mxu0
  %1852 = vdwg.mxu0
  %v1853 = vxor.u32 %v1850, 2147483648
  %v1854 = vmul.f32 %v1853, 1.442695
  %v1855 = vpow.pop %v1854
  %v1856 = vadd.f32 %v1855, 1.0
  %v1857 = vrcp.pop %v1856
  %v1858 = vmul.f32 1.0, %v1857
  %v1859 = vtanh.pop %v1850
  %v1860 = vmul.f32 %v1858, %v1765
  %1862 = vrot.lane.b32.xlu0 %v1859, 64
  %v1863 = vpop.permute.xlu0 %1862
  %v1865 = vmul.f32 %v1858, %v1863
  %1867 = vrot.lane.b32.xlu0 %v1865, 32
  %v1868 = vpop.permute.xlu0 %1867
  %v1870 = vadd.f32 %v1860, %v1868
  %v1871 = vtanh.pop %v1870
  %1873 = vrot.lane.b32.xlu0 %v1871, 64
  %v1874 = vpop.permute.xlu0 %1873
  %v1876 = vmul.f32 %v1858, %v1874
  %v1877 = vld [vmem:[%s21] sm:$0xff]
  %v1878 = vld [vmem:[%s21 + $0x8] sm:$0xff]
  %v1879 = vld [vmem:[%s21 + $0x10] sm:$0xff]
  %v1880 = vld [vmem:[%s21 + $0x18] sm:$0xff]
  %v1881 = vld [vmem:[%s22] sm:$0x1]
  %v1883 = vlaneseq
  %v1884 = vshrl.u32 %v1883, 7
  %v1885 = vsub.s32 0, %v1884
  %v1886 = vrot.slane %v1881, %v1885
  %v1889 = vsel %vm236, %v1430, 0
  %1891 = vmatprep.subr.mxu0 0.0
  %1892 = vmatpush1.msra.mxu0 %v1877
  %1893 = vmatprep.subr.mxu0 0.0
  %1894 = vmatpush1.msra.mxu0 %v1878
  %1895 = vmatprep.subr.mxu0 0.0
  %1896 = vmatpush1.msra.mxu0 %v1879
  %1897 = vmatprep.subr.mxu0 0.0
  %1898 = vmatpush1.msra.mxu0 %v1880
  %1899 = vmatprep.subr.mxu0 0.0
  %1900 = vmatpush1.msra.mxu0 0.0
  %1901 = vmatprep.subr.mxu0 0.0
  %1902 = vmatpush1.msra.mxu0 0.0
  %1903 = vmatprep.subr.mxu0 0.0
  %1904 = vmatpush1.msra.mxu0 0.0
  %1905 = vmatprep.subr.mxu0 0.0
  %1906 = vmatpush1.msra.mxu0 0.0
  %1907 = vmatprep.subr.mxu0 0.0
  %1908 = vmatpush1.msra.mxu0 0.0
  %1909 = vmatprep.subr.mxu0 0.0
  %1910 = vmatpush1.msra.mxu0 0.0
  %1911 = vmatprep.subr.mxu0 0.0
  %1912 = vmatpush1.msra.mxu0 0.0
  %1913 = vmatprep.subr.mxu0 0.0
  %1914 = vmatpush1.msra.mxu0 0.0
  %1915 = vmatprep.subr.mxu0 0.0
  %1916 = vmatpush1.msra.mxu0 0.0
  %1917 = vmatprep.subr.mxu0 0.0
  %1918 = vmatpush1.msra.mxu0 0.0
  %1919 = vmatprep.subr.mxu0 0.0
  %1920 = vmatpush1.msra.mxu0 0.0
  %1921 = vmatprep.subr.mxu0 0.0
  %1922 = vmatpush1.msra.mxu0 0.0
  %1923 = vmatprep.subr.mxu0 0.0
  %1924 = vmatpush1.msra.mxu0 0.0
  %1925 = vmatprep.subr.mxu0 0.0
  %1926 = vmatpush1.msra.mxu0 0.0
  %1927 = vmatprep.subr.mxu0 0.0
  %1928 = vmatpush1.msra.mxu0 0.0
  %1929 = vmatprep.subr.mxu0 0.0
  %1930 = vmatpush1.msra.mxu0 0.0
  %1931 = vmatprep.subr.mxu0 0.0
  %1932 = vmatpush1.msra.mxu0 0.0
  %1933 = vmatprep.subr.mxu0 0.0
  %1934 = vmatpush1.msra.mxu0 0.0
  %1935 = vmatprep.subr.mxu0 0.0
  %1936 = vmatpush1.msra.mxu0 0.0
  %1937 = vmatprep.subr.mxu0 0.0
  %1938 = vmatpush1.msra.mxu0 0.0
  %1939 = vmatprep.subr.mxu0 0.0
  %1940 = vmatpush1.msra.mxu0 0.0
  %1941 = vmatprep.subr.mxu0 0.0
  %1942 = vmatpush1.msra.mxu0 0.0
  %1943 = vmatprep.subr.mxu0 0.0
  %1944 = vmatpush1.msra.mxu0 0.0
  %1945 = vmatprep.subr.mxu0 0.0
  %1946 = vmatpush1.msra.mxu0 0.0
  %1947 = vmatprep.subr.mxu0 0.0
  %1948 = vmatpush1.msra.mxu0 0.0
  %1949 = vmatprep.subr.mxu0 0.0
  %1950 = vmatpush1.msra.mxu0 0.0
  %1951 = vmatprep.subr.mxu0 0.0
  %1952 = vmatpush1.msra.mxu0 0.0
  %1953 = vmatprep.subr.mxu0 0.0
  %1954 = vmatpush1.msra.mxu0 0.0
  %1955 = vmatprep.mubr.f32.mxu0 0.0
  %1956 = vmatmul.mubr.f32.gmra.mrb[0].mxu0 %v1889
  %v1957 = vpop.f32.mrb[0].mxu0
  %v1958 = vadd.f32 %v1886, %v1957
  %v1959 = vpop.f32.mrb[0].mxu0
  %1960 = vdwg.mxu0
  %v1962 = vsel %vm236, %v1503, 0
  %1964 = vmatprep.subr.mxu0 0.0
  %1965 = vmatpush1.msra.mxu0 %v1877
  %1966 = vmatprep.subr.mxu0 0.0
  %1967 = vmatpush1.msra.mxu0 %v1878
  %1968 = vmatprep.subr.mxu0 0.0
  %1969 = vmatpush1.msra.mxu0 %v1879
  %1970 = vmatprep.subr.mxu0 0.0
  %1971 = vmatpush1.msra.mxu0 %v1880
  %1972 = vmatprep.subr.mxu0 0.0
  %1973 = vmatpush1.msra.mxu0 0.0
  %1974 = vmatprep.subr.mxu0 0.0
  %1975 = vmatpush1.msra.mxu0 0.0
  %1976 = vmatprep.subr.mxu0 0.0
  %1977 = vmatpush1.msra.mxu0 0.0
  %1978 = vmatprep.subr.mxu0 0.0
  %1979 = vmatpush1.msra.mxu0 0.0
  %1980 = vmatprep.subr.mxu0 0.0
  %1981 = vmatpush1.msra.mxu0 0.0
  %1982 = vmatprep.subr.mxu0 0.0
  %1983 = vmatpush1.msra.mxu0 0.0
  %1984 = vmatprep.subr.mxu0 0.0
  %1985 = vmatpush1.msra.mxu0 0.0
  %1986 = vmatprep.subr.mxu0 0.0
  %1987 = vmatpush1.msra.mxu0 0.0
  %1988 = vmatprep.subr.mxu0 0.0
  %1989 = vmatpush1.msra.mxu0 0.0
  %1990 = vmatprep.subr.mxu0 0.0
  %1991 = vmatpush1.msra.mxu0 0.0
  %1992 = vmatprep.subr.mxu0 0.0
  %1993 = vmatpush1.msra.mxu0 0.0
  %1994 = vmatprep.subr.mxu0 0.0
  %1995 = vmatpush1.msra.mxu0 0.0
  %1996 = vmatprep.subr.mxu0 0.0
  %1997 = vmatpush1.msra.mxu0 0.0
  %1998 = vmatprep.subr.mxu0 0.0
  %1999 = vmatpush1.msra.mxu0 0.0
  %2000 = vmatprep.subr.mxu0 0.0
  %2001 = vmatpush1.msra.mxu0 0.0
  %2002 = vmatprep.subr.mxu0 0.0
  %2003 = vmatpush1.msra.mxu0 0.0
  %2004 = vmatprep.subr.mxu0 0.0
  %2005 = vmatpush1.msra.mxu0 0.0
  %2006 = vmatprep.subr.mxu0 0.0
  %2007 = vmatpush1.msra.mxu0 0.0
  %2008 = vmatprep.subr.mxu0 0.0
  %2009 = vmatpush1.msra.mxu0 0.0
  %2010 = vmatprep.subr.mxu0 0.0
  %2011 = vmatpush1.msra.mxu0 0.0
  %2012 = vmatprep.subr.mxu0 0.0
  %2013 = vmatpush1.msra.mxu0 0.0
  %2014 = vmatprep.subr.mxu0 0.0
  %2015 = vmatpush1.msra.mxu0 0.0
  %2016 = vmatprep.subr.mxu0 0.0
  %2017 = vmatpush1.msra.mxu0 0.0
  %2018 = vmatprep.subr.mxu0 0.0
  %2019 = vmatpush1.msra.mxu0 0.0
  %2020 = vmatprep.subr.mxu0 0.0
  %2021 = vmatpush1.msra.mxu0 0.0
  %2022 = vmatprep.subr.mxu0 0.0
  %2023 = vmatpush1.msra.mxu0 0.0
  %2024 = vmatprep.subr.mxu0 0.0
  %2025 = vmatpush1.msra.mxu0 0.0
  %2026 = vmatprep.subr.mxu0 0.0
  %2027 = vmatpush1.msra.mxu0 0.0
  %2028 = vmatprep.mubr.f32.mxu0 0.0
  %2029 = vmatmul.mubr.f32.gmra.mrb[0].mxu0 %v1962
  %v2030 = vpop.f32.mrb[0].mxu0
  %v2031 = vadd.f32 %v1886, %v2030
  %v2032 = vpop.f32.mrb[0].mxu0
  %2033 = vdwg.mxu0
  %v2035 = vsel %vm236, %v1118, 0
  %2037 = vmatprep.subr.mxu0 0.0
  %2038 = vmatpush1.msra.mxu0 %v1877
  %2039 = vmatprep.subr.mxu0 0.0
  %2040 = vmatpush1.msra.mxu0 %v1878
  %2041 = vmatprep.subr.mxu0 0.0
  %2042 = vmatpush1.msra.mxu0 %v1879
  %2043 = vmatprep.subr.mxu0 0.0
  %2044 = vmatpush1.msra.mxu0 %v1880
  %2045 = vmatprep.subr.mxu0 0.0
  %2046 = vmatpush1.msra.mxu0 0.0
  %2047 = vmatprep.subr.mxu0 0.0
  %2048 = vmatpush1.msra.mxu0 0.0
  %2049 = vmatprep.subr.mxu0 0.0
  %2050 = vmatpush1.msra.mxu0 0.0
  %2051 = vmatprep.subr.mxu0 0.0
  %2052 = vmatpush1.msra.mxu0 0.0
  %2053 = vmatprep.subr.mxu0 0.0
  %2054 = vmatpush1.msra.mxu0 0.0
  %2055 = vmatprep.subr.mxu0 0.0
  %2056 = vmatpush1.msra.mxu0 0.0
  %2057 = vmatprep.subr.mxu0 0.0
  %2058 = vmatpush1.msra.mxu0 0.0
  %2059 = vmatprep.subr.mxu0 0.0
  %2060 = vmatpush1.msra.mxu0 0.0
  %2061 = vmatprep.subr.mxu0 0.0
  %2062 = vmatpush1.msra.mxu0 0.0
  %2063 = vmatprep.subr.mxu0 0.0
  %2064 = vmatpush1.msra.mxu0 0.0
  %2065 = vmatprep.subr.mxu0 0.0
  %2066 = vmatpush1.msra.mxu0 0.0
  %2067 = vmatprep.subr.mxu0 0.0
  %2068 = vmatpush1.msra.mxu0 0.0
  %2069 = vmatprep.subr.mxu0 0.0
  %2070 = vmatpush1.msra.mxu0 0.0
  %2071 = vmatprep.subr.mxu0 0.0
  %2072 = vmatpush1.msra.mxu0 0.0
  %2073 = vmatprep.subr.mxu0 0.0
  %2074 = vmatpush1.msra.mxu0 0.0
  %2075 = vmatprep.subr.mxu0 0.0
  %2076 = vmatpush1.msra.mxu0 0.0
  %2077 = vmatprep.subr.mxu0 0.0
  %2078 = vmatpush1.msra.mxu0 0.0
  %2079 = vmatprep.subr.mxu0 0.0
  %2080 = vmatpush1.msra.mxu0 0.0
  %2081 = vmatprep.subr.mxu0 0.0
  %2082 = vmatpush1.msra.mxu0 0.0
  %2083 = vmatprep.subr.mxu0 0.0
  %2084 = vmatpush1.msra.mxu0 0.0
  %2085 = vmatprep.subr.mxu0 0.0
  %2086 = vmatpush1.msra.mxu0 0.0
  %2087 = vmatprep.subr.mxu0 0.0
  %2088 = vmatpush1.msra.mxu0 0.0
  %2089 = vmatprep.subr.mxu0 0.0
  %2090 = vmatpush1.msra.mxu0 0.0
  %2091 = vmatprep.subr.mxu0 0.0
  %2092 = vmatpush1.msra.mxu0 0.0
  %2093 = vmatprep.subr.mxu0 0.0
  %2094 = vmatpush1.msra.mxu0 0.0
  %2095 = vmatprep.subr.mxu0 0.0
  %2096 = vmatpush1.msra.mxu0 0.0
  %2097 = vmatprep.subr.mxu0 0.0
  %2098 = vmatpush1.msra.mxu0 0.0
  %2099 = vmatprep.subr.mxu0 0.0
  %2100 = vmatpush1.msra.mxu0 0.0
  %2101 = vmatprep.mubr.f32.mxu0 0.0
  %2102 = vmatmul.mubr.f32.gmra.mrb[0].mxu0 %v2035
  %v2103 = vpop.f32.mrb[0].mxu0
  %v2104 = vadd.f32 %v1886, %v2103
  %v2105 = vpop.f32.mrb[0].mxu0
  %2106 = vdwg.mxu0
  %v2108 = vsel %vm236, %v1191, 0
  %2110 = vmatprep.subr.mxu0 0.0
  %2111 = vmatpush1.msra.mxu0 %v1877
  %2112 = vmatprep.subr.mxu0 0.0
  %2113 = vmatpush1.msra.mxu0 %v1878
  %2114 = vmatprep.subr.mxu0 0.0
  %2115 = vmatpush1.msra.mxu0 %v1879
  %2116 = vmatprep.subr.mxu0 0.0
  %2117 = vmatpush1.msra.mxu0 %v1880
  %2118 = vmatprep.subr.mxu0 0.0
  %2119 = vmatpush1.msra.mxu0 0.0
  %2120 = vmatprep.subr.mxu0 0.0
  %2121 = vmatpush1.msra.mxu0 0.0
  %2122 = vmatprep.subr.mxu0 0.0
  %2123 = vmatpush1.msra.mxu0 0.0
  %2124 = vmatprep.subr.mxu0 0.0
  %2125 = vmatpush1.msra.mxu0 0.0
  %2126 = vmatprep.subr.mxu0 0.0
  %2127 = vmatpush1.msra.mxu0 0.0
  %2128 = vmatprep.subr.mxu0 0.0
  %2129 = vmatpush1.msra.mxu0 0.0
  %2130 = vmatprep.subr.mxu0 0.0
  %2131 = vmatpush1.msra.mxu0 0.0
  %2132 = vmatprep.subr.mxu0 0.0
  %2133 = vmatpush1.msra.mxu0 0.0
  %2134 = vmatprep.subr.mxu0 0.0
  %2135 = vmatpush1.msra.mxu0 0.0
  %2136 = vmatprep.subr.mxu0 0.0
  %2137 = vmatpush1.msra.mxu0 0.0
  %2138 = vmatprep.subr.mxu0 0.0
  %2139 = vmatpush1.msra.mxu0 0.0
  %2140 = vmatprep.subr.mxu0 0.0
  %2141 = vmatpush1.msra.mxu0 0.0
  %2142 = vmatprep.subr.mxu0 0.0
  %2143 = vmatpush1.msra.mxu0 0.0
  %2144 = vmatprep.subr.mxu0 0.0
  %2145 = vmatpush1.msra.mxu0 0.0
  %2146 = vmatprep.subr.mxu0 0.0
  %2147 = vmatpush1.msra.mxu0 0.0
  %2148 = vmatprep.subr.mxu0 0.0
  %2149 = vmatpush1.msra.mxu0 0.0
  %2150 = vmatprep.subr.mxu0 0.0
  %2151 = vmatpush1.msra.mxu0 0.0
  %2152 = vmatprep.subr.mxu0 0.0
  %2153 = vmatpush1.msra.mxu0 0.0
  %2154 = vmatprep.subr.mxu0 0.0
  %2155 = vmatpush1.msra.mxu0 0.0
  %2156 = vmatprep.subr.mxu0 0.0
  %2157 = vmatpush1.msra.mxu0 0.0
  %2158 = vmatprep.subr.mxu0 0.0
  %2159 = vmatpush1.msra.mxu0 0.0
  %2160 = vmatprep.subr.mxu0 0.0
  %2161 = vmatpush1.msra.mxu0 0.0
  %2162 = vmatprep.subr.mxu0 0.0
  %2163 = vmatpush1.msra.mxu0 0.0
  %2164 = vmatprep.subr.mxu0 0.0
  %2165 = vmatpush1.msra.mxu0 0.0
  %2166 = vmatprep.subr.mxu0 0.0
  %2167 = vmatpush1.msra.mxu0 0.0
  %2168 = vmatprep.subr.mxu0 0.0
  %2169 = vmatpush1.msra.mxu0 0.0
  %2170 = vmatprep.subr.mxu0 0.0
  %2171 = vmatpush1.msra.mxu0 0.0
  %2172 = vmatprep.subr.mxu0 0.0
  %2173 = vmatpush1.msra.mxu0 0.0
  %2174 = vmatprep.mubr.f32.mxu0 0.0
  %2175 = vmatmul.mubr.f32.gmra.mrb[0].mxu0 %v2108
  %v2176 = vpop.f32.mrb[0].mxu0
  %v2177 = vadd.f32 %v1886, %v2176
  %v2178 = vpop.f32.mrb[0].mxu0
  %2179 = vdwg.mxu0
  %v2180 = vld [vmem:[%s17] sm:$0xff]
  %v2181 = vld [vmem:[%s17 + $0x8] sm:$0xff]
  %v2182 = vld [vmem:[%s17 + $0x10] sm:$0xff]
  %v2183 = vld [vmem:[%s17 + $0x18] sm:$0xff]
  %v2184 = vld [vmem:[%s18] sm:$0x1]
  %v2185 = vld [vmem:[%s19] sm:$0xff]
  %v2186 = vld [vmem:[%s19 + $0x8] sm:$0xff]
  %v2187 = vld [vmem:[%s19 + $0x10] sm:$0xff]
  %v2188 = vld [vmem:[%s19 + $0x18] sm:$0xff]
  %v2189 = vld [vmem:[%s20] sm:$0x1]
  %v2190 = vld [vmem:[%s23] sm:$0x1]
  %v2191 = vld [vmem:[#allocation3] sm:$0x1]
  %s2192 = vtos %v2191
  %v2193 = vld [vmem:[%s15] sm:$0xff]
  %v2194 = vld [vmem:[%s15 + $0x8] sm:$0xff]
  %v2195 = vld [vmem:[%s15 + $0x10] sm:$0xff]
  %v2196 = vld [vmem:[%s15 + $0x18] sm:$0xff]
  %v2197 = vld [vmem:[%s16] sm:$0x1]
  %v2198 = vlaneseq
  %v2199 = vshrl.u32 %v2198, 7
  %vm2200 = vcmp.lt.s32.totalorder %v2199, 2
  %v2201 = vsel %vm2200, 1, 0
  %vm2202 = vcmp.eq.s32.totalorder %v2201, 1
  %v2203 = vsel %vm2202, %v1430, 0.0
  %v2204 = vsel %vm2202, %v1503, 0.0
  %v2205 = vsel %vm2202, %v1958, %v1886
  %v2206 = vsel %vm2202, %v2031, %v1886
  %v2208 = vlaneseq
  %v2209 = vshrl.u32 %v2208, 7
  %v2210 = vsub.s32 0, %v2209
  %v2211 = vrot.slane %v2184, %v2210
  %2213 = vmatprep.subr.mxu0 0.0
  %2214 = vmatpush1.msra.mxu0 %v2180
  %2215 = vmatprep.subr.mxu0 0.0
  %2216 = vmatpush1.msra.mxu0 %v2181
  %2217 = vmatprep.subr.mxu0 0.0
  %2218 = vmatpush1.msra.mxu0 %v2182
  %2219 = vmatprep.subr.mxu0 0.0
  %2220 = vmatpush1.msra.mxu0 %v2183
  %2221 = vmatprep.subr.mxu0 0.0
  %2222 = vmatpush1.msra.mxu0 0.0
  %2223 = vmatprep.subr.mxu0 0.0
  %2224 = vmatpush1.msra.mxu0 0.0
  %2225 = vmatprep.subr.mxu0 0.0
  %2226 = vmatpush1.msra.mxu0 0.0
  %2227 = vmatprep.subr.mxu0 0.0
  %2228 = vmatpush1.msra.mxu0 0.0
  %2229 = vmatprep.subr.mxu0 0.0
  %2230 = vmatpush1.msra.mxu0 0.0
  %2231 = vmatprep.subr.mxu0 0.0
  %2232 = vmatpush1.msra.mxu0 0.0
  %2233 = vmatprep.subr.mxu0 0.0
  %2234 = vmatpush1.msra.mxu0 0.0
  %2235 = vmatprep.subr.mxu0 0.0
  %2236 = vmatpush1.msra.mxu0 0.0
  %2237 = vmatprep.subr.mxu0 0.0
  %2238 = vmatpush1.msra.mxu0 0.0
  %2239 = vmatprep.subr.mxu0 0.0
  %2240 = vmatpush1.msra.mxu0 0.0
  %2241 = vmatprep.subr.mxu0 0.0
  %2242 = vmatpush1.msra.mxu0 0.0
  %2243 = vmatprep.subr.mxu0 0.0
  %2244 = vmatpush1.msra.mxu0 0.0
  %2245 = vmatprep.subr.mxu0 0.0
  %2246 = vmatpush1.msra.mxu0 0.0
  %2247 = vmatprep.subr.mxu0 0.0
  %2248 = vmatpush1.msra.mxu0 0.0
  %2249 = vmatprep.subr.mxu0 0.0
  %2250 = vmatpush1.msra.mxu0 0.0
  %2251 = vmatprep.subr.mxu0 0.0
  %2252 = vmatpush1.msra.mxu0 0.0
  %2253 = vmatprep.subr.mxu0 0.0
  %2254 = vmatpush1.msra.mxu0 0.0
  %2255 = vmatprep.subr.mxu0 0.0
  %2256 = vmatpush1.msra.mxu0 0.0
  %2257 = vmatprep.subr.mxu0 0.0
  %2258 = vmatpush1.msra.mxu0 0.0
  %2259 = vmatprep.subr.mxu0 0.0
  %2260 = vmatpush1.msra.mxu0 0.0
  %2261 = vmatprep.subr.mxu0 0.0
  %2262 = vmatpush1.msra.mxu0 0.0
  %2263 = vmatprep.subr.mxu0 0.0
  %2264 = vmatpush1.msra.mxu0 0.0
  %2265 = vmatprep.subr.mxu0 0.0
  %2266 = vmatpush1.msra.mxu0 0.0
  %2267 = vmatprep.subr.mxu0 0.0
  %2268 = vmatpush1.msra.mxu0 0.0
  %2269 = vmatprep.subr.mxu0 0.0
  %2270 = vmatpush1.msra.mxu0 0.0
  %2271 = vmatprep.subr.mxu0 0.0
  %2272 = vmatpush1.msra.mxu0 0.0
  %2273 = vmatprep.subr.mxu0 0.0
  %2274 = vmatpush1.msra.mxu0 0.0
  %2275 = vmatprep.subr.mxu0 0.0
  %2276 = vmatpush1.msra.mxu0 0.0
  %2277 = vmatprep.mubr.f32.mxu0 0.0
  %2278 = vmatmul.mubr.f32.gmra.mrb[0].mxu0 %v1781
  %v2279 = vpop.f32.mrb[0].mxu0
  %v2280 = vadd.f32 %v2211, %v2279
  %v2281 = vpop.f32.mrb[0].mxu0
  %2282 = vdwg.mxu0
  %v2283 = vxor.u32 %v2280, 2147483648
  %v2284 = vmul.f32 %v2283, 1.442695
  %v2285 = vpow.pop %v2284
  %v2286 = vadd.f32 %v2285, 1.0
  %v2287 = vrcp.pop %v2286
  %v2288 = vmul.f32 1.0, %v2287
  %v2289 = vtanh.pop %v2280
  %2291 = vrot.lane.b32.xlu0 %v2289, 64
  %v2292 = vpop.permute.xlu0 %2291
  %v2294 = vmul.f32 %v2288, %v2292
  %v2295 = vtanh.pop %v2294
  %2297 = vrot.lane.b32.xlu0 %v2295, 96
  %v2298 = vpop.permute.xlu0 %2297
  %v2300 = vmul.f32 %v2288, %v2298
  %v2302 = vlaneseq
  %v2303 = vshrl.u32 %v2302, 7
  %v2304 = vsub.s32 0, %v2303
  %v2305 = vrot.slane %v2189, %v2304
  %2308 = vrot.lane.b32.xlu0 %v2300, 32
  %v2309 = vpop.permute.xlu0 %2308
  %v2310 = vsel %vm236, %v2309, 0
  %2312 = vmatprep.subr.mxu0 0.0
  %2313 = vmatpush1.msra.mxu0 %v2185
  %2314 = vmatprep.subr.mxu0 0.0
  %2315 = vmatpush1.msra.mxu0 %v2186
  %2316 = vmatprep.subr.mxu0 0.0
  %2317 = vmatpush1.msra.mxu0 %v2187
  %2318 = vmatprep.subr.mxu0 0.0
  %2319 = vmatpush1.msra.mxu0 %v2188
  %2320 = vmatprep.subr.mxu0 0.0
  %2321 = vmatpush1.msra.mxu0 0.0
  %2322 = vmatprep.subr.mxu0 0.0
  %2323 = vmatpush1.msra.mxu0 0.0
  %2324 = vmatprep.subr.mxu0 0.0
  %2325 = vmatpush1.msra.mxu0 0.0
  %2326 = vmatprep.subr.mxu0 0.0
  %2327 = vmatpush1.msra.mxu0 0.0
  %2328 = vmatprep.subr.mxu0 0.0
  %2329 = vmatpush1.msra.mxu0 0.0
  %2330 = vmatprep.subr.mxu0 0.0
  %2331 = vmatpush1.msra.mxu0 0.0
  %2332 = vmatprep.subr.mxu0 0.0
  %2333 = vmatpush1.msra.mxu0 0.0
  %2334 = vmatprep.subr.mxu0 0.0
  %2335 = vmatpush1.msra.mxu0 0.0
  %2336 = vmatprep.subr.mxu0 0.0
  %2337 = vmatpush1.msra.mxu0 0.0
  %2338 = vmatprep.subr.mxu0 0.0
  %2339 = vmatpush1.msra.mxu0 0.0
  %2340 = vmatprep.subr.mxu0 0.0
  %2341 = vmatpush1.msra.mxu0 0.0
  %2342 = vmatprep.subr.mxu0 0.0
  %2343 = vmatpush1.msra.mxu0 0.0
  %2344 = vmatprep.subr.mxu0 0.0
  %2345 = vmatpush1.msra.mxu0 0.0
  %2346 = vmatprep.subr.mxu0 0.0
  %2347 = vmatpush1.msra.mxu0 0.0
  %2348 = vmatprep.subr.mxu0 0.0
  %2349 = vmatpush1.msra.mxu0 0.0
  %2350 = vmatprep.subr.mxu0 0.0
  %2351 = vmatpush1.msra.mxu0 0.0
  %2352 = vmatprep.subr.mxu0 0.0
  %2353 = vmatpush1.msra.mxu0 0.0
  %2354 = vmatprep.subr.mxu0 0.0
  %2355 = vmatpush1.msra.mxu0 0.0
  %2356 = vmatprep.subr.mxu0 0.0
  %2357 = vmatpush1.msra.mxu0 0.0
  %2358 = vmatprep.subr.mxu0 0.0
  %2359 = vmatpush1.msra.mxu0 0.0
  %2360 = vmatprep.subr.mxu0 0.0
  %2361 = vmatpush1.msra.mxu0 0.0
  %2362 = vmatprep.subr.mxu0 0.0
  %2363 = vmatpush1.msra.mxu0 0.0
  %2364 = vmatprep.subr.mxu0 0.0
  %2365 = vmatpush1.msra.mxu0 0.0
  %2366 = vmatprep.subr.mxu0 0.0
  %2367 = vmatpush1.msra.mxu0 0.0
  %2368 = vmatprep.subr.mxu0 0.0
  %2369 = vmatpush1.msra.mxu0 0.0
  %2370 = vmatprep.subr.mxu0 0.0
  %2371 = vmatpush1.msra.mxu0 0.0
  %2372 = vmatprep.subr.mxu0 0.0
  %2373 = vmatpush1.msra.mxu0 0.0
  %2374 = vmatprep.subr.mxu0 0.0
  %2375 = vmatpush1.msra.mxu0 0.0
  %2376 = vmatprep.mubr.f32.mxu0 0.0
  %2377 = vmatmul.mubr.f32.gmra.mrb[0].mxu0 %v2310
  %v2378 = vpop.f32.mrb[0].mxu0
  %v2379 = vadd.f32 %v2305, %v2378
  %v2380 = vpop.f32.mrb[0].mxu0
  %2381 = vdwg.mxu0
  %v2384 = vunpack.c.l.s4 1966171168
  %v2385 = vunpack.c.0.s8 %v2384
  %v2386 = vlaneseq
  %v2387 = vshrl.u32 %v2386, 7
  %v2388 = vsub.s32 %v2385, %v2387
  %v2389 = vrot.slane %v2379, %v2388
  %v2390 = vcombine.high %v2389, %v2389
  %v2392 = vunpack.c.l.s4 1966171168
  %v2393 = vunpack.c.0.s8 %v2392
  %v2394 = vlaneseq
  %v2395 = vshrl.u32 %v2394, 7
  %v2396 = vsub.s32 %v2393, %v2395
  %v2397 = vrot.slane %v2389, %v2396
  %v2399 = vunpack.c.l.s4 1966171168
  %v2400 = vunpack.c.0.s8 %v2399
  %v2401 = vlaneseq
  %v2402 = vshrl.u32 %v2401, 7
  %v2403 = vsub.s32 %v2400, %v2402
  %v2404 = vrot.slane %v2390, %v2403
  %v2405 = vlaneseq
  %v2406 = vshrl.u32 %v2405, 7
  %v2407 = vsub.s32 0, %v2406
  %v2408 = vrot.slane %v2397, %v2407
  %v2409 = vlaneseq
  %v2410 = vshrl.u32 %v2409, 7
  %v2411 = vsub.s32 0, %v2410
  %v2412 = vrot.slane %v2404, %v2411
  %v2415 = vadd.f32 %v2205, %v2408
  %v2416 = vadd.f32 %v2206, %v2412
  %v2417 = vtanh.pop %v2415
  %v2418 = vtanh.pop %v2416
  %v2420 = vlaneseq
  %v2421 = vshrl.u32 %v2420, 7
  %v2422 = vsub.s32 0, %v2421
  %v2423 = vrot.slane %v2190, %v2422
  %v2425 = vmul.f32 %v2417, %v2423
  %v2426 = vmul.f32 %v2418, %v2423
  %vm2427 = vcmask 257024
  %v2428 = vsel %vm2427, %v2425, 0.0
  %2429 = vadd.xlane.f32.xlu0 %v2428
  %v2430 = vpop.xlane.xlu0 %2429
  %v2431 = vsel %vm2427, %v2426, 0.0
  %2432 = vadd.xlane.f32.xlu0 %v2431
  %v2433 = vpop.xlane.xlu0 %2432
  %v2434 = vadd.f32 %v2104, %v2408
  %v2435 = vadd.f32 %v2177, %v2412
  %v2436 = vtanh.pop %v2434
  %v2437 = vtanh.pop %v2435
  %v2438 = vmul.f32 %v2436, %v2423
  %v2439 = vmul.f32 %v2437, %v2423
  %v2440 = vsel %vm236, %v2438, 0.0
  %2441 = vadd.xlane.f32.xlu0 %v2440
  %v2442 = vpop.xlane.xlu0 %2441
  %v2443 = vsel %vm236, %v2439, 0.0
  %2444 = vadd.xlane.f32.xlu0 %v2443
  %v2445 = vpop.xlane.xlu0 %2444
  %v2448 = vlaneseq
  %v2449 = vshrl.u32 %v2448, 7
  %v2450 = vsub.s32 %v91, %v2449
  %v2451 = vrot.slane %v2430, %v2450
  %v2452 = vlaneseq
  %v2453 = vshrl.u32 %v2452, 7
  %v2454 = vsub.s32 %v91, %v2453
  %v2455 = vrot.slane %v2433, %v2454
  %v2456 = vsel %vm1674, %v2455, %v2451
  %v2460 = vadd.s32 %v91, 4294967292
  %v2461 = vlaneseq
  %v2462 = vshrl.u32 %v2461, 7
  %v2463 = vsub.s32 %v2460, %v2462
  %v2464 = vrot.slane %v2442, %v2463
  %v2465 = vlaneseq
  %v2466 = vshrl.u32 %v2465, 7
  %v2467 = vsub.s32 %v2460, %v2466
  %v2468 = vrot.slane %v2445, %v2467
  %v2469 = vsel %vm1674, %v2468, %v2464
  %vm2471 = vcmask 31744
  %v2472 = vsel %vm2471, %v2456, %v2469
  %v2473 = vstv %s2192
  %v2474 = vadd.f32 %v2472, %v2473
  %vm2475 = vcmask 91136
  %v2476 = vsel %vm2475, %v2474, -inf
  %2477 = vmax.xlane.f32.xlu0 %v2476
  %v2478 = vpop.xlane.xlu0 %2477
  %v2479 = vsub.f32 %v2474, %v2478
  %v2480 = vmul.f32 %v2479, 1.442695
  %v2481 = vpow.pop %v2480
  %v2482 = vsel %vm2475, %v2481, 0.0
  %2483 = vadd.xlane.f32.xlu0 %v2482
  %v2484 = vpop.xlane.xlu0 %2483
  %v2485 = vlog2.pop %v2484
  %v2486 = vmul.f32 %v2485, 0.6931472
  %v2487 = vadd.f32 %v2478, %v2486
  %v2488 = vsub.f32 %v2474, %v2487
  %v2489 = vsel %vm2475, %v2488, -inf
  %2490 = vmax.xlane.f32.xlu0 %v2489
  %v2491 = vpop.xlane.xlu0 %2490
  %vm2492 = vcmp.eq.f32.partialorder %v2488, %v2491
  %v2493 = vsel %vm2492, %v91, 12
  %v2494 = vsel %vm2475, %v2493, 2147483647
  %v2495 = vand.u32 %v2494, 65535
  %v2496 = vshra.s32 %v2494, 16
  %v2497 = vcvt.s32.f32 %v2495
  %v2498 = vcvt.s32.f32 %v2496
  %2499 = vmin.xlane.f32.xlu0 %v2498
  %v2500 = vpop.xlane.xlu0 %2499
  %vm2501 = vcmp.eq.f32.partialorder %v2498, %v2500
  %v2502 = vsel %vm2501, %v2497, inf
  %2503 = vmin.xlane.f32.xlu0 %v2502
  %v2504 = vpop.xlane.xlu0 %2503
  %v2505 = vcvt.f32.s32 %v2504
  %v2506 = vcvt.f32.s32 %v2500
  %v2507 = vshll.u32 %v2506, 16
  %v2508 = vadd.s32 %v2507, %v2505
  %vm2509 = vcmp.eq.s32.totalorder %v91, %v2508
  %v2510 = vsel %vm2509, 1, 0
  %v2511 = vcvt.s32.f32 %v2510
  %v2512 = vlaneseq
  %v2513 = vshrl.u32 %v2512, 7
  %v2514 = vsub.s32 0, %v2513
  %v2515 = vrot.slane %v2511, %v2514
  %2517 = vbcast.lane.b32.xlu0 %v2515, 256
  %v2518 = vpop.permute.xlu0 %2517
  %v2519 = vlaneseq
  %v2520 = vshrl.u32 %v2519, 7
  %v2521 = vsub.s32 1, %v2520
  %v2522 = vrot.slane %v2511, %v2521
  %2524 = vbcast.lane.b32.xlu0 %v2522, 256
  %v2525 = vpop.permute.xlu0 %2524
  %v2526 = vmul.f32 %v2518, %v2203
  %v2527 = vmul.f32 %v2525, %v2204
  %v2528 = vsel %vm2427, %v2526, 0.0
  %v2529 = vrot.slane %v2528, 4
  %v2530 = vadd.f32 %v2528, %v2529
  %v2531 = vrot.slane %v2530, 2
  %v2532 = vadd.f32 %v2530, %v2531
  %v2533 = vrot.slane %v2532, 1
  %v2534 = vadd.f32 %v2532, %v2533
  %v2535 = vsel %vm2427, %v2527, 0.0
  %v2536 = vrot.slane %v2535, 4
  %v2537 = vadd.f32 %v2535, %v2536
  %v2538 = vrot.slane %v2537, 2
  %v2539 = vadd.f32 %v2537, %v2538
  %v2540 = vrot.slane %v2539, 1
  %v2541 = vadd.f32 %v2539, %v2540
  %s2543 = sor.u32 256, 4
  %2544 = vbcast.lane.b32.xlu0 %v2515, %s2543
  %v2545 = vpop.permute.xlu0 %2544
  %s2547 = sor.u32 256, 4
  %2548 = vbcast.lane.b32.xlu0 %v2522, %s2547
  %v2549 = vpop.permute.xlu0 %2548
  %v2550 = vmul.f32 %v2545, %v1118
  %v2551 = vmul.f32 %v2549, %v1191
  %v2552 = vsel %vm236, %v2550, 0.0
  %v2553 = vrot.slane %v2552, 4
  %v2554 = vadd.f32 %v2552, %v2553
  %v2555 = vrot.slane %v2554, 2
  %v2556 = vadd.f32 %v2554, %v2555
  %v2557 = vrot.slane %v2556, 1
  %v2558 = vadd.f32 %v2556, %v2557
  %v2559 = vsel %vm236, %v2551, 0.0
  %v2560 = vrot.slane %v2559, 4
  %v2561 = vadd.f32 %v2559, %v2560
  %v2562 = vrot.slane %v2561, 2
  %v2563 = vadd.f32 %v2561, %v2562
  %v2564 = vrot.slane %v2563, 1
  %v2565 = vadd.f32 %v2563, %v2564
  %v2566 = vadd.f32 %v2534, %v2558
  %v2567 = vadd.f32 %v2541, %v2565
  %v2570 = vsel %vm1674, %v2567, %v2566
  %v2571 = vsel %vm236, %v2570, 0
  %2573 = vmatprep.subr.mxu0 0.0
  %2574 = vmatpush1.msra.mxu0 %v2180
  %2575 = vmatprep.subr.mxu0 0.0
  %2576 = vmatpush1.msra.mxu0 %v2181
  %2577 = vmatprep.subr.mxu0 0.0
  %2578 = vmatpush1.msra.mxu0 %v2182
  %2579 = vmatprep.subr.mxu0 0.0
  %2580 = vmatpush1.msra.mxu0 %v2183
  %2581 = vmatprep.subr.mxu0 0.0
  %2582 = vmatpush1.msra.mxu0 0.0
  %2583 = vmatprep.subr.mxu0 0.0
  %2584 = vmatpush1.msra.mxu0 0.0
  %2585 = vmatprep.subr.mxu0 0.0
  %2586 = vmatpush1.msra.mxu0 0.0
  %2587 = vmatprep.subr.mxu0 0.0
  %2588 = vmatpush1.msra.mxu0 0.0
  %2589 = vmatprep.subr.mxu0 0.0
  %2590 = vmatpush1.msra.mxu0 0.0
  %2591 = vmatprep.subr.mxu0 0.0
  %2592 = vmatpush1.msra.mxu0 0.0
  %2593 = vmatprep.subr.mxu0 0.0
  %2594 = vmatpush1.msra.mxu0 0.0
  %2595 = vmatprep.subr.mxu0 0.0
  %2596 = vmatpush1.msra.mxu0 0.0
  %2597 = vmatprep.subr.mxu0 0.0
  %2598 = vmatpush1.msra.mxu0 0.0
  %2599 = vmatprep.subr.mxu0 0.0
  %2600 = vmatpush1.msra.mxu0 0.0
  %2601 = vmatprep.subr.mxu0 0.0
  %2602 = vmatpush1.msra.mxu0 0.0
  %2603 = vmatprep.subr.mxu0 0.0
  %2604 = vmatpush1.msra.mxu0 0.0
  %2605 = vmatprep.subr.mxu0 0.0
  %2606 = vmatpush1.msra.mxu0 0.0
  %2607 = vmatprep.subr.mxu0 0.0
  %2608 = vmatpush1.msra.mxu0 0.0
  %2609 = vmatprep.subr.mxu0 0.0
  %2610 = vmatpush1.msra.mxu0 0.0
  %2611 = vmatprep.subr.mxu0 0.0
  %2612 = vmatpush1.msra.mxu0 0.0
  %2613 = vmatprep.subr.mxu0 0.0
  %2614 = vmatpush1.msra.mxu0 0.0
  %2615 = vmatprep.subr.mxu0 0.0
  %2616 = vmatpush1.msra.mxu0 0.0
  %2617 = vmatprep.subr.mxu0 0.0
  %2618 = vmatpush1.msra.mxu0 0.0
  %2619 = vmatprep.subr.mxu0 0.0
  %2620 = vmatpush1.msra.mxu0 0.0
  %2621 = vmatprep.subr.mxu0 0.0
  %2622 = vmatpush1.msra.mxu0 0.0
  %2623 = vmatprep.subr.mxu0 0.0
  %2624 = vmatpush1.msra.mxu0 0.0
  %2625 = vmatprep.subr.mxu0 0.0
  %2626 = vmatpush1.msra.mxu0 0.0
  %2627 = vmatprep.subr.mxu0 0.0
  %2628 = vmatpush1.msra.mxu0 0.0
  %2629 = vmatprep.subr.mxu0 0.0
  %2630 = vmatpush1.msra.mxu0 0.0
  %2631 = vmatprep.subr.mxu0 0.0
  %2632 = vmatpush1.msra.mxu0 0.0
  %2633 = vmatprep.subr.mxu0 0.0
  %2634 = vmatpush1.msra.mxu0 0.0
  %2635 = vmatprep.subr.mxu0 0.0
  %2636 = vmatpush1.msra.mxu0 0.0
  %2637 = vmatprep.mubr.f32.mxu0 0.0
  %2638 = vmatmul.mubr.f32.gmra.mrb[0].mxu0 %v2571
  %v2639 = vpop.f32.mrb[0].mxu0
  %v2640 = vadd.f32 %v2211, %v2639
  %v2641 = vpop.f32.mrb[0].mxu0
  %2642 = vdwg.mxu0
  %v2643 = vxor.u32 %v2640, 2147483648
  %v2644 = vmul.f32 %v2643, 1.442695
  %v2645 = vpow.pop %v2644
  %v2646 = vadd.f32 %v2645, 1.0
  %v2647 = vrcp.pop %v2646
  %v2648 = vmul.f32 1.0, %v2647
  %v2649 = vtanh.pop %v2640
  %2651 = vrot.lane.b32.xlu0 %v2649, 64
  %v2652 = vpop.permute.xlu0 %2651
  %v2654 = vmul.f32 %v2648, %v2652
  %v2655 = vtanh.pop %v2654
  %2657 = vrot.lane.b32.xlu0 %v2655, 96
  %v2658 = vpop.permute.xlu0 %2657
  %v2660 = vmul.f32 %v2648, %v2658
  %2662 = vrot.lane.b32.xlu0 %v2660, 32
  %v2663 = vpop.permute.xlu0 %2662
  %v2664 = vsel %vm236, %v2663, 0
  %2666 = vmatprep.subr.mxu0 0.0
  %2667 = vmatpush1.msra.mxu0 %v2185
  %2668 = vmatprep.subr.mxu0 0.0
  %2669 = vmatpush1.msra.mxu0 %v2186
  %2670 = vmatprep.subr.mxu0 0.0
  %2671 = vmatpush1.msra.mxu0 %v2187
  %2672 = vmatprep.subr.mxu0 0.0
  %2673 = vmatpush1.msra.mxu0 %v2188
  %2674 = vmatprep.subr.mxu0 0.0
  %2675 = vmatpush1.msra.mxu0 0.0
  %2676 = vmatprep.subr.mxu0 0.0
  %2677 = vmatpush1.msra.mxu0 0.0
  %2678 = vmatprep.subr.mxu0 0.0
  %2679 = vmatpush1.msra.mxu0 0.0
  %2680 = vmatprep.subr.mxu0 0.0
  %2681 = vmatpush1.msra.mxu0 0.0
  %2682 = vmatprep.subr.mxu0 0.0
  %2683 = vmatpush1.msra.mxu0 0.0
  %2684 = vmatprep.subr.mxu0 0.0
  %2685 = vmatpush1.msra.mxu0 0.0
  %2686 = vmatprep.subr.mxu0 0.0
  %2687 = vmatpush1.msra.mxu0 0.0
  %2688 = vmatprep.subr.mxu0 0.0
  %2689 = vmatpush1.msra.mxu0 0.0
  %2690 = vmatprep.subr.mxu0 0.0
  %2691 = vmatpush1.msra.mxu0 0.0
  %2692 = vmatprep.subr.mxu0 0.0
  %2693 = vmatpush1.msra.mxu0 0.0
  %2694 = vmatprep.subr.mxu0 0.0
  %2695 = vmatpush1.msra.mxu0 0.0
  %2696 = vmatprep.subr.mxu0 0.0
  %2697 = vmatpush1.msra.mxu0 0.0
  %2698 = vmatprep.subr.mxu0 0.0
  %2699 = vmatpush1.msra.mxu0 0.0
  %2700 = vmatprep.subr.mxu0 0.0
  %2701 = vmatpush1.msra.mxu0 0.0
  %2702 = vmatprep.subr.mxu0 0.0
  %2703 = vmatpush1.msra.mxu0 0.0
  %2704 = vmatprep.subr.mxu0 0.0
  %2705 = vmatpush1.msra.mxu0 0.0
  %2706 = vmatprep.subr.mxu0 0.0
  %2707 = vmatpush1.msra.mxu0 0.0
  %2708 = vmatprep.subr.mxu0 0.0
  %2709 = vmatpush1.msra.mxu0 0.0
  %2710 = vmatprep.subr.mxu0 0.0
  %2711 = vmatpush1.msra.mxu0 0.0
  %2712 = vmatprep.subr.mxu0 0.0
  %2713 = vmatpush1.msra.mxu0 0.0
  %2714 = vmatprep.subr.mxu0 0.0
  %2715 = vmatpush1.msra.mxu0 0.0
  %2716 = vmatprep.subr.mxu0 0.0
  %2717 = vmatpush1.msra.mxu0 0.0
  %2718 = vmatprep.subr.mxu0 0.0
  %2719 = vmatpush1.msra.mxu0 0.0
  %2720 = vmatprep.subr.mxu0 0.0
  %2721 = vmatpush1.msra.mxu0 0.0
  %2722 = vmatprep.subr.mxu0 0.0
  %2723 = vmatpush1.msra.mxu0 0.0
  %2724 = vmatprep.subr.mxu0 0.0
  %2725 = vmatpush1.msra.mxu0 0.0
  %2726 = vmatprep.subr.mxu0 0.0
  %2727 = vmatpush1.msra.mxu0 0.0
  %2728 = vmatprep.subr.mxu0 0.0
  %2729 = vmatpush1.msra.mxu0 0.0
  %2730 = vmatprep.mubr.f32.mxu0 0.0
  %2731 = vmatmul.mubr.f32.gmra.mrb[0].mxu0 %v2664
  %v2732 = vpop.f32.mrb[0].mxu0
  %v2733 = vadd.f32 %v2305, %v2732
  %v2734 = vpop.f32.mrb[0].mxu0
  %2735 = vdwg.mxu0
  %v2738 = vunpack.c.l.s4 1966171168
  %v2739 = vunpack.c.0.s8 %v2738
  %v2740 = vlaneseq
  %v2741 = vshrl.u32 %v2740, 7
  %v2742 = vsub.s32 %v2739, %v2741
  %v2743 = vrot.slane %v2733, %v2742
  %v2744 = vcombine.high %v2743, %v2743
  %v2746 = vunpack.c.l.s4 1966171168
  %v2747 = vunpack.c.0.s8 %v2746
  %v2748 = vlaneseq
  %v2749 = vshrl.u32 %v2748, 7
  %v2750 = vsub.s32 %v2747, %v2749
  %v2751 = vrot.slane %v2743, %v2750
  %v2753 = vunpack.c.l.s4 1966171168
  %v2754 = vunpack.c.0.s8 %v2753
  %v2755 = vlaneseq
  %v2756 = vshrl.u32 %v2755, 7
  %v2757 = vsub.s32 %v2754, %v2756
  %v2758 = vrot.slane %v2744, %v2757
  %v2759 = vlaneseq
  %v2760 = vshrl.u32 %v2759, 7
  %v2761 = vsub.s32 0, %v2760
  %v2762 = vrot.slane %v2751, %v2761
  %v2763 = vlaneseq
  %v2764 = vshrl.u32 %v2763, 7
  %v2765 = vsub.s32 0, %v2764
  %v2766 = vrot.slane %v2758, %v2765
  %v2769 = vadd.f32 %v2205, %v2762
  %v2770 = vadd.f32 %v2206, %v2766
  %v2771 = vtanh.pop %v2769
  %v2772 = vtanh.pop %v2770
  %v2773 = vmul.f32 %v2771, %v2423
  %v2774 = vmul.f32 %v2772, %v2423
  %v2775 = vsel %vm2427, %v2773, 0.0
  %2776 = vadd.xlane.f32.xlu0 %v2775
  %v2777 = vpop.xlane.xlu0 %2776
  %v2778 = vsel %vm2427, %v2774, 0.0
  %2779 = vadd.xlane.f32.xlu0 %v2778
  %v2780 = vpop.xlane.xlu0 %2779
  %v2781 = vadd.f32 %v2104, %v2762
  %v2782 = vadd.f32 %v2177, %v2766
  %v2783 = vtanh.pop %v2781
  %v2784 = vtanh.pop %v2782
  %v2785 = vmul.f32 %v2783, %v2423
  %v2786 = vmul.f32 %v2784, %v2423
  %v2787 = vsel %vm236, %v2785, 0.0
  %2788 = vadd.xlane.f32.xlu0 %v2787
  %v2789 = vpop.xlane.xlu0 %2788
  %v2790 = vsel %vm236, %v2786, 0.0
  %2791 = vadd.xlane.f32.xlu0 %v2790
  %v2792 = vpop.xlane.xlu0 %2791
  %v2795 = vlaneseq
  %v2796 = vshrl.u32 %v2795, 7
  %v2797 = vsub.s32 %v91, %v2796
  %v2798 = vrot.slane %v2777, %v2797
  %v2799 = vlaneseq
  %v2800 = vshrl.u32 %v2799, 7
  %v2801 = vsub.s32 %v91, %v2800
  %v2802 = vrot.slane %v2780, %v2801
  %v2803 = vsel %vm1674, %v2802, %v2798
  %v2807 = vlaneseq
  %v2808 = vshrl.u32 %v2807, 7
  %v2809 = vsub.s32 %v2460, %v2808
  %v2810 = vrot.slane %v2789, %v2809
  %v2811 = vlaneseq
  %v2812 = vshrl.u32 %v2811, 7
  %v2813 = vsub.s32 %v2460, %v2812
  %v2814 = vrot.slane %v2792, %v2813
  %v2815 = vsel %vm1674, %v2814, %v2810
  %v2817 = vsel %vm2471, %v2803, %v2815
  %v2818 = vadd.f32 %v2817, %v2473
  %v2819 = vsel %vm2475, %v2818, -inf
  %2820 = vmax.xlane.f32.xlu0 %v2819
  %v2821 = vpop.xlane.xlu0 %2820
  %v2822 = vsub.f32 %v2818, %v2821
  %v2823 = vmul.f32 %v2822, 1.442695
  %v2824 = vpow.pop %v2823
  %v2825 = vsel %vm2475, %v2824, 0.0
  %2826 = vadd.xlane.f32.xlu0 %v2825
  %v2827 = vpop.xlane.xlu0 %2826
  %v2828 = vlog2.pop %v2827
  %v2829 = vmul.f32 %v2828, 0.6931472
  %v2830 = vadd.f32 %v2821, %v2829
  %v2831 = vsub.f32 %v2818, %v2830
  %v2833 = vlaneseq
  %v2834 = vshrl.u32 %v2833, 7
  %v2835 = vsub.s32 0, %v2834
  %v2836 = vrot.slane %v2197, %v2835
  %2838 = vmatprep.subr.mxu0 0.0
  %2839 = vmatpush1.msra.mxu0 %v2193
  %2840 = vmatprep.subr.mxu0 0.0
  %2841 = vmatpush1.msra.mxu0 %v2194
  %2842 = vmatprep.subr.mxu0 0.0
  %2843 = vmatpush1.msra.mxu0 %v2195
  %2844 = vmatprep.subr.mxu0 0.0
  %2845 = vmatpush1.msra.mxu0 %v2196
  %2846 = vmatprep.subr.mxu0 0.0
  %2847 = vmatpush1.msra.mxu0 0.0
  %2848 = vmatprep.subr.mxu0 0.0
  %2849 = vmatpush1.msra.mxu0 0.0
  %2850 = vmatprep.subr.mxu0 0.0
  %2851 = vmatpush1.msra.mxu0 0.0
  %2852 = vmatprep.subr.mxu0 0.0
  %2853 = vmatpush1.msra.mxu0 0.0
  %2854 = vmatprep.subr.mxu0 0.0
  %2855 = vmatpush1.msra.mxu0 0.0
  %2856 = vmatprep.subr.mxu0 0.0
  %2857 = vmatpush1.msra.mxu0 0.0
  %2858 = vmatprep.subr.mxu0 0.0
  %2859 = vmatpush1.msra.mxu0 0.0
  %2860 = vmatprep.subr.mxu0 0.0
  %2861 = vmatpush1.msra.mxu0 0.0
  %2862 = vmatprep.subr.mxu0 0.0
  %2863 = vmatpush1.msra.mxu0 0.0
  %2864 = vmatprep.subr.mxu0 0.0
  %2865 = vmatpush1.msra.mxu0 0.0
  %2866 = vmatprep.subr.mxu0 0.0
  %2867 = vmatpush1.msra.mxu0 0.0
  %2868 = vmatprep.subr.mxu0 0.0
  %2869 = vmatpush1.msra.mxu0 0.0
  %2870 = vmatprep.subr.mxu0 0.0
  %2871 = vmatpush1.msra.mxu0 0.0
  %2872 = vmatprep.subr.mxu0 0.0
  %2873 = vmatpush1.msra.mxu0 0.0
  %2874 = vmatprep.subr.mxu0 0.0
  %2875 = vmatpush1.msra.mxu0 0.0
  %2876 = vmatprep.subr.mxu0 0.0
  %2877 = vmatpush1.msra.mxu0 0.0
  %2878 = vmatprep.subr.mxu0 0.0
  %2879 = vmatpush1.msra.mxu0 0.0
  %2880 = vmatprep.subr.mxu0 0.0
  %2881 = vmatpush1.msra.mxu0 0.0
  %2882 = vmatprep.subr.mxu0 0.0
  %2883 = vmatpush1.msra.mxu0 0.0
  %2884 = vmatprep.subr.mxu0 0.0
  %2885 = vmatpush1.msra.mxu0 0.0
  %2886 = vmatprep.subr.mxu0 0.0
  %2887 = vmatpush1.msra.mxu0 0.0
  %2888 = vmatprep.subr.mxu0 0.0
  %2889 = vmatpush1.msra.mxu0 0.0
  %2890 = vmatprep.subr.mxu0 0.0
  %2891 = vmatpush1.msra.mxu0 0.0
  %2892 = vmatprep.subr.mxu0 0.0
  %2893 = vmatpush1.msra.mxu0 0.0
  %2894 = vmatprep.subr.mxu0 0.0
  %2895 = vmatpush1.msra.mxu0 0.0
  %2896 = vmatprep.subr.mxu0 0.0
  %2897 = vmatpush1.msra.mxu0 0.0
  %2898 = vmatprep.subr.mxu0 0.0
  %2899 = vmatpush1.msra.mxu0 0.0
  %2900 = vmatprep.subr.mxu0 0.0
  %2901 = vmatpush1.msra.mxu0 0.0
  %2902 = vmatprep.mubr.f32.mxu0 0.0
  %2903 = vmatmul.mubr.f32.gmra.mrb[0].mxu0 %v1781
  %v2904 = vpop.f32.mrb[0].mxu0
  %v2905 = vadd.f32 %v2836, %v2904
  %v2906 = vpop.f32.mrb[0].mxu0
  %2907 = vdwg.mxu0
  %vm2908 = vcmask 41984
  %v2909 = vsel %vm2908, %v2905, -inf
  %2910 = vmax.xlane.f32.xlu0 %v2909
  %v2911 = vpop.xlane.xlu0 %2910
  %v2912 = vsub.f32 %v2905, %v2911
  %v2913 = vmul.f32 %v2912, 1.442695
  %v2914 = vpow.pop %v2913
  %v2915 = vsel %vm2908, %v2914, 0.0
  %2916 = vadd.xlane.f32.xlu0 %v2915
  %v2917 = vpop.xlane.xlu0 %2916
  %v2918 = vrcp.pop %v2917
  %v2919 = vmul.f32 %v2914, %v2918
  %2920 = vrot.lane.b32.xlu0 %v1771, 64
  %v2921 = vpop.permute.xlu0 %2920
  %2924 = vrot.lane.b32.xlu0 %v2919, 64
  %v2925 = vpop.permute.xlu0 %2924
  %2928 = vrot.lane.b32.xlu0 %v2488, 70
  %v2929 = vpop.permute.xlu0 %2928
  %2932 = vrot.lane.b32.xlu0 %v2831, 82
  %v2933 = vpop.permute.xlu0 %2932
  %v2935 = vsel %vm236, %v1609, %v2921
  %vm2936 = vcmask 523264
  %v2937 = vsel %vm2936, %v2935, %v2925
  %vm2938 = vcmask 572416
  %v2939 = vsel %vm2938, %v2937, %v2929
  %vm2940 = vcmask 670720
  %v2941 = vsel %vm2940, %v2939, %v2933
  %v2944 = vunpack.c.l.s4 1966171168
  %v2945 = vunpack.c.0.s8 %v2944
  %v2946 = vlaneseq
  %v2947 = vshrl.u32 %v2946, 7
  %v2948 = vsub.s32 %v2945, %v2947
  %v2949 = vrot.slane %v2941, %v2948
  %v2950 = vcombine.high %v2949, %v2949
  %v2952 = vunpack.c.l.s4 1966171168
  %v2953 = vunpack.c.0.s8 %v2952
  %v2954 = vlaneseq
  %v2955 = vshrl.u32 %v2954, 7
  %v2956 = vsub.s32 %v2953, %v2955
  %v2957 = vrot.slane %v2949, %v2956
  %v2959 = vunpack.c.l.s4 1966171168
  %v2960 = vunpack.c.0.s8 %v2959
  %v2961 = vlaneseq
  %v2962 = vshrl.u32 %v2961, 7
  %v2963 = vsub.s32 %v2960, %v2962
  %v2964 = vrot.slane %v2950, %v2963
  %vm2967 = vcmask 761856
  %2968 = vst.msk [vmem:[%s26] sm:$0x1] %vm2967, %v2957
  %2969 = vst.msk [vmem:[%s26 + $0x2] sm:$0x1] %vm2967, %v2964
  %vm2970 = vcmp.lt.s32.totalorder %v2199, 3
  %v2971 = vsel %vm2970, 1, 0
  %vm2972 = vcmp.eq.s32.totalorder %v2971, 1
  %v2973 = vsel %vm2972, %v1430, 0.0
  %v2974 = vsel %vm2972, %v1503, 0.0
  %v2975 = vsel %vm2972, %v1958, %v1886
  %v2976 = vsel %vm2972, %v2031, %v1886
  %2978 = vrot.lane.b32.xlu0 %v1876, 32
  %v2979 = vpop.permute.xlu0 %2978
  %v2980 = vsel %vm236, %v2979, 0
  %2982 = vmatprep.subr.mxu0 0.0
  %2983 = vmatpush1.msra.mxu0 %v2180
  %2984 = vmatprep.subr.mxu0 0.0
  %2985 = vmatpush1.msra.mxu0 %v2181
  %2986 = vmatprep.subr.mxu0 0.0
  %2987 = vmatpush1.msra.mxu0 %v2182
  %2988 = vmatprep.subr.mxu0 0.0
  %2989 = vmatpush1.msra.mxu0 %v2183
  %2990 = vmatprep.subr.mxu0 0.0
  %2991 = vmatpush1.msra.mxu0 0.0
  %2992 = vmatprep.subr.mxu0 0.0
  %2993 = vmatpush1.msra.mxu0 0.0
  %2994 = vmatprep.subr.mxu0 0.0
  %2995 = vmatpush1.msra.mxu0 0.0
  %2996 = vmatprep.subr.mxu0 0.0
  %2997 = vmatpush1.msra.mxu0 0.0
  %2998 = vmatprep.subr.mxu0 0.0
  %2999 = vmatpush1.msra.mxu0 0.0
  %3000 = vmatprep.subr.mxu0 0.0
  %3001 = vmatpush1.msra.mxu0 0.0
  %3002 = vmatprep.subr.mxu0 0.0
  %3003 = vmatpush1.msra.mxu0 0.0
  %3004 = vmatprep.subr.mxu0 0.0
  %3005 = vmatpush1.msra.mxu0 0.0
  %3006 = vmatprep.subr.mxu0 0.0
  %3007 = vmatpush1.msra.mxu0 0.0
  %3008 = vmatprep.subr.mxu0 0.0
  %3009 = vmatpush1.msra.mxu0 0.0
  %3010 = vmatprep.subr.mxu0 0.0
  %3011 = vmatpush1.msra.mxu0 0.0
  %3012 = vmatprep.subr.mxu0 0.0
  %3013 = vmatpush1.msra.mxu0 0.0
  %3014 = vmatprep.subr.mxu0 0.0
  %3015 = vmatpush1.msra.mxu0 0.0
  %3016 = vmatprep.subr.mxu0 0.0
  %3017 = vmatpush1.msra.mxu0 0.0
  %3018 = vmatprep.subr.mxu0 0.0
  %3019 = vmatpush1.msra.mxu0 0.0
  %3020 = vmatprep.subr.mxu0 0.0
  %3021 = vmatpush1.msra.mxu0 0.0
  %3022 = vmatprep.subr.mxu0 0.0
  %3023 = vmatpush1.msra.mxu0 0.0
  %3024 = vmatprep.subr.mxu0 0.0
  %3025 = vmatpush1.msra.mxu0 0.0
  %3026 = vmatprep.subr.mxu0 0.0
  %3027 = vmatpush1.msra.mxu0 0.0
  %3028 = vmatprep.subr.mxu0 0.0
  %3029 = vmatpush1.msra.mxu0 0.0
  %3030 = vmatprep.subr.mxu0 0.0
  %3031 = vmatpush1.msra.mxu0 0.0
  %3032 = vmatprep.subr.mxu0 0.0
  %3033 = vmatpush1.msra.mxu0 0.0
  %3034 = vmatprep.subr.mxu0 0.0
  %3035 = vmatpush1.msra.mxu0 0.0
  %3036 = vmatprep.subr.mxu0 0.0
  %3037 = vmatpush1.msra.mxu0 0.0
  %3038 = vmatprep.subr.mxu0 0.0
  %3039 = vmatpush1.msra.mxu0 0.0
  %3040 = vmatprep.subr.mxu0 0.0
  %3041 = vmatpush1.msra.mxu0 0.0
  %3042 = vmatprep.subr.mxu0 0.0
  %3043 = vmatpush1.msra.mxu0 0.0
  %3044 = vmatprep.subr.mxu0 0.0
  %3045 = vmatpush1.msra.mxu0 0.0
  %3046 = vmatprep.mubr.f32.mxu0 0.0
  %3047 = vmatmul.mubr.f32.gmra.mrb[0].mxu0 %v2980
  %v3048 = vpop.f32.mrb[0].mxu0
  %v3049 = vadd.f32 %v2211, %v3048
  %v3050 = vpop.f32.mrb[0].mxu0
  %3051 = vdwg.mxu0
  %v3052 = vxor.u32 %v3049, 2147483648
  %v3053 = vmul.f32 %v3052, 1.442695
  %v3054 = vpow.pop %v3053
  %v3055 = vadd.f32 %v3054, 1.0
  %v3056 = vrcp.pop %v3055
  %v3057 = vmul.f32 1.0, %v3056
  %v3058 = vtanh.pop %v3049
  %3060 = vrot.lane.b32.xlu0 %v3058, 64
  %v3061 = vpop.permute.xlu0 %3060
  %v3063 = vmul.f32 %v3057, %v3061
  %v3064 = vtanh.pop %v3063
  %3066 = vrot.lane.b32.xlu0 %v3064, 96
  %v3067 = vpop.permute.xlu0 %3066
  %v3069 = vmul.f32 %v3057, %v3067
  %3071 = vrot.lane.b32.xlu0 %v3069, 32
  %v3072 = vpop.permute.xlu0 %3071
  %v3073 = vsel %vm236, %v3072, 0
  %3075 = vmatprep.subr.mxu0 0.0
  %3076 = vmatpush1.msra.mxu0 %v2185
  %3077 = vmatprep.subr.mxu0 0.0
  %3078 = vmatpush1.msra.mxu0 %v2186
  %3079 = vmatprep.subr.mxu0 0.0
  %3080 = vmatpush1.msra.mxu0 %v2187
  %3081 = vmatprep.subr.mxu0 0.0
  %3082 = vmatpush1.msra.mxu0 %v2188
  %3083 = vmatprep.subr.mxu0 0.0
  %3084 = vmatpush1.msra.mxu0 0.0
  %3085 = vmatprep.subr.mxu0 0.0
  %3086 = vmatpush1.msra.mxu0 0.0
  %3087 = vmatprep.subr.mxu0 0.0
  %3088 = vmatpush1.msra.mxu0 0.0
  %3089 = vmatprep.subr.mxu0 0.0
  %3090 = vmatpush1.msra.mxu0 0.0
  %3091 = vmatprep.subr.mxu0 0.0
  %3092 = vmatpush1.msra.mxu0 0.0
  %3093 = vmatprep.subr.mxu0 0.0
  %3094 = vmatpush1.msra.mxu0 0.0
  %3095 = vmatprep.subr.mxu0 0.0
  %3096 = vmatpush1.msra.mxu0 0.0
  %3097 = vmatprep.subr.mxu0 0.0
  %3098 = vmatpush1.msra.mxu0 0.0
  %3099 = vmatprep.subr.mxu0 0.0
  %3100 = vmatpush1.msra.mxu0 0.0
  %3101 = vmatprep.subr.mxu0 0.0
  %3102 = vmatpush1.msra.mxu0 0.0
  %3103 = vmatprep.subr.mxu0 0.0
  %3104 = vmatpush1.msra.mxu0 0.0
  %3105 = vmatprep.subr.mxu0 0.0
  %3106 = vmatpush1.msra.mxu0 0.0
  %3107 = vmatprep.subr.mxu0 0.0
  %3108 = vmatpush1.msra.mxu0 0.0
  %3109 = vmatprep.subr.mxu0 0.0
  %3110 = vmatpush1.msra.mxu0 0.0
  %3111 = vmatprep.subr.mxu0 0.0
  %3112 = vmatpush1.msra.mxu0 0.0
  %3113 = vmatprep.subr.mxu0 0.0
  %3114 = vmatpush1.msra.mxu0 0.0
  %3115 = vmatprep.subr.mxu0 0.0
  %3116 = vmatpush1.msra.mxu0 0.0
  %3117 = vmatprep.subr.mxu0 0.0
  %3118 = vmatpush1.msra.mxu0 0.0
  %3119 = vmatprep.subr.mxu0 0.0
  %3120 = vmatpush1.msra.mxu0 0.0
  %3121 = vmatprep.subr.mxu0 0.0
  %3122 = vmatpush1.msra.mxu0 0.0
  %3123 = vmatprep.subr.mxu0 0.0
  %3124 = vmatpush1.msra.mxu0 0.0
  %3125 = vmatprep.subr.mxu0 0.0
  %3126 = vmatpush1.msra.mxu0 0.0
  %3127 = vmatprep.subr.mxu0 0.0
  %3128 = vmatpush1.msra.mxu0 0.0
  %3129 = vmatprep.subr.mxu0 0.0
  %3130 = vmatpush1.msra.mxu0 0.0
  %3131 = vmatprep.subr.mxu0 0.0
  %3132 = vmatpush1.msra.mxu0 0.0
  %3133 = vmatprep.subr.mxu0 0.0
  %3134 = vmatpush1.msra.mxu0 0.0
  %3135 = vmatprep.subr.mxu0 0.0
  %3136 = vmatpush1.msra.mxu0 0.0
  %3137 = vmatprep.subr.mxu0 0.0
  %3138 = vmatpush1.msra.mxu0 0.0
  %3139 = vmatprep.mubr.f32.mxu0 0.0
  %3140 = vmatmul.mubr.f32.gmra.mrb[0].mxu0 %v3073
  %v3141 = vpop.f32.mrb[0].mxu0
  %v3142 = vadd.f32 %v2305, %v3141
  %v3143 = vpop.f32.mrb[0].mxu0
  %3144 = vdwg.mxu0
  %v3147 = vunpack.c.l.s4 1966171168
  %v3148 = vunpack.c.0.s8 %v3147
  %v3149 = vlaneseq
  %v3150 = vshrl.u32 %v3149, 7
  %v3151 = vsub.s32 %v3148, %v3150
  %v3152 = vrot.slane %v3142, %v3151
  %v3153 = vcombine.high %v3152, %v3152
  %v3155 = vunpack.c.l.s4 1966171168
  %v3156 = vunpack.c.0.s8 %v3155
  %v3157 = vlaneseq
  %v3158 = vshrl.u32 %v3157, 7
  %v3159 = vsub.s32 %v3156, %v3158
  %v3160 = vrot.slane %v3152, %v3159
  %v3162 = vunpack.c.l.s4 1966171168
  %v3163 = vunpack.c.0.s8 %v3162
  %v3164 = vlaneseq
  %v3165 = vshrl.u32 %v3164, 7
  %v3166 = vsub.s32 %v3163, %v3165
  %v3167 = vrot.slane %v3153, %v3166
  %v3168 = vlaneseq
  %v3169 = vshrl.u32 %v3168, 7
  %v3170 = vsub.s32 0, %v3169
  %v3171 = vrot.slane %v3160, %v3170
  %v3172 = vlaneseq
  %v3173 = vshrl.u32 %v3172, 7
  %v3174 = vsub.s32 0, %v3173
  %v3175 = vrot.slane %v3167, %v3174
  %v3178 = vadd.f32 %v2975, %v3171
  %v3179 = vadd.f32 %v2976, %v3175
  %v3180 = vtanh.pop %v3178
  %v3181 = vtanh.pop %v3179
  %v3182 = vmul.f32 %v3180, %v2423
  %v3183 = vmul.f32 %v3181, %v2423
  %v3184 = vsel %vm2427, %v3182, 0.0
  %3185 = vadd.xlane.f32.xlu0 %v3184
  %v3186 = vpop.xlane.xlu0 %3185
  %v3187 = vsel %vm2427, %v3183, 0.0
  %3188 = vadd.xlane.f32.xlu0 %v3187
  %v3189 = vpop.xlane.xlu0 %3188
  %v3190 = vadd.f32 %v2104, %v3171
  %v3191 = vadd.f32 %v2177, %v3175
  %v3192 = vtanh.pop %v3190
  %v3193 = vtanh.pop %v3191
  %v3194 = vmul.f32 %v3192, %v2423
  %v3195 = vmul.f32 %v3193, %v2423
  %v3196 = vsel %vm236, %v3194, 0.0
  %3197 = vadd.xlane.f32.xlu0 %v3196
  %v3198 = vpop.xlane.xlu0 %3197
  %v3199 = vsel %vm236, %v3195, 0.0
  %3200 = vadd.xlane.f32.xlu0 %v3199
  %v3201 = vpop.xlane.xlu0 %3200
  %v3204 = vlaneseq
  %v3205 = vshrl.u32 %v3204, 7
  %v3206 = vsub.s32 %v91, %v3205
  %v3207 = vrot.slane %v3186, %v3206
  %v3208 = vlaneseq
  %v3209 = vshrl.u32 %v3208, 7
  %v3210 = vsub.s32 %v91, %v3209
  %v3211 = vrot.slane %v3189, %v3210
  %v3212 = vsel %vm1674, %v3211, %v3207
  %v3216 = vlaneseq
  %v3217 = vshrl.u32 %v3216, 7
  %v3218 = vsub.s32 %v2460, %v3217
  %v3219 = vrot.slane %v3198, %v3218
  %v3220 = vlaneseq
  %v3221 = vshrl.u32 %v3220, 7
  %v3222 = vsub.s32 %v2460, %v3221
  %v3223 = vrot.slane %v3201, %v3222
  %v3224 = vsel %vm1674, %v3223, %v3219
  %v3226 = vsel %vm2471, %v3212, %v3224
  %v3227 = vadd.f32 %v3226, %v2473
  %v3228 = vsel %vm2475, %v3227, -inf
  %3229 = vmax.xlane.f32.xlu0 %v3228
  %v3230 = vpop.xlane.xlu0 %3229
  %v3231 = vsub.f32 %v3227, %v3230
  %v3232 = vmul.f32 %v3231, 1.442695
  %v3233 = vpow.pop %v3232
  %v3234 = vsel %vm2475, %v3233, 0.0
  %3235 = vadd.xlane.f32.xlu0 %v3234
  %v3236 = vpop.xlane.xlu0 %3235
  %v3237 = vlog2.pop %v3236
  %v3238 = vmul.f32 %v3237, 0.6931472
  %v3239 = vadd.f32 %v3230, %v3238
  %v3240 = vsub.f32 %v3227, %v3239
  %v3241 = vsel %vm2475, %v3240, -inf
  %3242 = vmax.xlane.f32.xlu0 %v3241
  %v3243 = vpop.xlane.xlu0 %3242
  %vm3244 = vcmp.eq.f32.partialorder %v3240, %v3243
  %v3245 = vsel %vm3244, %v91, 12
  %v3246 = vsel %vm2475, %v3245, 2147483647
  %v3247 = vand.u32 %v3246, 65535
  %v3248 = vshra.s32 %v3246, 16
  %v3249 = vcvt.s32.f32 %v3247
  %v3250 = vcvt.s32.f32 %v3248
  %3251 = vmin.xlane.f32.xlu0 %v3250
  %v3252 = vpop.xlane.xlu0 %3251
  %vm3253 = vcmp.eq.f32.partialorder %v3250, %v3252
  %v3254 = vsel %vm3253, %v3249, inf
  %3255 = vmin.xlane.f32.xlu0 %v3254
  %v3256 = vpop.xlane.xlu0 %3255
  %v3257 = vcvt.f32.s32 %v3256
  %v3258 = vcvt.f32.s32 %v3252
  %v3259 = vshll.u32 %v3258, 16
  %v3260 = vadd.s32 %v3259, %v3257
  %vm3261 = vcmp.eq.s32.totalorder %v91, %v3260
  %v3262 = vsel %vm3261, 1, 0
  %v3263 = vcvt.s32.f32 %v3262
  %v3264 = vlaneseq
  %v3265 = vshrl.u32 %v3264, 7
  %v3266 = vsub.s32 0, %v3265
  %v3267 = vrot.slane %v3263, %v3266
  %3269 = vbcast.lane.b32.xlu0 %v3267, 256
  %v3270 = vpop.permute.xlu0 %3269
  %v3271 = vlaneseq
  %v3272 = vshrl.u32 %v3271, 7
  %v3273 = vsub.s32 1, %v3272
  %v3274 = vrot.slane %v3263, %v3273
  %3276 = vbcast.lane.b32.xlu0 %v3274, 256
  %v3277 = vpop.permute.xlu0 %3276
  %v3278 = vmul.f32 %v3270, %v2973
  %v3279 = vmul.f32 %v3277, %v2974
  %v3280 = vsel %vm2427, %v3278, 0.0
  %v3281 = vrot.slane %v3280, 4
  %v3282 = vadd.f32 %v3280, %v3281
  %v3283 = vrot.slane %v3282, 2
  %v3284 = vadd.f32 %v3282, %v3283
  %v3285 = vrot.slane %v3284, 1
  %v3286 = vadd.f32 %v3284, %v3285
  %v3287 = vsel %vm2427, %v3279, 0.0
  %v3288 = vrot.slane %v3287, 4
  %v3289 = vadd.f32 %v3287, %v3288
  %v3290 = vrot.slane %v3289, 2
  %v3291 = vadd.f32 %v3289, %v3290
  %v3292 = vrot.slane %v3291, 1
  %v3293 = vadd.f32 %v3291, %v3292
  %s3295 = sor.u32 256, 4
  %3296 = vbcast.lane.b32.xlu0 %v3267, %s3295
  %v3297 = vpop.permute.xlu0 %3296
  %s3299 = sor.u32 256, 4
  %3300 = vbcast.lane.b32.xlu0 %v3274, %s3299
  %v3301 = vpop.permute.xlu0 %3300
  %v3302 = vmul.f32 %v3297, %v1118
  %v3303 = vmul.f32 %v3301, %v1191
  %v3304 = vsel %vm236, %v3302, 0.0
  %v3305 = vrot.slane %v3304, 4
  %v3306 = vadd.f32 %v3304, %v3305
  %v3307 = vrot.slane %v3306, 2
  %v3308 = vadd.f32 %v3306, %v3307
  %v3309 = vrot.slane %v3308, 1
  %v3310 = vadd.f32 %v3308, %v3309
  %v3311 = vsel %vm236, %v3303, 0.0
  %v3312 = vrot.slane %v3311, 4
  %v3313 = vadd.f32 %v3311, %v3312
  %v3314 = vrot.slane %v3313, 2
  %v3315 = vadd.f32 %v3313, %v3314
  %v3316 = vrot.slane %v3315, 1
  %v3317 = vadd.f32 %v3315, %v3316
  %v3318 = vadd.f32 %v3286, %v3310
  %v3319 = vadd.f32 %v3293, %v3317
  %v3322 = vsel %vm1674, %v3319, %v3318
  %v3323 = vsel %vm236, %v3322, 0
  %3325 = vmatprep.subr.mxu0 0.0
  %3326 = vmatpush1.msra.mxu0 %v2180
  %3327 = vmatprep.subr.mxu0 0.0
  %3328 = vmatpush1.msra.mxu0 %v2181
  %3329 = vmatprep.subr.mxu0 0.0
  %3330 = vmatpush1.msra.mxu0 %v2182
  %3331 = vmatprep.subr.mxu0 0.0
  %3332 = vmatpush1.msra.mxu0 %v2183
  %3333 = vmatprep.subr.mxu0 0.0
  %3334 = vmatpush1.msra.mxu0 0.0
  %3335 = vmatprep.subr.mxu0 0.0
  %3336 = vmatpush1.msra.mxu0 0.0
  %3337 = vmatprep.subr.mxu0 0.0
  %3338 = vmatpush1.msra.mxu0 0.0
  %3339 = vmatprep.subr.mxu0 0.0
  %3340 = vmatpush1.msra.mxu0 0.0
  %3341 = vmatprep.subr.mxu0 0.0
  %3342 = vmatpush1.msra.mxu0 0.0
  %3343 = vmatprep.subr.mxu0 0.0
  %3344 = vmatpush1.msra.mxu0 0.0
  %3345 = vmatprep.subr.mxu0 0.0
  %3346 = vmatpush1.msra.mxu0 0.0
  %3347 = vmatprep.subr.mxu0 0.0
  %3348 = vmatpush1.msra.mxu0 0.0
  %3349 = vmatprep.subr.mxu0 0.0
  %3350 = vmatpush1.msra.mxu0 0.0
  %3351 = vmatprep.subr.mxu0 0.0
  %3352 = vmatpush1.msra.mxu0 0.0
  %3353 = vmatprep.subr.mxu0 0.0
  %3354 = vmatpush1.msra.mxu0 0.0
  %3355 = vmatprep.subr.mxu0 0.0
  %3356 = vmatpush1.msra.mxu0 0.0
  %3357 = vmatprep.subr.mxu0 0.0
  %3358 = vmatpush1.msra.mxu0 0.0
  %3359 = vmatprep.subr.mxu0 0.0
  %3360 = vmatpush1.msra.mxu0 0.0
  %3361 = vmatprep.subr.mxu0 0.0
  %3362 = vmatpush1.msra.mxu0 0.0
  %3363 = vmatprep.subr.mxu0 0.0
  %3364 = vmatpush1.msra.mxu0 0.0
  %3365 = vmatprep.subr.mxu0 0.0
  %3366 = vmatpush1.msra.mxu0 0.0
  %3367 = vmatprep.subr.mxu0 0.0
  %3368 = vmatpush1.msra.mxu0 0.0
  %3369 = vmatprep.subr.mxu0 0.0
  %3370 = vmatpush1.msra.mxu0 0.0
  %3371 = vmatprep.subr.mxu0 0.0
  %3372 = vmatpush1.msra.mxu0 0.0
  %3373 = vmatprep.subr.mxu0 0.0
  %3374 = vmatpush1.msra.mxu0 0.0
  %3375 = vmatprep.subr.mxu0 0.0
  %3376 = vmatpush1.msra.mxu0 0.0
  %3377 = vmatprep.subr.mxu0 0.0
  %3378 = vmatpush1.msra.mxu0 0.0
  %3379 = vmatprep.subr.mxu0 0.0
  %3380 = vmatpush1.msra.mxu0 0.0
  %3381 = vmatprep.subr.mxu0 0.0
  %3382 = vmatpush1.msra.mxu0 0.0
  %3383 = vmatprep.subr.mxu0 0.0
  %3384 = vmatpush1.msra.mxu0 0.0
  %3385 = vmatprep.subr.mxu0 0.0
  %3386 = vmatpush1.msra.mxu0 0.0
  %3387 = vmatprep.subr.mxu0 0.0
  %3388 = vmatpush1.msra.mxu0 0.0
  %3389 = vmatprep.mubr.f32.mxu0 0.0
  %3390 = vmatmul.mubr.f32.gmra.mrb[0].mxu0 %v3323
  %v3391 = vpop.f32.mrb[0].mxu0
  %v3392 = vadd.f32 %v2211, %v3391
  %v3393 = vpop.f32.mrb[0].mxu0
  %3394 = vdwg.mxu0
  %v3395 = vxor.u32 %v3392, 2147483648
  %v3396 = vmul.f32 %v3395, 1.442695
  %v3397 = vpow.pop %v3396
  %v3398 = vadd.f32 %v3397, 1.0
  %v3399 = vrcp.pop %v3398
  %v3400 = vmul.f32 1.0, %v3399
  %v3401 = vtanh.pop %v3392
  %3403 = vrot.lane.b32.xlu0 %v3401, 64
  %v3404 = vpop.permute.xlu0 %3403
  %v3406 = vmul.f32 %v3400, %v3404
  %v3407 = vtanh.pop %v3406
  %3409 = vrot.lane.b32.xlu0 %v3407, 96
  %v3410 = vpop.permute.xlu0 %3409
  %v3412 = vmul.f32 %v3400, %v3410
  %3414 = vrot.lane.b32.xlu0 %v3412, 32
  %v3415 = vpop.permute.xlu0 %3414
  %v3416 = vsel %vm236, %v3415, 0
  %3418 = vmatprep.subr.mxu0 0.0
  %3419 = vmatpush1.msra.mxu0 %v2185
  %3420 = vmatprep.subr.mxu0 0.0
  %3421 = vmatpush1.msra.mxu0 %v2186
  %3422 = vmatprep.subr.mxu0 0.0
  %3423 = vmatpush1.msra.mxu0 %v2187
  %3424 = vmatprep.subr.mxu0 0.0
  %3425 = vmatpush1.msra.mxu0 %v2188
  %3426 = vmatprep.subr.mxu0 0.0
  %3427 = vmatpush1.msra.mxu0 0.0
  %3428 = vmatprep.subr.mxu0 0.0
  %3429 = vmatpush1.msra.mxu0 0.0
  %3430 = vmatprep.subr.mxu0 0.0
  %3431 = vmatpush1.msra.mxu0 0.0
  %3432 = vmatprep.subr.mxu0 0.0
  %3433 = vmatpush1.msra.mxu0 0.0
  %3434 = vmatprep.subr.mxu0 0.0
  %3435 = vmatpush1.msra.mxu0 0.0
  %3436 = vmatprep.subr.mxu0 0.0
  %3437 = vmatpush1.msra.mxu0 0.0
  %3438 = vmatprep.subr.mxu0 0.0
  %3439 = vmatpush1.msra.mxu0 0.0
  %3440 = vmatprep.subr.mxu0 0.0
  %3441 = vmatpush1.msra.mxu0 0.0
  %3442 = vmatprep.subr.mxu0 0.0
  %3443 = vmatpush1.msra.mxu0 0.0
  %3444 = vmatprep.subr.mxu0 0.0
  %3445 = vmatpush1.msra.mxu0 0.0
  %3446 = vmatprep.subr.mxu0 0.0
  %3447 = vmatpush1.msra.mxu0 0.0
  %3448 = vmatprep.subr.mxu0 0.0
  %3449 = vmatpush1.msra.mxu0 0.0
  %3450 = vmatprep.subr.mxu0 0.0
  %3451 = vmatpush1.msra.mxu0 0.0
  %3452 = vmatprep.subr.mxu0 0.0
  %3453 = vmatpush1.msra.mxu0 0.0
  %3454 = vmatprep.subr.mxu0 0.0
  %3455 = vmatpush1.msra.mxu0 0.0
  %3456 = vmatprep.subr.mxu0 0.0
  %3457 = vmatpush1.msra.mxu0 0.0
  %3458 = vmatprep.subr.mxu0 0.0
  %3459 = vmatpush1.msra.mxu0 0.0
  %3460 = vmatprep.subr.mxu0 0.0
  %3461 = vmatpush1.msra.mxu0 0.0
  %3462 = vmatprep.subr.mxu0 0.0
  %3463 = vmatpush1.msra.mxu0 0.0
  %3464 = vmatprep.subr.mxu0 0.0
  %3465 = vmatpush1.msra.mxu0 0.0
  %3466 = vmatprep.subr.mxu0 0.0
  %3467 = vmatpush1.msra.mxu0 0.0
  %3468 = vmatprep.subr.mxu0 0.0
  %3469 = vmatpush1.msra.mxu0 0.0
  %3470 = vmatprep.subr.mxu0 0.0
  %3471 = vmatpush1.msra.mxu0 0.0
  %3472 = vmatprep.subr.mxu0 0.0
  %3473 = vmatpush1.msra.mxu0 0.0
  %3474 = vmatprep.subr.mxu0 0.0
  %3475 = vmatpush1.msra.mxu0 0.0
  %3476 = vmatprep.subr.mxu0 0.0
  %3477 = vmatpush1.msra.mxu0 0.0
  %3478 = vmatprep.subr.mxu0 0.0
  %3479 = vmatpush1.msra.mxu0 0.0
  %3480 = vmatprep.subr.mxu0 0.0
  %3481 = vmatpush1.msra.mxu0 0.0
  %3482 = vmatprep.mubr.f32.mxu0 0.0
  %3483 = vmatmul.mubr.f32.gmra.mrb[0].mxu0 %v3416
  %v3484 = vpop.f32.mrb[0].mxu0
  %v3485 = vadd.f32 %v2305, %v3484
  %v3486 = vpop.f32.mrb[0].mxu0
  %3487 = vdwg.mxu0
  %v3490 = vunpack.c.l.s4 1966171168
  %v3491 = vunpack.c.0.s8 %v3490
  %v3492 = vlaneseq
  %v3493 = vshrl.u32 %v3492, 7
  %v3494 = vsub.s32 %v3491, %v3493
  %v3495 = vrot.slane %v3485, %v3494
  %v3496 = vcombine.high %v3495, %v3495
  %v3498 = vunpack.c.l.s4 1966171168
  %v3499 = vunpack.c.0.s8 %v3498
  %v3500 = vlaneseq
  %v3501 = vshrl.u32 %v3500, 7
  %v3502 = vsub.s32 %v3499, %v3501
  %v3503 = vrot.slane %v3495, %v3502
  %v3505 = vunpack.c.l.s4 1966171168
  %v3506 = vunpack.c.0.s8 %v3505
  %v3507 = vlaneseq
  %v3508 = vshrl.u32 %v3507, 7
  %v3509 = vsub.s32 %v3506, %v3508
  %v3510 = vrot.slane %v3496, %v3509
  %v3511 = vlaneseq
  %v3512 = vshrl.u32 %v3511, 7
  %v3513 = vsub.s32 0, %v3512
  %v3514 = vrot.slane %v3503, %v3513
  %v3515 = vlaneseq
  %v3516 = vshrl.u32 %v3515, 7
  %v3517 = vsub.s32 0, %v3516
  %v3518 = vrot.slane %v3510, %v3517
  %v3521 = vadd.f32 %v2975, %v3514
  %v3522 = vadd.f32 %v2976, %v3518
  %v3523 = vtanh.pop %v3521
  %v3524 = vtanh.pop %v3522
  %v3525 = vmul.f32 %v3523, %v2423
  %v3526 = vmul.f32 %v3524, %v2423
  %v3527 = vsel %vm2427, %v3525, 0.0
  %3528 = vadd.xlane.f32.xlu0 %v3527
  %v3529 = vpop.xlane.xlu0 %3528
  %v3530 = vsel %vm2427, %v3526, 0.0
  %3531 = vadd.xlane.f32.xlu0 %v3530
  %v3532 = vpop.xlane.xlu0 %3531
  %v3533 = vadd.f32 %v2104, %v3514
  %v3534 = vadd.f32 %v2177, %v3518
  %v3535 = vtanh.pop %v3533
  %v3536 = vtanh.pop %v3534
  %v3537 = vmul.f32 %v3535, %v2423
  %v3538 = vmul.f32 %v3536, %v2423
  %v3539 = vsel %vm236, %v3537, 0.0
  %3540 = vadd.xlane.f32.xlu0 %v3539
  %v3541 = vpop.xlane.xlu0 %3540
  %v3542 = vsel %vm236, %v3538, 0.0
  %3543 = vadd.xlane.f32.xlu0 %v3542
  %v3544 = vpop.xlane.xlu0 %3543
  %v3547 = vlaneseq
  %v3548 = vshrl.u32 %v3547, 7
  %v3549 = vsub.s32 %v91, %v3548
  %v3550 = vrot.slane %v3529, %v3549
  %v3551 = vlaneseq
  %v3552 = vshrl.u32 %v3551, 7
  %v3553 = vsub.s32 %v91, %v3552
  %v3554 = vrot.slane %v3532, %v3553
  %v3555 = vsel %vm1674, %v3554, %v3550
  %v3559 = vlaneseq
  %v3560 = vshrl.u32 %v3559, 7
  %v3561 = vsub.s32 %v2460, %v3560
  %v3562 = vrot.slane %v3541, %v3561
  %v3563 = vlaneseq
  %v3564 = vshrl.u32 %v3563, 7
  %v3565 = vsub.s32 %v2460, %v3564
  %v3566 = vrot.slane %v3544, %v3565
  %v3567 = vsel %vm1674, %v3566, %v3562
  %v3569 = vsel %vm2471, %v3555, %v3567
  %v3570 = vadd.f32 %v3569, %v2473
  %v3571 = vsel %vm2475, %v3570, -inf
  %3572 = vmax.xlane.f32.xlu0 %v3571
  %v3573 = vpop.xlane.xlu0 %3572
  %v3574 = vsub.f32 %v3570, %v3573
  %v3575 = vmul.f32 %v3574, 1.442695
  %v3576 = vpow.pop %v3575
  %v3577 = vsel %vm2475, %v3576, 0.0
  %3578 = vadd.xlane.f32.xlu0 %v3577
  %v3579 = vpop.xlane.xlu0 %3578
  %v3580 = vlog2.pop %v3579
  %v3581 = vmul.f32 %v3580, 0.6931472
  %v3582 = vadd.f32 %v3573, %v3581
  %v3583 = vsub.f32 %v3570, %v3582
  %3584 = vmatprep.subr.mxu0 0.0
  %3585 = vmatpush1.msra.mxu0 %v2193
  %3586 = vmatprep.subr.mxu0 0.0
  %3587 = vmatpush1.msra.mxu0 %v2194
  %3588 = vmatprep.subr.mxu0 0.0
  %3589 = vmatpush1.msra.mxu0 %v2195
  %3590 = vmatprep.subr.mxu0 0.0
  %3591 = vmatpush1.msra.mxu0 %v2196
  %3592 = vmatprep.subr.mxu0 0.0
  %3593 = vmatpush1.msra.mxu0 0.0
  %3594 = vmatprep.subr.mxu0 0.0
  %3595 = vmatpush1.msra.mxu0 0.0
  %3596 = vmatprep.subr.mxu0 0.0
  %3597 = vmatpush1.msra.mxu0 0.0
  %3598 = vmatprep.subr.mxu0 0.0
  %3599 = vmatpush1.msra.mxu0 0.0
  %3600 = vmatprep.subr.mxu0 0.0
  %3601 = vmatpush1.msra.mxu0 0.0
  %3602 = vmatprep.subr.mxu0 0.0
  %3603 = vmatpush1.msra.mxu0 0.0
  %3604 = vmatprep.subr.mxu0 0.0
  %3605 = vmatpush1.msra.mxu0 0.0
  %3606 = vmatprep.subr.mxu0 0.0
  %3607 = vmatpush1.msra.mxu0 0.0
  %3608 = vmatprep.subr.mxu0 0.0
  %3609 = vmatpush1.msra.mxu0 0.0
  %3610 = vmatprep.subr.mxu0 0.0
  %3611 = vmatpush1.msra.mxu0 0.0
  %3612 = vmatprep.subr.mxu0 0.0
  %3613 = vmatpush1.msra.mxu0 0.0
  %3614 = vmatprep.subr.mxu0 0.0
  %3615 = vmatpush1.msra.mxu0 0.0
  %3616 = vmatprep.subr.mxu0 0.0
  %3617 = vmatpush1.msra.mxu0 0.0
  %3618 = vmatprep.subr.mxu0 0.0
  %3619 = vmatpush1.msra.mxu0 0.0
  %3620 = vmatprep.subr.mxu0 0.0
  %3621 = vmatpush1.msra.mxu0 0.0
  %3622 = vmatprep.subr.mxu0 0.0
  %3623 = vmatpush1.msra.mxu0 0.0
  %3624 = vmatprep.subr.mxu0 0.0
  %3625 = vmatpush1.msra.mxu0 0.0
  %3626 = vmatprep.subr.mxu0 0.0
  %3627 = vmatpush1.msra.mxu0 0.0
  %3628 = vmatprep.subr.mxu0 0.0
  %3629 = vmatpush1.msra.mxu0 0.0
  %3630 = vmatprep.subr.mxu0 0.0
  %3631 = vmatpush1.msra.mxu0 0.0
  %3632 = vmatprep.subr.mxu0 0.0
  %3633 = vmatpush1.msra.mxu0 0.0
  %3634 = vmatprep.subr.mxu0 0.0
  %3635 = vmatpush1.msra.mxu0 0.0
  %3636 = vmatprep.subr.mxu0 0.0
  %3637 = vmatpush1.msra.mxu0 0.0
  %3638 = vmatprep.subr.mxu0 0.0
  %3639 = vmatpush1.msra.mxu0 0.0
  %3640 = vmatprep.subr.mxu0 0.0
  %3641 = vmatpush1.msra.mxu0 0.0
  %3642 = vmatprep.subr.mxu0 0.0
  %3643 = vmatpush1.msra.mxu0 0.0
  %3644 = vmatprep.subr.mxu0 0.0
  %3645 = vmatpush1.msra.mxu0 0.0
  %3646 = vmatprep.subr.mxu0 0.0
  %3647 = vmatpush1.msra.mxu0 0.0
  %3648 = vmatprep.mubr.f32.mxu0 0.0
  %3649 = vmatmul.mubr.f32.gmra.mrb[0].mxu0 %v2980
  %v3650 = vpop.f32.mrb[0].mxu0
  %v3651 = vadd.f32 %v2836, %v3650
  %v3652 = vpop.f32.mrb[0].mxu0
  %3653 = vdwg.mxu0
  %v3654 = vsel %vm2908, %v3651, -inf
  %3655 = vmax.xlane.f32.xlu0 %v3654
  %v3656 = vpop.xlane.xlu0 %3655
  %v3657 = vsub.f32 %v3651, %v3656
  %v3658 = vmul.f32 %v3657, 1.442695
  %v3659 = vpow.pop %v3658
  %v3660 = vsel %vm2908, %v3659, 0.0
  %3661 = vadd.xlane.f32.xlu0 %v3660
  %v3662 = vpop.xlane.xlu0 %3661
  %v3663 = vrcp.pop %v3662
  %v3664 = vmul.f32 %v3659, %v3663
  %v3665 = vrot.slane %v1876, 6
  %3666 = vrot.lane.b32.xlu0 %v3665, 64
  %v3667 = vpop.permute.xlu0 %3666
  %v3670 = vrot.slane %v3664, 6
  %3671 = vrot.lane.b32.xlu0 %v3670, 64
  %v3672 = vpop.permute.xlu0 %3671
  %v3675 = vrot.slane %v3240, 6
  %3676 = vrot.lane.b32.xlu0 %v3675, 70
  %v3677 = vpop.permute.xlu0 %3676
  %v3680 = vrot.slane %v3583, 6
  %3681 = vrot.lane.b32.xlu0 %v3680, 82
  %v3682 = vpop.permute.xlu0 %3681
  %v3684 = vsel %vm236, %v1609, %v3667
  %v3685 = vsel %vm2936, %v3684, %v3672
  %v3686 = vsel %vm2938, %v3685, %v3677
  %v3687 = vsel %vm2940, %v3686, %v3682
  %v3690 = vunpack.c.l.s4 1966171168
  %v3691 = vunpack.c.0.s8 %v3690
  %v3692 = vlaneseq
  %v3693 = vshrl.u32 %v3692, 7
  %v3694 = vsub.s32 %v3691, %v3693
  %v3695 = vrot.slane %v3687, %v3694
  %v3696 = vcombine.high %v3695, %v3695
  %v3698 = vunpack.c.l.s4 1966171168
  %v3699 = vunpack.c.0.s8 %v3698
  %v3700 = vlaneseq
  %v3701 = vshrl.u32 %v3700, 7
  %v3702 = vsub.s32 %v3699, %v3701
  %v3703 = vrot.slane %v3695, %v3702
  %v3705 = vunpack.c.l.s4 1966171168
  %v3706 = vunpack.c.0.s8 %v3705
  %v3707 = vlaneseq
  %v3708 = vshrl.u32 %v3707, 7
  %v3709 = vsub.s32 %v3706, %v3708
  %v3710 = vrot.slane %v3696, %v3709
  %v3711 = vcombine.high %v3703, %v3703
  %v3712 = vcombine.high %v3710, %v3710
  %3715 = vst.msk [vmem:[%s26 + $0x1] sm:$0x1] %vm2967, %v3711
  %3716 = vst.msk [vmem:[%s26 + $0x3] sm:$0x1] %vm2967, %v3712
  // Predicated region
  $region102: #{bert_model_forward.1} parent=0 // pred_check
    _
  $region103: #{bert_model_forward.1} parent=0 // pred_check_branch
    %3718 = sbr.rel (0) target = $region105
  $region104: #{bert_model_forward.1} parent=0 // pred_region
    _
  $region105: #{bert_model_forward.1} parent=0 // pred_fallthru
    _
  // Predicated region
  $region106: #{bert_model_forward.1} parent=0 // pred_check
    _
  $region107: #{bert_model_forward.1} parent=0 // pred_check_branch
    %3720 = sbr.rel (0) target = $region109
  $region108: #{bert_model_forward.1} parent=0 // pred_region
    _
  $region109: #{bert_model_forward.1} parent=0 // pred_fallthru
    _
  // Predicated region
  $region110: #{bert_model_forward.1} parent=0 // pred_check
    _
  $region111: #{bert_model_forward.1} parent=0 // pred_check_branch
    %3722 = sbr.rel (0) target = $region113
  $region112: #{bert_model_forward.1} parent=0 // pred_region
    _
  $region113: #{bert_model_forward.1} parent=0 // pred_fallthru
    _
  // Predicated region
  $region114: #{bert_model_forward.1} parent=0 // pred_check
    _
  $region115: #{bert_model_forward.1} parent=0 // pred_check_branch
    %3724 = sbr.rel (0) target = $region117
  $region116: #{bert_model_forward.1} parent=0 // pred_region
    _
  $region117: #{bert_model_forward.1} parent=0 // pred_fallthru
    _

</llo_original>
